<compile_context>
chip_gen: v6e
topology: v6e:2x2x1
jax: 0.10.0
libtpu: 0.0.40
codegen_flags: <defaults>
</compile_context>

<pallas_src>
import functools

import jax
import jax.numpy as jnp
from jax.experimental import pallas as pl
from jax.experimental.pallas import tpu as pltpu


# ----------------------- generation-aware VMEM sizing -------------------------
@functools.lru_cache(maxsize=None)
def _vmem_limit_bytes():
    # v5e/v6e: 128 MiB physical -> 96 MiB usable; v7x: 64 MiB physical -> 48 MiB.
    try:
        cap = int(pltpu.get_tpu_info().vmem_capacity_bytes)
    except Exception:  # unknown / older API -> assume the smallest generation (v7x)
        cap = 64 * 1024 * 1024
    return min((cap * 3) // 4, 96 * 1024 * 1024)


def _tile_vmem_bytes(th, *, C, G, OC, K, W, sb):
    # Upper bound on one grid step's VMEM footprint across BOTH kernels:
    # double-buffered BlockSpec operands + in-kernel temporaries.
    p = K // 2
    Wp = W + 2 * p
    M = th * Wp
    L = (th + 2 * p) * Wp + 2 * p
    CG = C // G
    w_bytes = K * K * OC * C * sb
    # conv-stats kernel: 2x buffered x halo slab + logits / masked copy + weights
    conv = 2 * C * L * sb + 3 * OC * M * 4 + w_bytes
    # apply kernel: 2x buffered x & gate slabs + 2x output + logits/softmax temps + acc
    appl = (2 * (C + G) * L * sb + 2 * C * M * 4
            + 5 * OC * M * 4 + CG * M * 4 + w_bytes)
    return max(conv, appl)


def _pick_row_tile(H, *, C, G, OC, K, W, sb, budget, row_tile=None):
    if row_tile is not None:
        if H % row_tile != 0 or (row_tile % 8 != 0 and row_tile != H):
            raise ValueError("row_tile must divide H and be a multiple of 8 (or == H)")
        return row_tile
    cands = [d for d in range(8, H + 1, 8) if H % d == 0] or [H]
    ok = [d for d in cands
          if _tile_vmem_bytes(d, C=C, G=G, OC=OC, K=K, W=W, sb=sb) <= budget // 2]
    return max(ok) if ok else min(cands)


# ---------------- SpatialGroupEnhance gate (cheap reductions, XLA) -------------
def _sge_gate(x, weight, bias, group):
    # AdaptiveAvgPool + channel sum + HW normalization + sigmoid: tiny whole-image
    # reductions, done in XLA so no full-image block ever has to live in VMEM.
    N, C, H, W = x.shape
    G = group
    xg = x.reshape(N, G, C // G, H * W).astype(jnp.float32)
    pooled = jnp.mean(xg, axis=3, keepdims=True)               # AdaptiveAvgPool2d(1)
    xn = jnp.sum(xg * pooled, axis=2)                          # (N, G, HW)
    t = xn - jnp.mean(xn, axis=2, keepdims=True)
    std = jnp.std(t, axis=2, keepdims=True, ddof=1) + 1e-5     # torch.std (unbiased)
    t = t / std * weight[None, :, None] + bias[None, :, None]
    return jax.nn.sigmoid(t).reshape(N, G, H, W)


# ------------------------- halo row-tile preparation ---------------------------
def _reflect_pad(x, p):
    if p == 0:
        return x
    return jnp.pad(x, ((0, 0), (0, 0), (p, p), (p, p)), mode="reflect")


def _halo_row_tiles_flat(xp, th, p, dtype):
    # (N, Cc, Hp, Wp) -> (N, T, Cc, (th+2p)*Wp + 2p): flat halo row tiles whose k*k
    # taps become contiguous lane-window shifts sh = ki*Wp + kj.
    N, Cc, Hp, Wp = xp.shape
    H = Hp - 2 * p
    T = H // th
    thh = th + 2 * p
    tiles = [xp[:, :, i * th:i * th + thh, :] for i in range(T)]
    xt = jnp.stack(tiles, axis=1).reshape(N, T, Cc, thh * Wp)
    # +2p lane tail so every tap's contiguous window [sh, sh + th*Wp) stays in-bounds
    xt = jnp.pad(xt, ((0, 0), (0, 0), (0, 0), (0, 2 * p)))
    return xt.astype(dtype)


# ----------------- kernel 1: conv -> per-tile partial BN stats -----------------
def _conv_stats_kernel(K, W, Wp, M, w_ref, xp_ref, stat_ref):
    # Logits stay in VMEM only; just the tiny (2, OC) partial-stat row goes to HBM.
    KK = K * K
    OC = w_ref.shape[1]
    shifts = [(t // K) * Wp + (t % K) for t in range(KK)]
    acc = jnp.dot(w_ref[0], xp_ref[0, 0, :, shifts[0]:shifts[0] + M],
                  preferred_element_type=jnp.float32)
    for t in range(1, KK):
        sh = shifts[t]
        acc = acc + jnp.dot(w_ref[t], xp_ref[0, 0, :, sh:sh + M],
                            preferred_element_type=jnp.float32)
    # columns with (lane % Wp) >= W are row wrap-around junk -> excluded from stats
    lane = jax.lax.broadcasted_iota(jnp.int32, (OC, M), 1)
    accm = jnp.where((lane % Wp) < W, acc, 0.0)
    stat_ref[0, 0] = jnp.stack([jnp.sum(accm, axis=1),
                                jnp.sum(accm * accm, axis=1)], axis=0)


def conv_stats(xp_t, w_taps, *, K, W, Wp, th, vmem_limit):
    N, T, C, L = xp_t.shape
    KK, OC, _ = w_taps.shape
    M = th * Wp
    kern = functools.partial(_conv_stats_kernel, K, W, Wp, M)
    return pl.pallas_call(
        kern,
        out_shape=jax.ShapeDtypeStruct((N, T, 2, OC), jnp.float32),
        grid=(N, T),
        in_specs=[
            pl.BlockSpec((KK, OC, C), lambda n, i: (0, 0, 0)),
            pl.BlockSpec((1, 1, C, L), lambda n, i: (n, i, 0, 0)),
        ],
        out_specs=pl.BlockSpec((1, 1, 2, OC), lambda n, i: (n, i, 0, 0)),
        compiler_params=pltpu.CompilerParams(
            dimension_semantics=("parallel", "parallel"),
            vmem_limit_bytes=vmem_limit),
    )(w_taps, xp_t)


# --- kernel 2: folded-BN conv recompute + softmax + gated adaptive filtering ---
def _apply_kernel(K, G, Wp, M, shift_ref, w_ref, xp_ref, gp_ref, o_ref):
    KK = K * K
    OC = w_ref.shape[1]
    C = xp_ref.shape[2]
    CG = C // G
    shifts = [(t // K) * Wp + (t % K) for t in range(KK)]

    # conv logits with BN folded into the weights (no HBM round-trip of logits)
    logit = jnp.dot(w_ref[0], xp_ref[0, 0, :, shifts[0]:shifts[0] + M],
                    preferred_element_type=jnp.float32)
    for t in range(1, KK):
        sh = shifts[t]
        logit = logit + jnp.dot(w_ref[t], xp_ref[0, 0, :, sh:sh + M],
                                preferred_element_type=jnp.float32)
    logit = logit + shift_ref[...]                       # folded BN bias, (OC,1) bcast

    # joint softmax over the G*K*K channels, per spatial position
    m = jnp.max(logit, axis=0, keepdims=True)
    e = jnp.exp(logit - m)
    # EUP approx reciprocal: ~2^-12 relative error on the softmax denominator.
    wgt = e * pl.reciprocal(jnp.sum(e, axis=0, keepdims=True), approx=True)

    # SGE-gated, tap-weighted filtering; each group written straight to its rows
    for g in range(G):
        acc = jnp.zeros((CG, M), jnp.float32)
        for t in range(KK):
            sh = shifts[t]
            gw = (gp_ref[0, 0, g:g + 1, sh:sh + M].astype(jnp.float32)
                  * wgt[g * KK + t:g * KK + t + 1, :])   # SGE gate x softmax weight
            acc = acc + xp_ref[0, 0, g * CG:(g + 1) * CG, sh:sh + M] * gw
        o_ref[0, 0, g * CG:(g + 1) * CG, :] = acc.astype(o_ref.dtype)


def apply_filter(shift, w_bn, xp_t, gp_t, *, K, G, Wp, th, out_dtype, vmem_limit):
    N, T, C, L = xp_t.shape
    KK, OC, _ = w_bn.shape
    M = th * Wp
    kern = functools.partial(_apply_kernel, K, G, Wp, M)
    return pl.pallas_call(
        kern,
        out_shape=jax.ShapeDtypeStruct((N, T, C, M), out_dtype),
        grid=(N, T),
        in_specs=[
            pl.BlockSpec((OC, 1), lambda n, i: (0, 0)),          # folded BN bias
            pl.BlockSpec((KK, OC, C), lambda n, i: (0, 0, 0)),   # BN-folded weights
            pl.BlockSpec((1, 1, C, L), lambda n, i: (n, i, 0, 0)),
            pl.BlockSpec((1, 1, G, L), lambda n, i: (n, i, 0, 0)),
        ],
        out_specs=pl.BlockSpec((1, 1, C, M), lambda n, i: (n, i, 0, 0)),
        compiler_params=pltpu.CompilerParams(
            dimension_semantics=("parallel", "parallel"),
            vmem_limit_bytes=vmem_limit),
    )(shift, w_bn, xp_t, gp_t)


# --------------------------------- forward ------------------------------------
@functools.partial(jax.jit,
                   static_argnames=("group", "kernel_size", "row_tile", "storage_dtype"))
def fem_forward(x, params, *, group, kernel_size, row_tile=None,
                storage_dtype=jnp.bfloat16):
    N, C, H, W = x.shape
    K, G = kernel_size, group
    KK = K * K
    OC = G * KK
    p = K // 2
    Wp = W + 2 * p
    sb = jnp.dtype(storage_dtype).itemsize

    vmem_limit = _vmem_limit_bytes()
    th = _pick_row_tile(H, C=C, G=G, OC=OC, K=K, W=W, sb=sb,
                        budget=vmem_limit, row_tile=row_tile)
    T = H // th

    # ---- 1) SGE gate: whole-image reductions + sigmoid (XLA glue) ----
    gate = _sge_gate(x, params["sge_weight"].astype(jnp.float32),
                     params["sge_bias"].astype(jnp.float32), G)

    # ---- 2) reflect pad + flat halo row tiles (bf16 storage by default) ----
    xp_t = _halo_row_tiles_flat(_reflect_pad(x, p), th, p, storage_dtype)     # (N,T,C,L)
    gp_t = _halo_row_tiles_flat(_reflect_pad(gate, p), th, p, storage_dtype)  # (N,T,G,L)

    # ---- 3) conv -> per-tile partial BN statistics only (no logits in HBM) ----
    # conv_w (OC, C, K, K): tap t = ki*K + kj -> w_taps[t] = (OC, C)
    w_taps = jnp.transpose(params["conv_w"].reshape(OC, C, KK), (2, 0, 1))
    pstats = conv_stats(xp_t, w_taps.astype(storage_dtype),
                        K=K, W=W, Wp=Wp, th=th, vmem_limit=vmem_limit)

    # ---- 4) fold BatchNorm (training-mode stats, biased var, clamped) into weights ----
    cnt = N * H * W
    s = jnp.sum(pstats[:, :, 0, :], axis=(0, 1))
    ssq = jnp.sum(pstats[:, :, 1, :], axis=(0, 1))
    mean = s / cnt
    var = jnp.maximum(ssq / cnt - mean * mean, 0.0)
    scale = params["bn_gamma"] / jnp.sqrt(var + 1e-5)
    shift = (params["bn_beta"] - mean * scale).reshape(OC, 1).astype(jnp.float32)
    w_bn = (w_taps * scale[None, :, None]).astype(storage_dtype)

    # ---- 5) folded-BN conv recompute + softmax + gated tap-weighted filtering ----
    out_flat = apply_filter(shift, w_bn, xp_t, gp_t, K=K, G=G, Wp=Wp, th=th,
                            out_dtype=x.dtype, vmem_limit=vmem_limit)

    # ---- 6) strip the (Wp - W) junk columns, back to NCHW ----
    out = out_flat.reshape(N, T, C, th, Wp)[..., :W]
    return jnp.transpose(out, (0, 2, 1, 3, 4)).reshape(N, C, H, W)


# ------------------------- pure-JAX reference (self-check) ---------------------
def fem_reference(x, params, *, group, kernel_size):
    N, C, H, W = x.shape
    K, G = kernel_size, group
    KK, CG, HW = K * K, C // G, H * W
    OC = G * KK
    p = K // 2
    # SpatialGroupEnhance
    xg = x.reshape(N * G, CG, H, W)
    mean = jnp.mean(xg, axis=(2, 3), keepdims=True)
    xn = jnp.sum(xg * mean, axis=1, keepdims=True)
    t = xn.reshape(N * G, HW)
    t = t - jnp.mean(t, axis=1, keepdims=True)
    std = jnp.std(t, axis=1, keepdims=True, ddof=1) + 1e-5
    t = (t / std).reshape(N, G, H, W)
    t = (t * params["sge_weight"][None, :, None, None]
         + params["sge_bias"][None, :, None, None])
    x_sge = (xg * jax.nn.sigmoid(t.reshape(N * G, 1, H, W))).reshape(N, C, H, W)
    # unfold the SGE output
    xs_p = jnp.pad(x_sge, ((0, 0), (0, 0), (p, p), (p, p)), mode="reflect")
    cols = [xs_p[:, :, ki:ki + H, kj:kj + W] for ki in range(K) for kj in range(K)]
    x_unf = jnp.stack(cols, axis=2).reshape(N, G, CG, KK, HW)
    # sigma branch: conv + BN (training stats) + softmax
    xp = jnp.pad(x, ((0, 0), (0, 0), (p, p), (p, p)), mode="reflect")
    cols = [xp[:, :, ki:ki + H, kj:kj + W] for ki in range(K) for kj in range(K)]
    patches = jnp.stack(cols, axis=2).reshape(N, C * KK, HW)
    wf = params["conv_w"].reshape(OC, C * KK)
    logits = jnp.einsum("ok,nkq->noq", wf, patches)
    mean_b = jnp.mean(logits, axis=(0, 2), keepdims=True)
    var_b = jnp.var(logits, axis=(0, 2), keepdims=True)
    lb = (logits - mean_b) / jnp.sqrt(var_b + 1e-5)
    lb = lb * params["bn_gamma"][None, :, None] + params["bn_beta"][None, :, None]
    sig = jax.nn.softmax(lb, axis=1).reshape(N, G, KK, HW)
    out = jnp.sum(x_unf * sig[:, :, None, :, :], axis=3)
    return out.reshape(N, C, H, W)


# ----------------------------------- main --------------------------------------
if __name__ == "__main__":
    N, C, H, W = 2, 4, 16, 16
    G, K = 2, 3
    OC = G * K * K

    key = jax.random.PRNGKey(0)
    k_x, k_w, k_a, k_b, k_c, k_d = jax.random.split(key, 6)

    x = jax.random.normal(k_x, (N, C, H, W), dtype=jnp.float32)
    # kaiming_normal_(mode='fan_out', nonlinearity='relu'): std = sqrt(2 / (OC*K*K))
    fan_out = OC * K * K
    conv_w = jax.random.normal(k_w, (OC, C, K, K), jnp.float32) * jnp.sqrt(2.0 / fan_out)

    params = dict(
        conv_w=conv_w,
        bn_gamma=1.0 + 0.2 * jax.random.normal(k_a, (OC,), jnp.float32),
        bn_beta=0.2 * jax.random.normal(k_b, (OC,), jnp.float32),
        sge_weight=0.2 * jax.random.normal(k_c, (G,), jnp.float32),
        sge_bias=1.0 + 0.2 * jax.random.normal(k_d, (G,), jnp.float32),
    )

    ref = fem_reference(x, params, group=G, kernel_size=K)

    # row_tile=8 -> 2 row tiles per image (exercises the tiled parallel grid);
    # row_tile=None -> auto-picked tile from the VMEM footprint model.
    for rt in (8, None):
        out = jax.block_until_ready(
            fem_forward(x, params, group=G, kernel_size=K, row_tile=rt))
        assert out.shape == (N, C, H, W), out.shape
        assert bool(jnp.all(jnp.isfinite(out)))
        err = float(jnp.max(jnp.abs(out - ref)))
        # bf16 halo/weight storage keeps the error well under this tolerance
        assert err < 5e-2, f"row_tile={rt}: max |out - ref| too large: {err}"

    print("KERNEL_OK")
</pallas_src>

<mosaic_0001>
module attributes {stable_mosaic.version = 11 : i64} {
  func.func @_conv_stats_kernel(%arg0: i32, %arg1: i32, %arg2: memref<9x18x4xbf16, #tpu.memory_space<vmem>>, %arg3: memref<1x1x4x182xbf16, #tpu.memory_space<vmem>>, %arg4: memref<1x1x2x18xf32, #tpu.memory_space<vmem>>) attributes {dimension_semantics = [#tpu.dimension_semantics<parallel>, #tpu.dimension_semantics<parallel>], iteration_bounds = array<i64: 2, 2>, scalar_prefetch = 0 : i64, scratch_operands = 0 : i64, tpu.core_type = #tpu.core_type<tc>, window_params = [{pipeline_mode = #tpu.pipeline_mode<synchronous>, transform_indices = @transform_0, window_bounds = array<i64: 9, 18, 4>}, {transform_indices = @transform_1, window_bounds = array<i64: 1, 1, 4, 182>}, {transform_indices = @transform_2, window_bounds = array<i64: 1, 1, 2, 18>}]} {
    %c0 = arith.constant 0 : index
    %c0_0 = arith.constant 0 : index
    %c0_1 = arith.constant 0 : index
    %0 = vector.load %arg2[%c0, %c0_0, %c0_1] : memref<9x18x4xbf16, #tpu.memory_space<vmem>>, vector<1x18x4xbf16>
    %1 = vector.shape_cast %0 : vector<1x18x4xbf16> to vector<18x4xbf16>
    %c0_2 = arith.constant 0 : index
    %c0_3 = arith.constant 0 : index
    %c0_4 = arith.constant 0 : index
    %c0_5 = arith.constant 0 : index
    %2 = vector.load %arg3[%c0_2, %c0_3, %c0_4, %c0_5] : memref<1x1x4x182xbf16, #tpu.memory_space<vmem>>, vector<1x1x4x144xbf16>
    %3 = vector.shape_cast %2 : vector<1x1x4x144xbf16> to vector<4x144xbf16>
    %cst = arith.constant dense<0.000000e+00> : vector<18x144xf32>
    %4 = tpu.matmul %1, %3, %cst {dimension_numbers = #tpu.dot_dimension_numbers<[1], [0], [0], [1], [0, 0, 1, 1], [], []>} : vector<18x4xbf16>, vector<4x144xbf16>, vector<18x144xf32> -> vector<18x144xf32>
    %c1 = arith.constant 1 : index
    %c0_6 = arith.constant 0 : index
    %c0_7 = arith.constant 0 : index
    %5 = vector.load %arg2[%c1, %c0_6, %c0_7] : memref<9x18x4xbf16, #tpu.memory_space<vmem>>, vector<1x18x4xbf16>
    %6 = vector.shape_cast %5 : vector<1x18x4xbf16> to vector<18x4xbf16>
    %c0_8 = arith.constant 0 : index
    %c0_9 = arith.constant 0 : index
    %c0_10 = arith.constant 0 : index
    %c1_11 = arith.constant 1 : index
    %7 = vector.load %arg3[%c0_8, %c0_9, %c0_10, %c1_11] : memref<1x1x4x182xbf16, #tpu.memory_space<vmem>>, vector<1x1x4x144xbf16>
    %8 = vector.shape_cast %7 : vector<1x1x4x144xbf16> to vector<4x144xbf16>
    %cst_12 = arith.constant dense<0.000000e+00> : vector<18x144xf32>
    %9 = tpu.matmul %6, %8, %cst_12 {dimension_numbers = #tpu.dot_dimension_numbers<[1], [0], [0], [1], [0, 0, 1, 1], [], []>} : vector<18x4xbf16>, vector<4x144xbf16>, vector<18x144xf32> -> vector<18x144xf32>
    %10 = arith.addf %4, %9 : vector<18x144xf32>
    %c2 = arith.constant 2 : index
    %c0_13 = arith.constant 0 : index
    %c0_14 = arith.constant 0 : index
    %11 = vector.load %arg2[%c2, %c0_13, %c0_14] : memref<9x18x4xbf16, #tpu.memory_space<vmem>>, vector<1x18x4xbf16>
    %12 = vector.shape_cast %11 : vector<1x18x4xbf16> to vector<18x4xbf16>
    %c0_15 = arith.constant 0 : index
    %c0_16 = arith.constant 0 : index
    %c0_17 = arith.constant 0 : index
    %c2_18 = arith.constant 2 : index
    %13 = vector.load %arg3[%c0_15, %c0_16, %c0_17, %c2_18] : memref<1x1x4x182xbf16, #tpu.memory_space<vmem>>, vector<1x1x4x144xbf16>
    %14 = vector.shape_cast %13 : vector<1x1x4x144xbf16> to vector<4x144xbf16>
    %cst_19 = arith.constant dense<0.000000e+00> : vector<18x144xf32>
    %15 = tpu.matmul %12, %14, %cst_19 {dimension_numbers = #tpu.dot_dimension_numbers<[1], [0], [0], [1], [0, 0, 1, 1], [], []>} : vector<18x4xbf16>, vector<4x144xbf16>, vector<18x144xf32> -> vector<18x144xf32>
    %16 = arith.addf %10, %15 : vector<18x144xf32>
    %c3 = arith.constant 3 : index
    %c0_20 = arith.constant 0 : index
    %c0_21 = arith.constant 0 : index
    %17 = vector.load %arg2[%c3, %c0_20, %c0_21] : memref<9x18x4xbf16, #tpu.memory_space<vmem>>, vector<1x18x4xbf16>
    %18 = vector.shape_cast %17 : vector<1x18x4xbf16> to vector<18x4xbf16>
    %c0_22 = arith.constant 0 : index
    %c0_23 = arith.constant 0 : index
    %c0_24 = arith.constant 0 : index
    %c18 = arith.constant 18 : index
    %19 = vector.load %arg3[%c0_22, %c0_23, %c0_24, %c18] : memref<1x1x4x182xbf16, #tpu.memory_space<vmem>>, vector<1x1x4x144xbf16>
    %20 = vector.shape_cast %19 : vector<1x1x4x144xbf16> to vector<4x144xbf16>
    %cst_25 = arith.constant dense<0.000000e+00> : vector<18x144xf32>
    %21 = tpu.matmul %18, %20, %cst_25 {dimension_numbers = #tpu.dot_dimension_numbers<[1], [0], [0], [1], [0, 0, 1, 1], [], []>} : vector<18x4xbf16>, vector<4x144xbf16>, vector<18x144xf32> -> vector<18x144xf32>
    %22 = arith.addf %16, %21 : vector<18x144xf32>
    %c4 = arith.constant 4 : index
    %c0_26 = arith.constant 0 : index
    %c0_27 = arith.constant 0 : index
    %23 = vector.load %arg2[%c4, %c0_26, %c0_27] : memref<9x18x4xbf16, #tpu.memory_space<vmem>>, vector<1x18x4xbf16>
    %24 = vector.shape_cast %23 : vector<1x18x4xbf16> to vector<18x4xbf16>
    %c0_28 = arith.constant 0 : index
    %c0_29 = arith.constant 0 : index
    %c0_30 = arith.constant 0 : index
    %c19 = arith.constant 19 : index
    %25 = vector.load %arg3[%c0_28, %c0_29, %c0_30, %c19] : memref<1x1x4x182xbf16, #tpu.memory_space<vmem>>, vector<1x1x4x144xbf16>
    %26 = vector.shape_cast %25 : vector<1x1x4x144xbf16> to vector<4x144xbf16>
    %cst_31 = arith.constant dense<0.000000e+00> : vector<18x144xf32>
    %27 = tpu.matmul %24, %26, %cst_31 {dimension_numbers = #tpu.dot_dimension_numbers<[1], [0], [0], [1], [0, 0, 1, 1], [], []>} : vector<18x4xbf16>, vector<4x144xbf16>, vector<18x144xf32> -> vector<18x144xf32>
    %28 = arith.addf %22, %27 : vector<18x144xf32>
    %c5 = arith.constant 5 : index
    %c0_32 = arith.constant 0 : index
    %c0_33 = arith.constant 0 : index
    %29 = vector.load %arg2[%c5, %c0_32, %c0_33] : memref<9x18x4xbf16, #tpu.memory_space<vmem>>, vector<1x18x4xbf16>
    %30 = vector.shape_cast %29 : vector<1x18x4xbf16> to vector<18x4xbf16>
    %c0_34 = arith.constant 0 : index
    %c0_35 = arith.constant 0 : index
    %c0_36 = arith.constant 0 : index
    %c20 = arith.constant 20 : index
    %31 = vector.load %arg3[%c0_34, %c0_35, %c0_36, %c20] : memref<1x1x4x182xbf16, #tpu.memory_space<vmem>>, vector<1x1x4x144xbf16>
    %32 = vector.shape_cast %31 : vector<1x1x4x144xbf16> to vector<4x144xbf16>
    %cst_37 = arith.constant dense<0.000000e+00> : vector<18x144xf32>
    %33 = tpu.matmul %30, %32, %cst_37 {dimension_numbers = #tpu.dot_dimension_numbers<[1], [0], [0], [1], [0, 0, 1, 1], [], []>} : vector<18x4xbf16>, vector<4x144xbf16>, vector<18x144xf32> -> vector<18x144xf32>
    %34 = arith.addf %28, %33 : vector<18x144xf32>
    %c6 = arith.constant 6 : index
    %c0_38 = arith.constant 0 : index
    %c0_39 = arith.constant 0 : index
    %35 = vector.load %arg2[%c6, %c0_38, %c0_39] : memref<9x18x4xbf16, #tpu.memory_space<vmem>>, vector<1x18x4xbf16>
    %36 = vector.shape_cast %35 : vector<1x18x4xbf16> to vector<18x4xbf16>
    %c0_40 = arith.constant 0 : index
    %c0_41 = arith.constant 0 : index
    %c0_42 = arith.constant 0 : index
    %c36 = arith.constant 36 : index
    %37 = vector.load %arg3[%c0_40, %c0_41, %c0_42, %c36] : memref<1x1x4x182xbf16, #tpu.memory_space<vmem>>, vector<1x1x4x144xbf16>
    %38 = vector.shape_cast %37 : vector<1x1x4x144xbf16> to vector<4x144xbf16>
    %cst_43 = arith.constant dense<0.000000e+00> : vector<18x144xf32>
    %39 = tpu.matmul %36, %38, %cst_43 {dimension_numbers = #tpu.dot_dimension_numbers<[1], [0], [0], [1], [0, 0, 1, 1], [], []>} : vector<18x4xbf16>, vector<4x144xbf16>, vector<18x144xf32> -> vector<18x144xf32>
    %40 = arith.addf %34, %39 : vector<18x144xf32>
    %c7 = arith.constant 7 : index
    %c0_44 = arith.constant 0 : index
    %c0_45 = arith.constant 0 : index
    %41 = vector.load %arg2[%c7, %c0_44, %c0_45] : memref<9x18x4xbf16, #tpu.memory_space<vmem>>, vector<1x18x4xbf16>
    %42 = vector.shape_cast %41 : vector<1x18x4xbf16> to vector<18x4xbf16>
    %c0_46 = arith.constant 0 : index
    %c0_47 = arith.constant 0 : index
    %c0_48 = arith.constant 0 : index
    %c37 = arith.constant 37 : index
    %43 = vector.load %arg3[%c0_46, %c0_47, %c0_48, %c37] : memref<1x1x4x182xbf16, #tpu.memory_space<vmem>>, vector<1x1x4x144xbf16>
    %44 = vector.shape_cast %43 : vector<1x1x4x144xbf16> to vector<4x144xbf16>
    %cst_49 = arith.constant dense<0.000000e+00> : vector<18x144xf32>
    %45 = tpu.matmul %42, %44, %cst_49 {dimension_numbers = #tpu.dot_dimension_numbers<[1], [0], [0], [1], [0, 0, 1, 1], [], []>} : vector<18x4xbf16>, vector<4x144xbf16>, vector<18x144xf32> -> vector<18x144xf32>
    %46 = arith.addf %40, %45 : vector<18x144xf32>
    %c8 = arith.constant 8 : index
    %c0_50 = arith.constant 0 : index
    %c0_51 = arith.constant 0 : index
    %47 = vector.load %arg2[%c8, %c0_50, %c0_51] : memref<9x18x4xbf16, #tpu.memory_space<vmem>>, vector<1x18x4xbf16>
    %48 = vector.shape_cast %47 : vector<1x18x4xbf16> to vector<18x4xbf16>
    %c0_52 = arith.constant 0 : index
    %c0_53 = arith.constant 0 : index
    %c0_54 = arith.constant 0 : index
    %c38 = arith.constant 38 : index
    %49 = vector.load %arg3[%c0_52, %c0_53, %c0_54, %c38] : memref<1x1x4x182xbf16, #tpu.memory_space<vmem>>, vector<1x1x4x144xbf16>
    %50 = vector.shape_cast %49 : vector<1x1x4x144xbf16> to vector<4x144xbf16>
    %cst_55 = arith.constant dense<0.000000e+00> : vector<18x144xf32>
    %51 = tpu.matmul %48, %50, %cst_55 {dimension_numbers = #tpu.dot_dimension_numbers<[1], [0], [0], [1], [0, 0, 1, 1], [], []>} : vector<18x4xbf16>, vector<4x144xbf16>, vector<18x144xf32> -> vector<18x144xf32>
    %52 = arith.addf %46, %51 : vector<18x144xf32>
    %53 = tpu.iota {dimensions = array<i32: 1>} : vector<18x144xi32>
    %c18_i32 = arith.constant 18 : i32
    %c0_i32 = arith.constant 0 : i32
    %54 = arith.cmpi eq, %c18_i32, %c0_i32 : i32
    %c1_i32 = arith.constant 1 : i32
    %55 = arith.select %54, %c1_i32, %c18_i32 : i32
    %56 = vector.broadcast %55 : i32 to vector<18x144xi32>
    %57 = arith.remsi %53, %56 : vector<18x144xi32>
    %c0_i32_56 = arith.constant 0 : i32
    %58 = vector.broadcast %c0_i32_56 : i32 to vector<18x144xi32>
    %59 = arith.cmpi ne, %57, %58 : vector<18x144xi32>
    %c0_i32_57 = arith.constant 0 : i32
    %60 = vector.broadcast %c0_i32_57 : i32 to vector<18x144xi32>
    %61 = arith.cmpi slt, %57, %60 : vector<18x144xi32>
    %c0_i32_58 = arith.constant 0 : i32
    %62 = arith.cmpi slt, %55, %c0_i32_58 : i32
    %63 = vector.broadcast %62 : i1 to vector<18x144xi1>
    %64 = vector.broadcast %63 : vector<18x144xi1> to vector<18x144xi1>
    %65 = arith.xori %61, %64 : vector<18x144xi1>
    %66 = arith.andi %65, %59 : vector<18x144xi1>
    %67 = vector.broadcast %55 : i32 to vector<18x144xi32>
    %68 = arith.addi %57, %67 : vector<18x144xi32>
    %69 = arith.select %66, %68, %57 : vector<18x144xi1>, vector<18x144xi32>
    %c16_i32 = arith.constant 16 : i32
    %70 = vector.broadcast %c16_i32 : i32 to vector<18x144xi32>
    %71 = arith.cmpi slt, %69, %70 : vector<18x144xi32>
    %cst_59 = arith.constant 0.000000e+00 : f32
    %72 = vector.broadcast %cst_59 : f32 to vector<18x144xf32>
    %73 = arith.select %71, %52, %72 : vector<18x144xi1>, vector<18x144xf32>
    %cst_60 = arith.constant dense<0.000000e+00> : vector<18xf32>
    %74 = vector.multi_reduction <add>, %73, %cst_60 [1] : vector<18x144xf32> to vector<18xf32>
    %75 = arith.mulf %73, %73 : vector<18x144xf32>
    %cst_61 = arith.constant dense<0.000000e+00> : vector<18xf32>
    %76 = vector.multi_reduction <add>, %75, %cst_61 [1] : vector<18x144xf32> to vector<18xf32>
    %77 = vector.shape_cast %74 : vector<18xf32> to vector<1x18xf32>
    %78 = vector.shape_cast %76 : vector<18xf32> to vector<1x18xf32>
    %79 = tpu.concatenate %77, %78 in 0 : vector<1x18xf32>, vector<1x18xf32> -> vector<2x18xf32>
    %c0_62 = arith.constant 0 : index
    %c0_63 = arith.constant 0 : index
    %c0_64 = arith.constant 0 : index
    %c0_65 = arith.constant 0 : index
    %80 = vector.load %arg4[%c0_62, %c0_63, %c0_64, %c0_65] : memref<1x1x2x18xf32, #tpu.memory_space<vmem>>, vector<1x1x2x18xf32>
    %81 = vector.shape_cast %80 : vector<1x1x2x18xf32> to vector<2x18xf32>
    %82 = vector.shape_cast %79 : vector<2x18xf32> to vector<1x1x2x18xf32>
    tpu.vector_store %arg4[%c0_62, %c0_63, %c0_64, %c0_65], %82 {strides = array<i32>} : memref<1x1x2x18xf32, #tpu.memory_space<vmem>>, vector<1x1x2x18xf32>,
    return
  }
  func.func @transform_0(%arg0: i32, %arg1: i32) -> (i32, i32, i32) {
    %c0_i32 = arith.constant 0 : i32
    %c0_i32_0 = arith.constant 0 : i32
    %c0_i32_1 = arith.constant 0 : i32
    %c0_i32_2 = arith.constant 0 : i32
    return %c0_i32, %c0_i32_0, %c0_i32_1 : i32, i32, i32
  }
  func.func @transform_1(%arg0: i32, %arg1: i32) -> (i32, i32, i32, i32) {
    %c0_i32 = arith.constant 0 : i32
    %c0_i32_0 = arith.constant 0 : i32
    %c0_i32_1 = arith.constant 0 : i32
    return %arg0, %arg1, %c0_i32, %c0_i32_0 : i32, i32, i32, i32
  }
  func.func @transform_2(%arg0: i32, %arg1: i32) -> (i32, i32, i32, i32) {
    %c0_i32 = arith.constant 0 : i32
    %c0_i32_0 = arith.constant 0 : i32
    %c0_i32_1 = arith.constant 0 : i32
    return %arg0, %arg1, %c0_i32, %c0_i32_0 : i32, i32, i32, i32
  }
}

module attributes {stable_mosaic.version = 11 : i64} {
  func.func @_apply_kernel(%arg0: i32, %arg1: i32, %arg2: memref<18x1xf32, #tpu.memory_space<vmem>>, %arg3: memref<9x18x4xbf16, #tpu.memory_space<vmem>>, %arg4: memref<1x1x4x182xbf16, #tpu.memory_space<vmem>>, %arg5: memref<1x1x2x182xbf16, #tpu.memory_space<vmem>>, %arg6: memref<1x1x4x144xf32, #tpu.memory_space<vmem>>) attributes {dimension_semantics = [#tpu.dimension_semantics<parallel>, #tpu.dimension_semantics<parallel>], iteration_bounds = array<i64: 2, 2>, scalar_prefetch = 0 : i64, scratch_operands = 0 : i64, tpu.core_type = #tpu.core_type<tc>, window_params = [{pipeline_mode = #tpu.pipeline_mode<synchronous>, transform_indices = @transform_0, window_bounds = array<i64: 18, 1>}, {pipeline_mode = #tpu.pipeline_mode<synchronous>, transform_indices = @transform_1, window_bounds = array<i64: 9, 18, 4>}, {transform_indices = @transform_2, window_bounds = array<i64: 1, 1, 4, 182>}, {transform_indices = @transform_3, window_bounds = array<i64: 1, 1, 2, 182>}, {transform_indices = @transform_4, window_bounds = array<i64: 1, 1, 4, 144>}]} {
    %c0 = arith.constant 0 : index
    %c0_0 = arith.constant 0 : index
    %c0_1 = arith.constant 0 : index
    %0 = vector.load %arg3[%c0, %c0_0, %c0_1] : memref<9x18x4xbf16, #tpu.memory_space<vmem>>, vector<1x18x4xbf16>
    %1 = vector.shape_cast %0 : vector<1x18x4xbf16> to vector<18x4xbf16>
    %c0_2 = arith.constant 0 : index
    %c0_3 = arith.constant 0 : index
    %c0_4 = arith.constant 0 : index
    %c0_5 = arith.constant 0 : index
    %2 = vector.load %arg4[%c0_2, %c0_3, %c0_4, %c0_5] : memref<1x1x4x182xbf16, #tpu.memory_space<vmem>>, vector<1x1x4x144xbf16>
    %3 = vector.shape_cast %2 : vector<1x1x4x144xbf16> to vector<4x144xbf16>
    %cst = arith.constant dense<0.000000e+00> : vector<18x144xf32>
    %4 = tpu.matmul %1, %3, %cst {dimension_numbers = #tpu.dot_dimension_numbers<[1], [0], [0], [1], [0, 0, 1, 1], [], []>} : vector<18x4xbf16>, vector<4x144xbf16>, vector<18x144xf32> -> vector<18x144xf32>
    %c1 = arith.constant 1 : index
    %c0_6 = arith.constant 0 : index
    %c0_7 = arith.constant 0 : index
    %5 = vector.load %arg3[%c1, %c0_6, %c0_7] : memref<9x18x4xbf16, #tpu.memory_space<vmem>>, vector<1x18x4xbf16>
    %6 = vector.shape_cast %5 : vector<1x18x4xbf16> to vector<18x4xbf16>
    %c0_8 = arith.constant 0 : index
    %c0_9 = arith.constant 0 : index
    %c0_10 = arith.constant 0 : index
    %c1_11 = arith.constant 1 : index
    %7 = vector.load %arg4[%c0_8, %c0_9, %c0_10, %c1_11] : memref<1x1x4x182xbf16, #tpu.memory_space<vmem>>, vector<1x1x4x144xbf16>
    %8 = vector.shape_cast %7 : vector<1x1x4x144xbf16> to vector<4x144xbf16>
    %cst_12 = arith.constant dense<0.000000e+00> : vector<18x144xf32>
    %9 = tpu.matmul %6, %8, %cst_12 {dimension_numbers = #tpu.dot_dimension_numbers<[1], [0], [0], [1], [0, 0, 1, 1], [], []>} : vector<18x4xbf16>, vector<4x144xbf16>, vector<18x144xf32> -> vector<18x144xf32>
    %10 = arith.addf %4, %9 : vector<18x144xf32>
    %c2 = arith.constant 2 : index
    %c0_13 = arith.constant 0 : index
    %c0_14 = arith.constant 0 : index
    %11 = vector.load %arg3[%c2, %c0_13, %c0_14] : memref<9x18x4xbf16, #tpu.memory_space<vmem>>, vector<1x18x4xbf16>
    %12 = vector.shape_cast %11 : vector<1x18x4xbf16> to vector<18x4xbf16>
    %c0_15 = arith.constant 0 : index
    %c0_16 = arith.constant 0 : index
    %c0_17 = arith.constant 0 : index
    %c2_18 = arith.constant 2 : index
    %13 = vector.load %arg4[%c0_15, %c0_16, %c0_17, %c2_18] : memref<1x1x4x182xbf16, #tpu.memory_space<vmem>>, vector<1x1x4x144xbf16>
    %14 = vector.shape_cast %13 : vector<1x1x4x144xbf16> to vector<4x144xbf16>
    %cst_19 = arith.constant dense<0.000000e+00> : vector<18x144xf32>
    %15 = tpu.matmul %12, %14, %cst_19 {dimension_numbers = #tpu.dot_dimension_numbers<[1], [0], [0], [1], [0, 0, 1, 1], [], []>} : vector<18x4xbf16>, vector<4x144xbf16>, vector<18x144xf32> -> vector<18x144xf32>
    %16 = arith.addf %10, %15 : vector<18x144xf32>
    %c3 = arith.constant 3 : index
    %c0_20 = arith.constant 0 : index
    %c0_21 = arith.constant 0 : index
    %17 = vector.load %arg3[%c3, %c0_20, %c0_21] : memref<9x18x4xbf16, #tpu.memory_space<vmem>>, vector<1x18x4xbf16>
    %18 = vector.shape_cast %17 : vector<1x18x4xbf16> to vector<18x4xbf16>
    %c0_22 = arith.constant 0 : index
    %c0_23 = arith.constant 0 : index
    %c0_24 = arith.constant 0 : index
    %c18 = arith.constant 18 : index
    %19 = vector.load %arg4[%c0_22, %c0_23, %c0_24, %c18] : memref<1x1x4x182xbf16, #tpu.memory_space<vmem>>, vector<1x1x4x144xbf16>
    %20 = vector.shape_cast %19 : vector<1x1x4x144xbf16> to vector<4x144xbf16>
    %cst_25 = arith.constant dense<0.000000e+00> : vector<18x144xf32>
    %21 = tpu.matmul %18, %20, %cst_25 {dimension_numbers = #tpu.dot_dimension_numbers<[1], [0], [0], [1], [0, 0, 1, 1], [], []>} : vector<18x4xbf16>, vector<4x144xbf16>, vector<18x144xf32> -> vector<18x144xf32>
    %22 = arith.addf %16, %21 : vector<18x144xf32>
    %c4 = arith.constant 4 : index
    %c0_26 = arith.constant 0 : index
    %c0_27 = arith.constant 0 : index
    %23 = vector.load %arg3[%c4, %c0_26, %c0_27] : memref<9x18x4xbf16, #tpu.memory_space<vmem>>, vector<1x18x4xbf16>
    %24 = vector.shape_cast %23 : vector<1x18x4xbf16> to vector<18x4xbf16>
    %c0_28 = arith.constant 0 : index
    %c0_29 = arith.constant 0 : index
    %c0_30 = arith.constant 0 : index
    %c19 = arith.constant 19 : index
    %25 = vector.load %arg4[%c0_28, %c0_29, %c0_30, %c19] : memref<1x1x4x182xbf16, #tpu.memory_space<vmem>>, vector<1x1x4x144xbf16>
    %26 = vector.shape_cast %25 : vector<1x1x4x144xbf16> to vector<4x144xbf16>
    %cst_31 = arith.constant dense<0.000000e+00> : vector<18x144xf32>
    %27 = tpu.matmul %24, %26, %cst_31 {dimension_numbers = #tpu.dot_dimension_numbers<[1], [0], [0], [1], [0, 0, 1, 1], [], []>} : vector<18x4xbf16>, vector<4x144xbf16>, vector<18x144xf32> -> vector<18x144xf32>
    %28 = arith.addf %22, %27 : vector<18x144xf32>
    %c5 = arith.constant 5 : index
    %c0_32 = arith.constant 0 : index
    %c0_33 = arith.constant 0 : index
    %29 = vector.load %arg3[%c5, %c0_32, %c0_33] : memref<9x18x4xbf16, #tpu.memory_space<vmem>>, vector<1x18x4xbf16>
    %30 = vector.shape_cast %29 : vector<1x18x4xbf16> to vector<18x4xbf16>
    %c0_34 = arith.constant 0 : index
    %c0_35 = arith.constant 0 : index
    %c0_36 = arith.constant 0 : index
    %c20 = arith.constant 20 : index
    %31 = vector.load %arg4[%c0_34, %c0_35, %c0_36, %c20] : memref<1x1x4x182xbf16, #tpu.memory_space<vmem>>, vector<1x1x4x144xbf16>
    %32 = vector.shape_cast %31 : vector<1x1x4x144xbf16> to vector<4x144xbf16>
    %cst_37 = arith.constant dense<0.000000e+00> : vector<18x144xf32>
    %33 = tpu.matmul %30, %32, %cst_37 {dimension_numbers = #tpu.dot_dimension_numbers<[1], [0], [0], [1], [0, 0, 1, 1], [], []>} : vector<18x4xbf16>, vector<4x144xbf16>, vector<18x144xf32> -> vector<18x144xf32>
    %34 = arith.addf %28, %33 : vector<18x144xf32>
    %c6 = arith.constant 6 : index
    %c0_38 = arith.constant 0 : index
    %c0_39 = arith.constant 0 : index
    %35 = vector.load %arg3[%c6, %c0_38, %c0_39] : memref<9x18x4xbf16, #tpu.memory_space<vmem>>, vector<1x18x4xbf16>
    %36 = vector.shape_cast %35 : vector<1x18x4xbf16> to vector<18x4xbf16>
    %c0_40 = arith.constant 0 : index
    %c0_41 = arith.constant 0 : index
    %c0_42 = arith.constant 0 : index
    %c36 = arith.constant 36 : index
    %37 = vector.load %arg4[%c0_40, %c0_41, %c0_42, %c36] : memref<1x1x4x182xbf16, #tpu.memory_space<vmem>>, vector<1x1x4x144xbf16>
    %38 = vector.shape_cast %37 : vector<1x1x4x144xbf16> to vector<4x144xbf16>
    %cst_43 = arith.constant dense<0.000000e+00> : vector<18x144xf32>
    %39 = tpu.matmul %36, %38, %cst_43 {dimension_numbers = #tpu.dot_dimension_numbers<[1], [0], [0], [1], [0, 0, 1, 1], [], []>} : vector<18x4xbf16>, vector<4x144xbf16>, vector<18x144xf32> -> vector<18x144xf32>
    %40 = arith.addf %34, %39 : vector<18x144xf32>
    %c7 = arith.constant 7 : index
    %c0_44 = arith.constant 0 : index
    %c0_45 = arith.constant 0 : index
    %41 = vector.load %arg3[%c7, %c0_44, %c0_45] : memref<9x18x4xbf16, #tpu.memory_space<vmem>>, vector<1x18x4xbf16>
    %42 = vector.shape_cast %41 : vector<1x18x4xbf16> to vector<18x4xbf16>
    %c0_46 = arith.constant 0 : index
    %c0_47 = arith.constant 0 : index
    %c0_48 = arith.constant 0 : index
    %c37 = arith.constant 37 : index
    %43 = vector.load %arg4[%c0_46, %c0_47, %c0_48, %c37] : memref<1x1x4x182xbf16, #tpu.memory_space<vmem>>, vector<1x1x4x144xbf16>
    %44 = vector.shape_cast %43 : vector<1x1x4x144xbf16> to vector<4x144xbf16>
    %cst_49 = arith.constant dense<0.000000e+00> : vector<18x144xf32>
    %45 = tpu.matmul %42, %44, %cst_49 {dimension_numbers = #tpu.dot_dimension_numbers<[1], [0], [0], [1], [0, 0, 1, 1], [], []>} : vector<18x4xbf16>, vector<4x144xbf16>, vector<18x144xf32> -> vector<18x144xf32>
    %46 = arith.addf %40, %45 : vector<18x144xf32>
    %c8 = arith.constant 8 : index
    %c0_50 = arith.constant 0 : index
    %c0_51 = arith.constant 0 : index
    %47 = vector.load %arg3[%c8, %c0_50, %c0_51] : memref<9x18x4xbf16, #tpu.memory_space<vmem>>, vector<1x18x4xbf16>
    %48 = vector.shape_cast %47 : vector<1x18x4xbf16> to vector<18x4xbf16>
    %c0_52 = arith.constant 0 : index
    %c0_53 = arith.constant 0 : index
    %c0_54 = arith.constant 0 : index
    %c38 = arith.constant 38 : index
    %49 = vector.load %arg4[%c0_52, %c0_53, %c0_54, %c38] : memref<1x1x4x182xbf16, #tpu.memory_space<vmem>>, vector<1x1x4x144xbf16>
    %50 = vector.shape_cast %49 : vector<1x1x4x144xbf16> to vector<4x144xbf16>
    %cst_55 = arith.constant dense<0.000000e+00> : vector<18x144xf32>
    %51 = tpu.matmul %48, %50, %cst_55 {dimension_numbers = #tpu.dot_dimension_numbers<[1], [0], [0], [1], [0, 0, 1, 1], [], []>} : vector<18x4xbf16>, vector<4x144xbf16>, vector<18x144xf32> -> vector<18x144xf32>
    %52 = arith.addf %46, %51 : vector<18x144xf32>
    %c0_56 = arith.constant 0 : index
    %c0_57 = arith.constant 0 : index
    %53 = vector.load %arg2[%c0_56, %c0_57] : memref<18x1xf32, #tpu.memory_space<vmem>>, vector<18x1xf32>
    %54 = vector.broadcast %53 : vector<18x1xf32> to vector<18x144xf32>
    %55 = arith.addf %52, %54 : vector<18x144xf32>
    %cst_58 = arith.constant dense<0xFF800000> : vector<144xf32>
    %56 = vector.multi_reduction <maximumf>, %55, %cst_58 [0] : vector<18x144xf32> to vector<144xf32>
    %57 = vector.shape_cast %56 : vector<144xf32> to vector<1x144xf32>
    %58 = vector.broadcast %57 : vector<1x144xf32> to vector<18x144xf32>
    %59 = arith.subf %55, %58 : vector<18x144xf32>
    %60 = math.exp %59 : vector<18x144xf32>
    %cst_59 = arith.constant dense<0.000000e+00> : vector<144xf32>
    %61 = vector.multi_reduction <add>, %60, %cst_59 [0] : vector<18x144xf32> to vector<144xf32>
    %62 = vector.shape_cast %61 : vector<144xf32> to vector<1x144xf32>
    %63 = tpu.reciprocal %62 {approx = true} : vector<1x144xf32> -> vector<1x144xf32>
    %64 = vector.broadcast %63 : vector<1x144xf32> to vector<18x144xf32>
    %65 = arith.mulf %60, %64 : vector<18x144xf32>
    %cst_60 = arith.constant 0.000000e+00 : f32
    %66 = vector.broadcast %cst_60 : f32 to vector<2x144xf32>
    %c0_61 = arith.constant 0 : index
    %c0_62 = arith.constant 0 : index
    %c0_63 = arith.constant 0 : index
    %c0_64 = arith.constant 0 : index
    %67 = vector.load %arg5[%c0_61, %c0_62, %c0_63, %c0_64] : memref<1x1x2x182xbf16, #tpu.memory_space<vmem>>, vector<1x1x1x144xbf16>
    %68 = vector.shape_cast %67 : vector<1x1x1x144xbf16> to vector<1x144xbf16>
    %69 = arith.extf %68 : vector<1x144xbf16> to vector<1x144xf32>
    %70 = vector.extract_strided_slice %65 {offsets = [0, 0], sizes = [1, 144], strides = [1, 1]} : vector<18x144xf32> to vector<1x144xf32>
    %71 = arith.mulf %69, %70 : vector<1x144xf32>
    %c0_65 = arith.constant 0 : index
    %c0_66 = arith.constant 0 : index
    %c0_67 = arith.constant 0 : index
    %c0_68 = arith.constant 0 : index
    %72 = vector.load %arg4[%c0_65, %c0_66, %c0_67, %c0_68] : memref<1x1x4x182xbf16, #tpu.memory_space<vmem>>, vector<1x1x2x144xbf16>
    %73 = vector.shape_cast %72 : vector<1x1x2x144xbf16> to vector<2x144xbf16>
    %74 = arith.extf %73 : vector<2x144xbf16> to vector<2x144xf32>
    %75 = vector.broadcast %71 : vector<1x144xf32> to vector<2x144xf32>
    %76 = arith.mulf %74, %75 : vector<2x144xf32>
    %77 = arith.addf %66, %76 : vector<2x144xf32>
    %c0_69 = arith.constant 0 : index
    %c0_70 = arith.constant 0 : index
    %c0_71 = arith.constant 0 : index
    %c1_72 = arith.constant 1 : index
    %78 = vector.load %arg5[%c0_69, %c0_70, %c0_71, %c1_72] : memref<1x1x2x182xbf16, #tpu.memory_space<vmem>>, vector<1x1x1x144xbf16>
    %79 = vector.shape_cast %78 : vector<1x1x1x144xbf16> to vector<1x144xbf16>
    %80 = arith.extf %79 : vector<1x144xbf16> to vector<1x144xf32>
    %81 = vector.extract_strided_slice %65 {offsets = [1, 0], sizes = [1, 144], strides = [1, 1]} : vector<18x144xf32> to vector<1x144xf32>
    %82 = arith.mulf %80, %81 : vector<1x144xf32>
    %c0_73 = arith.constant 0 : index
    %c0_74 = arith.constant 0 : index
    %c0_75 = arith.constant 0 : index
    %c1_76 = arith.constant 1 : index
    %83 = vector.load %arg4[%c0_73, %c0_74, %c0_75, %c1_76] : memref<1x1x4x182xbf16, #tpu.memory_space<vmem>>, vector<1x1x2x144xbf16>
    %84 = vector.shape_cast %83 : vector<1x1x2x144xbf16> to vector<2x144xbf16>
    %85 = arith.extf %84 : vector<2x144xbf16> to vector<2x144xf32>
    %86 = vector.broadcast %82 : vector<1x144xf32> to vector<2x144xf32>
    %87 = arith.mulf %85, %86 : vector<2x144xf32>
    %88 = arith.addf %77, %87 : vector<2x144xf32>
    %c0_77 = arith.constant 0 : index
    %c0_78 = arith.constant 0 : index
    %c0_79 = arith.constant 0 : index
    %c2_80 = arith.constant 2 : index
    %89 = vector.load %arg5[%c0_77, %c0_78, %c0_79, %c2_80] : memref<1x1x2x182xbf16, #tpu.memory_space<vmem>>, vector<1x1x1x144xbf16>
    %90 = vector.shape_cast %89 : vector<1x1x1x144xbf16> to vector<1x144xbf16>
    %91 = arith.extf %90 : vector<1x144xbf16> to vector<1x144xf32>
    %92 = vector.extract_strided_slice %65 {offsets = [2, 0], sizes = [1, 144], strides = [1, 1]} : vector<18x144xf32> to vector<1x144xf32>
    %93 = arith.mulf %91, %92 : vector<1x144xf32>
    %c0_81 = arith.constant 0 : index
    %c0_82 = arith.constant 0 : index
    %c0_83 = arith.constant 0 : index
    %c2_84 = arith.constant 2 : index
    %94 = vector.load %arg4[%c0_81, %c0_82, %c0_83, %c2_84] : memref<1x1x4x182xbf16, #tpu.memory_space<vmem>>, vector<1x1x2x144xbf16>
    %95 = vector.shape_cast %94 : vector<1x1x2x144xbf16> to vector<2x144xbf16>
    %96 = arith.extf %95 : vector<2x144xbf16> to vector<2x144xf32>
    %97 = vector.broadcast %93 : vector<1x144xf32> to vector<2x144xf32>
    %98 = arith.mulf %96, %97 : vector<2x144xf32>
    %99 = arith.addf %88, %98 : vector<2x144xf32>
    %c0_85 = arith.constant 0 : index
    %c0_86 = arith.constant 0 : index
    %c0_87 = arith.constant 0 : index
    %c18_88 = arith.constant 18 : index
    %100 = vector.load %arg5[%c0_85, %c0_86, %c0_87, %c18_88] : memref<1x1x2x182xbf16, #tpu.memory_space<vmem>>, vector<1x1x1x144xbf16>
    %101 = vector.shape_cast %100 : vector<1x1x1x144xbf16> to vector<1x144xbf16>
    %102 = arith.extf %101 : vector<1x144xbf16> to vector<1x144xf32>
    %103 = vector.extract_strided_slice %65 {offsets = [3, 0], sizes = [1, 144], strides = [1, 1]} : vector<18x144xf32> to vector<1x144xf32>
    %104 = arith.mulf %102, %103 : vector<1x144xf32>
    %c0_89 = arith.constant 0 : index
    %c0_90 = arith.constant 0 : index
    %c0_91 = arith.constant 0 : index
    %c18_92 = arith.constant 18 : index
    %105 = vector.load %arg4[%c0_89, %c0_90, %c0_91, %c18_92] : memref<1x1x4x182xbf16, #tpu.memory_space<vmem>>, vector<1x1x2x144xbf16>
    %106 = vector.shape_cast %105 : vector<1x1x2x144xbf16> to vector<2x144xbf16>
    %107 = arith.extf %106 : vector<2x144xbf16> to vector<2x144xf32>
    %108 = vector.broadcast %104 : vector<1x144xf32> to vector<2x144xf32>
    %109 = arith.mulf %107, %108 : vector<2x144xf32>
    %110 = arith.addf %99, %109 : vector<2x144xf32>
    %c0_93 = arith.constant 0 : index
    %c0_94 = arith.constant 0 : index
    %c0_95 = arith.constant 0 : index
    %c19_96 = arith.constant 19 : index
    %111 = vector.load %arg5[%c0_93, %c0_94, %c0_95, %c19_96] : memref<1x1x2x182xbf16, #tpu.memory_space<vmem>>, vector<1x1x1x144xbf16>
    %112 = vector.shape_cast %111 : vector<1x1x1x144xbf16> to vector<1x144xbf16>
    %113 = arith.extf %112 : vector<1x144xbf16> to vector<1x144xf32>
    %114 = vector.extract_strided_slice %65 {offsets = [4, 0], sizes = [1, 144], strides = [1, 1]} : vector<18x144xf32> to vector<1x144xf32>
    %115 = arith.mulf %113, %114 : vector<1x144xf32>
    %c0_97 = arith.constant 0 : index
    %c0_98 = arith.constant 0 : index
    %c0_99 = arith.constant 0 : index
    %c19_100 = arith.constant 19 : index
    %116 = vector.load %arg4[%c0_97, %c0_98, %c0_99, %c19_100] : memref<1x1x4x182xbf16, #tpu.memory_space<vmem>>, vector<1x1x2x144xbf16>
    %117 = vector.shape_cast %116 : vector<1x1x2x144xbf16> to vector<2x144xbf16>
    %118 = arith.extf %117 : vector<2x144xbf16> to vector<2x144xf32>
    %119 = vector.broadcast %115 : vector<1x144xf32> to vector<2x144xf32>
    %120 = arith.mulf %118, %119 : vector<2x144xf32>
    %121 = arith.addf %110, %120 : vector<2x144xf32>
    %c0_101 = arith.constant 0 : index
    %c0_102 = arith.constant 0 : index
    %c0_103 = arith.constant 0 : index
    %c20_104 = arith.constant 20 : index
    %122 = vector.load %arg5[%c0_101, %c0_102, %c0_103, %c20_104] : memref<1x1x2x182xbf16, #tpu.memory_space<vmem>>, vector<1x1x1x144xbf16>
    %123 = vector.shape_cast %122 : vector<1x1x1x144xbf16> to vector<1x144xbf16>
    %124 = arith.extf %123 : vector<1x144xbf16> to vector<1x144xf32>
    %125 = vector.extract_strided_slice %65 {offsets = [5, 0], sizes = [1, 144], strides = [1, 1]} : vector<18x144xf32> to vector<1x144xf32>
    %126 = arith.mulf %124, %125 : vector<1x144xf32>
    %c0_105 = arith.constant 0 : index
    %c0_106 = arith.constant 0 : index
    %c0_107 = arith.constant 0 : index
    %c20_108 = arith.constant 20 : index
    %127 = vector.load %arg4[%c0_105, %c0_106, %c0_107, %c20_108] : memref<1x1x4x182xbf16, #tpu.memory_space<vmem>>, vector<1x1x2x144xbf16>
    %128 = vector.shape_cast %127 : vector<1x1x2x144xbf16> to vector<2x144xbf16>
    %129 = arith.extf %128 : vector<2x144xbf16> to vector<2x144xf32>
    %130 = vector.broadcast %126 : vector<1x144xf32> to vector<2x144xf32>
    %131 = arith.mulf %129, %130 : vector<2x144xf32>
    %132 = arith.addf %121, %131 : vector<2x144xf32>
    %c0_109 = arith.constant 0 : index
    %c0_110 = arith.constant 0 : index
    %c0_111 = arith.constant 0 : index
    %c36_112 = arith.constant 36 : index
    %133 = vector.load %arg5[%c0_109, %c0_110, %c0_111, %c36_112] : memref<1x1x2x182xbf16, #tpu.memory_space<vmem>>, vector<1x1x1x144xbf16>
    %134 = vector.shape_cast %133 : vector<1x1x1x144xbf16> to vector<1x144xbf16>
    %135 = arith.extf %134 : vector<1x144xbf16> to vector<1x144xf32>
    %136 = vector.extract_strided_slice %65 {offsets = [6, 0], sizes = [1, 144], strides = [1, 1]} : vector<18x144xf32> to vector<1x144xf32>
    %137 = arith.mulf %135, %136 : vector<1x144xf32>
    %c0_113 = arith.constant 0 : index
    %c0_114 = arith.constant 0 : index
    %c0_115 = arith.constant 0 : index
    %c36_116 = arith.constant 36 : index
    %138 = vector.load %arg4[%c0_113, %c0_114, %c0_115, %c36_116] : memref<1x1x4x182xbf16, #tpu.memory_space<vmem>>, vector<1x1x2x144xbf16>
    %139 = vector.shape_cast %138 : vector<1x1x2x144xbf16> to vector<2x144xbf16>
    %140 = arith.extf %139 : vector<2x144xbf16> to vector<2x144xf32>
    %141 = vector.broadcast %137 : vector<1x144xf32> to vector<2x144xf32>
    %142 = arith.mulf %140, %141 : vector<2x144xf32>
    %143 = arith.addf %132, %142 : vector<2x144xf32>
    %c0_117 = arith.constant 0 : index
    %c0_118 = arith.constant 0 : index
    %c0_119 = arith.constant 0 : index
    %c37_120 = arith.constant 37 : index
    %144 = vector.load %arg5[%c0_117, %c0_118, %c0_119, %c37_120] : memref<1x1x2x182xbf16, #tpu.memory_space<vmem>>, vector<1x1x1x144xbf16>
    %145 = vector.shape_cast %144 : vector<1x1x1x144xbf16> to vector<1x144xbf16>
    %146 = arith.extf %145 : vector<1x144xbf16> to vector<1x144xf32>
    %147 = vector.extract_strided_slice %65 {offsets = [7, 0], sizes = [1, 144], strides = [1, 1]} : vector<18x144xf32> to vector<1x144xf32>
    %148 = arith.mulf %146, %147 : vector<1x144xf32>
    %c0_121 = arith.constant 0 : index
    %c0_122 = arith.constant 0 : index
    %c0_123 = arith.constant 0 : index
    %c37_124 = arith.constant 37 : index
    %149 = vector.load %arg4[%c0_121, %c0_122, %c0_123, %c37_124] : memref<1x1x4x182xbf16, #tpu.memory_space<vmem>>, vector<1x1x2x144xbf16>
    %150 = vector.shape_cast %149 : vector<1x1x2x144xbf16> to vector<2x144xbf16>
    %151 = arith.extf %150 : vector<2x144xbf16> to vector<2x144xf32>
    %152 = vector.broadcast %148 : vector<1x144xf32> to vector<2x144xf32>
    %153 = arith.mulf %151, %152 : vector<2x144xf32>
    %154 = arith.addf %143, %153 : vector<2x144xf32>
    %c0_125 = arith.constant 0 : index
    %c0_126 = arith.constant 0 : index
    %c0_127 = arith.constant 0 : index
    %c38_128 = arith.constant 38 : index
    %155 = vector.load %arg5[%c0_125, %c0_126, %c0_127, %c38_128] : memref<1x1x2x182xbf16, #tpu.memory_space<vmem>>, vector<1x1x1x144xbf16>
    %156 = vector.shape_cast %155 : vector<1x1x1x144xbf16> to vector<1x144xbf16>
    %157 = arith.extf %156 : vector<1x144xbf16> to vector<1x144xf32>
    %158 = vector.extract_strided_slice %65 {offsets = [8, 0], sizes = [1, 144], strides = [1, 1]} : vector<18x144xf32> to vector<1x144xf32>
    %159 = arith.mulf %157, %158 : vector<1x144xf32>
    %c0_129 = arith.constant 0 : index
    %c0_130 = arith.constant 0 : index
    %c0_131 = arith.constant 0 : index
    %c38_132 = arith.constant 38 : index
    %160 = vector.load %arg4[%c0_129, %c0_130, %c0_131, %c38_132] : memref<1x1x4x182xbf16, #tpu.memory_space<vmem>>, vector<1x1x2x144xbf16>
    %161 = vector.shape_cast %160 : vector<1x1x2x144xbf16> to vector<2x144xbf16>
    %162 = arith.extf %161 : vector<2x144xbf16> to vector<2x144xf32>
    %163 = vector.broadcast %159 : vector<1x144xf32> to vector<2x144xf32>
    %164 = arith.mulf %162, %163 : vector<2x144xf32>
    %165 = arith.addf %154, %164 : vector<2x144xf32>
    %c0_133 = arith.constant 0 : index
    %c0_134 = arith.constant 0 : index
    %c0_135 = arith.constant 0 : index
    %c0_136 = arith.constant 0 : index
    %166 = vector.load %arg6[%c0_133, %c0_134, %c0_135, %c0_136] : memref<1x1x4x144xf32, #tpu.memory_space<vmem>>, vector<1x1x2x144xf32>
    %167 = vector.shape_cast %166 : vector<1x1x2x144xf32> to vector<2x144xf32>
    %168 = vector.shape_cast %165 : vector<2x144xf32> to vector<1x1x2x144xf32>
    tpu.vector_store %arg6[%c0_133, %c0_134, %c0_135, %c0_136], %168 {strides = array<i32>} : memref<1x1x4x144xf32, #tpu.memory_space<vmem>>, vector<1x1x2x144xf32>,
    %cst_137 = arith.constant 0.000000e+00 : f32
    %169 = vector.broadcast %cst_137 : f32 to vector<2x144xf32>
    %c0_138 = arith.constant 0 : index
    %c0_139 = arith.constant 0 : index
    %c1_140 = arith.constant 1 : index
    %c0_141 = arith.constant 0 : index
    %170 = vector.load %arg5[%c0_138, %c0_139, %c1_140, %c0_141] : memref<1x1x2x182xbf16, #tpu.memory_space<vmem>>, vector<1x1x1x144xbf16>
    %171 = vector.shape_cast %170 : vector<1x1x1x144xbf16> to vector<1x144xbf16>
    %172 = arith.extf %171 : vector<1x144xbf16> to vector<1x144xf32>
    %173 = vector.extract_strided_slice %65 {offsets = [9, 0], sizes = [1, 144], strides = [1, 1]} : vector<18x144xf32> to vector<1x144xf32>
    %174 = arith.mulf %172, %173 : vector<1x144xf32>
    %c0_142 = arith.constant 0 : index
    %c0_143 = arith.constant 0 : index
    %c2_144 = arith.constant 2 : index
    %c0_145 = arith.constant 0 : index
    %175 = vector.load %arg4[%c0_142, %c0_143, %c2_144, %c0_145] : memref<1x1x4x182xbf16, #tpu.memory_space<vmem>>, vector<1x1x2x144xbf16>
    %176 = vector.shape_cast %175 : vector<1x1x2x144xbf16> to vector<2x144xbf16>
    %177 = arith.extf %176 : vector<2x144xbf16> to vector<2x144xf32>
    %178 = vector.broadcast %174 : vector<1x144xf32> to vector<2x144xf32>
    %179 = arith.mulf %177, %178 : vector<2x144xf32>
    %180 = arith.addf %169, %179 : vector<2x144xf32>
    %c0_146 = arith.constant 0 : index
    %c0_147 = arith.constant 0 : index
    %c1_148 = arith.constant 1 : index
    %c1_149 = arith.constant 1 : index
    %181 = vector.load %arg5[%c0_146, %c0_147, %c1_148, %c1_149] : memref<1x1x2x182xbf16, #tpu.memory_space<vmem>>, vector<1x1x1x144xbf16>
    %182 = vector.shape_cast %181 : vector<1x1x1x144xbf16> to vector<1x144xbf16>
    %183 = arith.extf %182 : vector<1x144xbf16> to vector<1x144xf32>
    %184 = vector.extract_strided_slice %65 {offsets = [10, 0], sizes = [1, 144], strides = [1, 1]} : vector<18x144xf32> to vector<1x144xf32>
    %185 = arith.mulf %183, %184 : vector<1x144xf32>
    %c0_150 = arith.constant 0 : index
    %c0_151 = arith.constant 0 : index
    %c2_152 = arith.constant 2 : index
    %c1_153 = arith.constant 1 : index
    %186 = vector.load %arg4[%c0_150, %c0_151, %c2_152, %c1_153] : memref<1x1x4x182xbf16, #tpu.memory_space<vmem>>, vector<1x1x2x144xbf16>
    %187 = vector.shape_cast %186 : vector<1x1x2x144xbf16> to vector<2x144xbf16>
    %188 = arith.extf %187 : vector<2x144xbf16> to vector<2x144xf32>
    %189 = vector.broadcast %185 : vector<1x144xf32> to vector<2x144xf32>
    %190 = arith.mulf %188, %189 : vector<2x144xf32>
    %191 = arith.addf %180, %190 : vector<2x144xf32>
    %c0_154 = arith.constant 0 : index
    %c0_155 = arith.constant 0 : index
    %c1_156 = arith.constant 1 : index
    %c2_157 = arith.constant 2 : index
    %192 = vector.load %arg5[%c0_154, %c0_155, %c1_156, %c2_157] : memref<1x1x2x182xbf16, #tpu.memory_space<vmem>>, vector<1x1x1x144xbf16>
    %193 = vector.shape_cast %192 : vector<1x1x1x144xbf16> to vector<1x144xbf16>
    %194 = arith.extf %193 : vector<1x144xbf16> to vector<1x144xf32>
    %195 = vector.extract_strided_slice %65 {offsets = [11, 0], sizes = [1, 144], strides = [1, 1]} : vector<18x144xf32> to vector<1x144xf32>
    %196 = arith.mulf %194, %195 : vector<1x144xf32>
    %c0_158 = arith.constant 0 : index
    %c0_159 = arith.constant 0 : index
    %c2_160 = arith.constant 2 : index
    %c2_161 = arith.constant 2 : index
    %197 = vector.load %arg4[%c0_158, %c0_159, %c2_160, %c2_161] : memref<1x1x4x182xbf16, #tpu.memory_space<vmem>>, vector<1x1x2x144xbf16>
    %198 = vector.shape_cast %197 : vector<1x1x2x144xbf16> to vector<2x144xbf16>
    %199 = arith.extf %198 : vector<2x144xbf16> to vector<2x144xf32>
    %200 = vector.broadcast %196 : vector<1x144xf32> to vector<2x144xf32>
    %201 = arith.mulf %199, %200 : vector<2x144xf32>
    %202 = arith.addf %191, %201 : vector<2x144xf32>
    %c0_162 = arith.constant 0 : index
    %c0_163 = arith.constant 0 : index
    %c1_164 = arith.constant 1 : index
    %c18_165 = arith.constant 18 : index
    %203 = vector.load %arg5[%c0_162, %c0_163, %c1_164, %c18_165] : memref<1x1x2x182xbf16, #tpu.memory_space<vmem>>, vector<1x1x1x144xbf16>
    %204 = vector.shape_cast %203 : vector<1x1x1x144xbf16> to vector<1x144xbf16>
    %205 = arith.extf %204 : vector<1x144xbf16> to vector<1x144xf32>
    %206 = vector.extract_strided_slice %65 {offsets = [12, 0], sizes = [1, 144], strides = [1, 1]} : vector<18x144xf32> to vector<1x144xf32>
    %207 = arith.mulf %205, %206 : vector<1x144xf32>
    %c0_166 = arith.constant 0 : index
    %c0_167 = arith.constant 0 : index
    %c2_168 = arith.constant 2 : index
    %c18_169 = arith.constant 18 : index
    %208 = vector.load %arg4[%c0_166, %c0_167, %c2_168, %c18_169] : memref<1x1x4x182xbf16, #tpu.memory_space<vmem>>, vector<1x1x2x144xbf16>
    %209 = vector.shape_cast %208 : vector<1x1x2x144xbf16> to vector<2x144xbf16>
    %210 = arith.extf %209 : vector<2x144xbf16> to vector<2x144xf32>
    %211 = vector.broadcast %207 : vector<1x144xf32> to vector<2x144xf32>
    %212 = arith.mulf %210, %211 : vector<2x144xf32>
    %213 = arith.addf %202, %212 : vector<2x144xf32>
    %c0_170 = arith.constant 0 : index
    %c0_171 = arith.constant 0 : index
    %c1_172 = arith.constant 1 : index
    %c19_173 = arith.constant 19 : index
    %214 = vector.load %arg5[%c0_170, %c0_171, %c1_172, %c19_173] : memref<1x1x2x182xbf16, #tpu.memory_space<vmem>>, vector<1x1x1x144xbf16>
    %215 = vector.shape_cast %214 : vector<1x1x1x144xbf16> to vector<1x144xbf16>
    %216 = arith.extf %215 : vector<1x144xbf16> to vector<1x144xf32>
    %217 = vector.extract_strided_slice %65 {offsets = [13, 0], sizes = [1, 144], strides = [1, 1]} : vector<18x144xf32> to vector<1x144xf32>
    %218 = arith.mulf %216, %217 : vector<1x144xf32>
    %c0_174 = arith.constant 0 : index
    %c0_175 = arith.constant 0 : index
    %c2_176 = arith.constant 2 : index
    %c19_177 = arith.constant 19 : index
    %219 = vector.load %arg4[%c0_174, %c0_175, %c2_176, %c19_177] : memref<1x1x4x182xbf16, #tpu.memory_space<vmem>>, vector<1x1x2x144xbf16>
    %220 = vector.shape_cast %219 : vector<1x1x2x144xbf16> to vector<2x144xbf16>
    %221 = arith.extf %220 : vector<2x144xbf16> to vector<2x144xf32>
    %222 = vector.broadcast %218 : vector<1x144xf32> to vector<2x144xf32>
    %223 = arith.mulf %221, %222 : vector<2x144xf32>
    %224 = arith.addf %213, %223 : vector<2x144xf32>
    %c0_178 = arith.constant 0 : index
    %c0_179 = arith.constant 0 : index
    %c1_180 = arith.constant 1 : index
    %c20_181 = arith.constant 20 : index
    %225 = vector.load %arg5[%c0_178, %c0_179, %c1_180, %c20_181] : memref<1x1x2x182xbf16, #tpu.memory_space<vmem>>, vector<1x1x1x144xbf16>
    %226 = vector.shape_cast %225 : vector<1x1x1x144xbf16> to vector<1x144xbf16>
    %227 = arith.extf %226 : vector<1x144xbf16> to vector<1x144xf32>
    %228 = vector.extract_strided_slice %65 {offsets = [14, 0], sizes = [1, 144], strides = [1, 1]} : vector<18x144xf32> to vector<1x144xf32>
    %229 = arith.mulf %227, %228 : vector<1x144xf32>
    %c0_182 = arith.constant 0 : index
    %c0_183 = arith.constant 0 : index
    %c2_184 = arith.constant 2 : index
    %c20_185 = arith.constant 20 : index
    %230 = vector.load %arg4[%c0_182, %c0_183, %c2_184, %c20_185] : memref<1x1x4x182xbf16, #tpu.memory_space<vmem>>, vector<1x1x2x144xbf16>
    %231 = vector.shape_cast %230 : vector<1x1x2x144xbf16> to vector<2x144xbf16>
    %232 = arith.extf %231 : vector<2x144xbf16> to vector<2x144xf32>
    %233 = vector.broadcast %229 : vector<1x144xf32> to vector<2x144xf32>
    %234 = arith.mulf %232, %233 : vector<2x144xf32>
    %235 = arith.addf %224, %234 : vector<2x144xf32>
    %c0_186 = arith.constant 0 : index
    %c0_187 = arith.constant 0 : index
    %c1_188 = arith.constant 1 : index
    %c36_189 = arith.constant 36 : index
    %236 = vector.load %arg5[%c0_186, %c0_187, %c1_188, %c36_189] : memref<1x1x2x182xbf16, #tpu.memory_space<vmem>>, vector<1x1x1x144xbf16>
    %237 = vector.shape_cast %236 : vector<1x1x1x144xbf16> to vector<1x144xbf16>
    %238 = arith.extf %237 : vector<1x144xbf16> to vector<1x144xf32>
    %239 = vector.extract_strided_slice %65 {offsets = [15, 0], sizes = [1, 144], strides = [1, 1]} : vector<18x144xf32> to vector<1x144xf32>
    %240 = arith.mulf %238, %239 : vector<1x144xf32>
    %c0_190 = arith.constant 0 : index
    %c0_191 = arith.constant 0 : index
    %c2_192 = arith.constant 2 : index
    %c36_193 = arith.constant 36 : index
    %241 = vector.load %arg4[%c0_190, %c0_191, %c2_192, %c36_193] : memref<1x1x4x182xbf16, #tpu.memory_space<vmem>>, vector<1x1x2x144xbf16>
    %242 = vector.shape_cast %241 : vector<1x1x2x144xbf16> to vector<2x144xbf16>
    %243 = arith.extf %242 : vector<2x144xbf16> to vector<2x144xf32>
    %244 = vector.broadcast %240 : vector<1x144xf32> to vector<2x144xf32>
    %245 = arith.mulf %243, %244 : vector<2x144xf32>
    %246 = arith.addf %235, %245 : vector<2x144xf32>
    %c0_194 = arith.constant 0 : index
    %c0_195 = arith.constant 0 : index
    %c1_196 = arith.constant 1 : index
    %c37_197 = arith.constant 37 : index
    %247 = vector.load %arg5[%c0_194, %c0_195, %c1_196, %c37_197] : memref<1x1x2x182xbf16, #tpu.memory_space<vmem>>, vector<1x1x1x144xbf16>
    %248 = vector.shape_cast %247 : vector<1x1x1x144xbf16> to vector<1x144xbf16>
    %249 = arith.extf %248 : vector<1x144xbf16> to vector<1x144xf32>
    %250 = vector.extract_strided_slice %65 {offsets = [16, 0], sizes = [1, 144], strides = [1, 1]} : vector<18x144xf32> to vector<1x144xf32>
    %251 = arith.mulf %249, %250 : vector<1x144xf32>
    %c0_198 = arith.constant 0 : index
    %c0_199 = arith.constant 0 : index
    %c2_200 = arith.constant 2 : index
    %c37_201 = arith.constant 37 : index
    %252 = vector.load %arg4[%c0_198, %c0_199, %c2_200, %c37_201] : memref<1x1x4x182xbf16, #tpu.memory_space<vmem>>, vector<1x1x2x144xbf16>
    %253 = vector.shape_cast %252 : vector<1x1x2x144xbf16> to vector<2x144xbf16>
    %254 = arith.extf %253 : vector<2x144xbf16> to vector<2x144xf32>
    %255 = vector.broadcast %251 : vector<1x144xf32> to vector<2x144xf32>
    %256 = arith.mulf %254, %255 : vector<2x144xf32>
    %257 = arith.addf %246, %256 : vector<2x144xf32>
    %c0_202 = arith.constant 0 : index
    %c0_203 = arith.constant 0 : index
    %c1_204 = arith.constant 1 : index
    %c38_205 = arith.constant 38 : index
    %258 = vector.load %arg5[%c0_202, %c0_203, %c1_204, %c38_205] : memref<1x1x2x182xbf16, #tpu.memory_space<vmem>>, vector<1x1x1x144xbf16>
    %259 = vector.shape_cast %258 : vector<1x1x1x144xbf16> to vector<1x144xbf16>
    %260 = arith.extf %259 : vector<1x144xbf16> to vector<1x144xf32>
    %261 = vector.extract_strided_slice %65 {offsets = [17, 0], sizes = [1, 144], strides = [1, 1]} : vector<18x144xf32> to vector<1x144xf32>
    %262 = arith.mulf %260, %261 : vector<1x144xf32>
    %c0_206 = arith.constant 0 : index
    %c0_207 = arith.constant 0 : index
    %c2_208 = arith.constant 2 : index
    %c38_209 = arith.constant 38 : index
    %263 = vector.load %arg4[%c0_206, %c0_207, %c2_208, %c38_209] : memref<1x1x4x182xbf16, #tpu.memory_space<vmem>>, vector<1x1x2x144xbf16>
    %264 = vector.shape_cast %263 : vector<1x1x2x144xbf16> to vector<2x144xbf16>
    %265 = arith.extf %264 : vector<2x144xbf16> to vector<2x144xf32>
    %266 = vector.broadcast %262 : vector<1x144xf32> to vector<2x144xf32>
    %267 = arith.mulf %265, %266 : vector<2x144xf32>
    %268 = arith.addf %257, %267 : vector<2x144xf32>
    %c0_210 = arith.constant 0 : index
    %c0_211 = arith.constant 0 : index
    %c2_212 = arith.constant 2 : index
    %c0_213 = arith.constant 0 : index
    %269 = vector.load %arg6[%c0_210, %c0_211, %c2_212, %c0_213] : memref<1x1x4x144xf32, #tpu.memory_space<vmem>>, vector<1x1x2x144xf32>
    %270 = vector.shape_cast %269 : vector<1x1x2x144xf32> to vector<2x144xf32>
    %271 = vector.shape_cast %268 : vector<2x144xf32> to vector<1x1x2x144xf32>
    tpu.vector_store %arg6[%c0_210, %c0_211, %c2_212, %c0_213], %271 {strides = array<i32>} : memref<1x1x4x144xf32, #tpu.memory_space<vmem>>, vector<1x1x2x144xf32>,
    return
  }
  func.func @transform_0(%arg0: i32, %arg1: i32) -> (i32, i32) {
    %c0_i32 = arith.constant 0 : i32
    %c0_i32_0 = arith.constant 0 : i32
    %c0_i32_1 = arith.constant 0 : i32
    return %c0_i32, %c0_i32_0 : i32, i32
  }
  func.func @transform_1(%arg0: i32, %arg1: i32) -> (i32, i32, i32) {
    %c0_i32 = arith.constant 0 : i32
    %c0_i32_0 = arith.constant 0 : i32
    %c0_i32_1 = arith.constant 0 : i32
    %c0_i32_2 = arith.constant 0 : i32
    return %c0_i32, %c0_i32_0, %c0_i32_1 : i32, i32, i32
  }
  func.func @transform_2(%arg0: i32, %arg1: i32) -> (i32, i32, i32, i32) {
    %c0_i32 = arith.constant 0 : i32
    %c0_i32_0 = arith.constant 0 : i32
    %c0_i32_1 = arith.constant 0 : i32
    return %arg0, %arg1, %c0_i32, %c0_i32_0 : i32, i32, i32, i32
  }
  func.func @transform_3(%arg0: i32, %arg1: i32) -> (i32, i32, i32, i32) {
    %c0_i32 = arith.constant 0 : i32
    %c0_i32_0 = arith.constant 0 : i32
    %c0_i32_1 = arith.constant 0 : i32
    return %arg0, %arg1, %c0_i32, %c0_i32_0 : i32, i32, i32, i32
  }
  func.func @transform_4(%arg0: i32, %arg1: i32) -> (i32, i32, i32, i32) {
    %c0_i32 = arith.constant 0 : i32
    %c0_i32_0 = arith.constant 0 : i32
    %c0_i32_1 = arith.constant 0 : i32
    return %arg0, %arg1, %c0_i32, %c0_i32_0 : i32, i32, i32, i32
  }
}

</mosaic_0001>

<llo_original>
// kernel: fem_forward.2
$region0: #{fem_forward.2}
  #allocation0 [shape = 'u32[]', space=smem, size = 0x4, offset = 0x4, fixed_abs, tag = 'smem constant byte address 0x4 - core index']
  #allocation1 [shape = 'u32[144,128]{1,0:T(1,128)}', space=vmem, size = 0x12000, scoped, tag = 'internal scratch']
  %s0 = inlined_call_operand.vmem [shape: bf16[9,18,4], index: 0, kind: input, shape index: {}]
  %s1 = inlined_call_operand.vmem [shape: bf16[2,2,4,182], index: 1, kind: input, shape index: {}]
  %s2 = inlined_call_operand.vmem [shape: f32[2,2,2,18], index: 2, kind: output, shape index: {}]
  %s3 = sld [smem:[#allocation0]]
  $region41: #{fem_forward.2} parent=0
    _
  %s5 = ssub.s32 1, %s3
  %s6 = scalar_select 0, %s5, %s3
  loop: start=0, step=1, limit=6
  $region2: #{fem_forward.2} parent=0 // loop_pre_header
    _
  $region3: #{fem_forward.2} parent=0 // loop_header
    %s8 = sphi 0, %s12
    %p9 = scmp.ge.s32.totalorder %s8, 6
    %s15 = sphi 0, %s27
    %s16 = sphi 0, %s23
    %s17 = sphi 0, %s15
    %s18 = sphi 0, %s16
    %s19 = sphi 0, %s17
    %s20 = sphi 0, %s18
    %s28 = sphi 0, %s28
    %s30 = sphi 0, %s28
    %s31 = sphi 0, %s30
    %s45 = sphi 0, %s31
    %s53 = sphi 0, %s55
    %s56 = sphi 0, %s53
    %s57 = sphi 0, %s56
    %s73 = sphi 0, %s57
    %s81 = sphi 0, %s83
    %s84 = sphi 0, %s81
    %s85 = sphi 0, %s84
    %s101 = sphi 0, %s85
  $region4: #{fem_forward.2} parent=0 // loop_header_branch
    %11 = sbr.rel (%p9) target = $region8
  $region5: #{fem_forward.2} parent=0 // loop_body
    %s13 = ssub.s32 %s8, 1
    %s14 = ssub.s32 %s8, 2
    %s21 = sadd.s32 1, %s16
    %p22 = scmp.ge.s32.totalorder %s21, 2
    %s23 = scalar_select %p22, 0, %s21
    %s24 = sadd.s32 1, %s15
    %s25 = scalar_select %p22, %s24, %s15
    %p26 = scmp.ge.s32.totalorder %s25, 2
    %s27 = scalar_select %p26, 0, %s25
    %s29 = sadd.s32 %s28, 1
    %p32 = scmp.eq.s32.totalorder %s8, 3
    %p33 = scmp.ne.s32.totalorder %s28, %s30
    %p34 = scmp.eq.s32.totalorder %s8, 0
    %p35 = por %p33, %p34
    %p36 = scmp.ne.s32.totalorder %s28, %s30
    %p37 = scmp.eq.s32.totalorder %s13, 3
    %p38 = por %p36, %p37
    %p39 = scmp.ne.s32.totalorder %s30, %s31
    %p40 = scmp.eq.s32.totalorder %s13, 0
    %p41 = por %p39, %p40
    %p42 = scmp.ne.s32.totalorder %s30, %s31
    %p43 = scmp.eq.s32.totalorder %s14, 3
    %p44 = por %p42, %p43
    %p46 = scmp.ne.s32.totalorder %s31, %s45
    %p47 = scmp.eq.s32.totalorder %s14, 0
    %p48 = por %p46, %p47
    %s49 = ssub.s32 %s15, %s27
    %s50 = ssub.s32 %s16, %s23
    %s51 = sor.u32 %s49, %s50
    %p52 = scmp.eq.s32.totalorder %s51, 0
    %s54 = sadd.s32 %s53, 1
    %s55 = scalar_select %p52, %s53, %s54
    %p58 = pneg %p52
    %p59 = scmp.eq.s32.totalorder %s8, 3
    %p60 = por %p58, %p59
    %p61 = scmp.ne.s32.totalorder %s53, %s56
    %p62 = scmp.eq.s32.totalorder %s8, 0
    %p63 = por %p61, %p62
    %p64 = scmp.ne.s32.totalorder %s53, %s56
    %p65 = scmp.eq.s32.totalorder %s13, 3
    %p66 = por %p64, %p65
    %p67 = scmp.ne.s32.totalorder %s56, %s57
    %p68 = scmp.eq.s32.totalorder %s13, 0
    %p69 = por %p67, %p68
    %p70 = scmp.ne.s32.totalorder %s56, %s57
    %p71 = scmp.eq.s32.totalorder %s14, 3
    %p72 = por %p70, %p71
    %p74 = scmp.ne.s32.totalorder %s57, %s73
    %p75 = scmp.eq.s32.totalorder %s14, 0
    %p76 = por %p74, %p75
    %s77 = ssub.s32 %s15, %s27
    %s78 = ssub.s32 %s16, %s23
    %s79 = sor.u32 %s77, %s78
    %p80 = scmp.eq.s32.totalorder %s79, 0
    %s82 = sadd.s32 %s81, 1
    %s83 = scalar_select %p80, %s81, %s82
    %p86 = pneg %p80
    %p87 = scmp.eq.s32.totalorder %s8, 3
    %p88 = por %p86, %p87
    %p89 = scmp.ne.s32.totalorder %s81, %s84
    %p90 = scmp.eq.s32.totalorder %s8, 0
    %p91 = por %p89, %p90
    %p92 = scmp.ne.s32.totalorder %s81, %s84
    %p93 = scmp.eq.s32.totalorder %s13, 3
    %p94 = por %p92, %p93
    %p95 = scmp.ne.s32.totalorder %s84, %s85
    %p96 = scmp.eq.s32.totalorder %s13, 0
    %p97 = por %p95, %p96
    %p98 = scmp.ne.s32.totalorder %s84, %s85
    %p99 = scmp.eq.s32.totalorder %s14, 3
    %p100 = por %p98, %p99
    %p102 = scmp.ne.s32.totalorder %s85, %s101
    %p103 = scmp.eq.s32.totalorder %s14, 0
    %p104 = por %p102, %p103
    %p105 = scmp.le.s32.totalorder 1, %s8
    %p106 = scmp.lt.s32.totalorder %s8, 5
    %p107 = pnand %p105, %p106
    %p108 = pneg %p107
    // Predicated region
    $region9: #{fem_forward.2} parent=5 // pred_check
      _
    $region10: #{fem_forward.2} parent=5 // pred_check_branch
      %110 = sbr.rel (%p107) target = $region12
    $region11: #{fem_forward.2} parent=5 // pred_region
      %s111 = ssub.s32 %s8, 1
      // Predicated region
      $region13: #{fem_forward.2} parent=11 // pred_check
        %p112 = pneg %p41
      $region14: #{fem_forward.2} parent=11 // pred_check_branch
        %114 = sbr.rel (%p112) target = $region16
      $region15: #{fem_forward.2} parent=11 // pred_region
        _
      $region16: #{fem_forward.2} parent=11 // pred_fallthru
        _
    $region12: #{fem_forward.2} parent=5 // pred_fallthru
      _
    %p115 = scmp.lt.s32.totalorder %s8, 4
    // Predicated region
    $region17: #{fem_forward.2} parent=5 // pred_check
      %p116 = pneg %p115
    $region18: #{fem_forward.2} parent=5 // pred_check_branch
      %118 = sbr.rel (%p116) target = $region20
    $region19: #{fem_forward.2} parent=5 // pred_region
      // Predicated region
      $region21: #{fem_forward.2} parent=19 // pred_check
        %p119 = pneg %p63
      $region22: #{fem_forward.2} parent=19 // pred_check_branch
        %121 = sbr.rel (%p119) target = $region24
      $region23: #{fem_forward.2} parent=19 // pred_region
        %p122 = scmp.lt.s32.totalorder %s15, 1
        %s123 = scalar_select %p122, %s15, 1
        %p124 = scmp.lt.s32.totalorder %s16, 1
        %s125 = scalar_select %p124, %s16, 1
        %s126 = smul.addr %s125, 2
        %s127 = smul.addr %s123, 4
        %s128 = sadd.s32 %s126, %s127
        %s129 = smul.addr %s128, 2
        %s130 = scalar_lea.vmem %s1, %s129
      $region24: #{fem_forward.2} parent=19 // pred_fallthru
        _
    $region20: #{fem_forward.2} parent=5 // pred_fallthru
      _
    %p131 = scmp.le.s32.totalorder 1, %s8
    %p132 = scmp.lt.s32.totalorder %s8, 5
    %p133 = pnand %p131, %p132
    %p134 = pneg %p133
    // Predicated region
    $region25: #{fem_forward.2} parent=5 // pred_check
      _
    $region26: #{fem_forward.2} parent=5 // pred_check_branch
      %136 = sbr.rel (%p133) target = $region28
    $region27: #{fem_forward.2} parent=5 // pred_region
      %s137 = ssub.s32 %s8, 1
      %p138 = pneg %p41
      %p139 = pneg %p38
      %p140 = scmp.lt.s32.totalorder %s17, 1
      %s141 = scalar_select %p140, %s17, 1
      %p142 = scmp.lt.s32.totalorder %s18, 1
      %s143 = scalar_select %p142, %s18, 1
      %s144 = smul.addr %s143, 2
      %s145 = smul.addr %s141, 4
      %s146 = sadd.s32 %s144, %s145
      %s147 = smul.addr %s146, 2
      %s148 = scalar_lea.vmem %s1, %s147
      %p149 = pneg %p69
      %p150 = pneg %p66
      %p151 = pneg %p97
      %p152 = pneg %p94
      %p153 = scmp.lt.s32.totalorder %s17, 1
      %s154 = scalar_select %p153, %s17, 1
      %p155 = scmp.lt.s32.totalorder %s18, 1
      %s156 = scalar_select %p155, %s18, 1
      %s157 = smul.addr %s154, 2
      %s158 = sadd.s32 %s156, %s157
      %s159 = smul.addr %s158, 2
      %s160 = scalar_lea.vmem %s2, %s159
      %p161 = scmp.lt.s32.totalorder %s17, 1
      %s162 = scalar_select %p161, %s17, 1
      %p163 = scmp.lt.s32.totalorder %s18, 1
      %s164 = scalar_select %p163, %s18, 1
      %s165 = smul.addr %s164, 2
      %s166 = smul.addr %s162, 4
      %s167 = sadd.s32 %s165, %s166
      %s168 = smul.addr %s167, 2
      %s169 = scalar_lea.vmem %s1, %s168
      %p170 = scmp.lt.s32.totalorder %s17, 1
      %s171 = scalar_select %p170, %s17, 1
      %p172 = scmp.lt.s32.totalorder %s18, 1
      %s173 = scalar_select %p172, %s18, 1
      %s174 = smul.addr %s171, 2
      %s175 = sadd.s32 %s173, %s174
      %s176 = smul.addr %s175, 2
      %s177 = scalar_lea.vmem %s2, %s176
      %v179 = vld [vmem:[%s0] sm:$0xf]
      %v180 = vld [vmem:[%s0 + $0x4] sm:$0xf]
      %v181 = vld [vmem:[%s0 + $0x8] sm:$0x1]
      %v182 = vld [vmem:[%s169] sm:$0xf]
      %s183 = scalar_lea.vmem %s0, 12
      %v184 = vld [vmem:[%s183] sm:$0xf]
      %v185 = vld [vmem:[%s183 + $0x4] sm:$0xf]
      %v186 = vld [vmem:[%s183 + $0x8] sm:$0x1]
      %v190 = vunpack.c.l.b16 %v184
      %v191 = vunpack.c.l.b16 %v185
      %v192 = vunpack.c.l.b16 %v186
      %v193 = vpack.c.b16 %v191, %v190
      %v194 = vpack.c.b16 %v192, %v192
      %v197 = vunpack.c.l.s4 1983009808
      %v198 = vunpack.c.0.s8 %v197
      %v199 = vlaneseq
      %v200 = vshrl.u32 %v199, 7
      %v201 = vsub.s32 %v198, %v200
      %v202 = vrot.slane %v182, %v201
      %v203 = vcombine.high %v202, %v202
      %204 = vrot.lane.b32.xlu0 %v202, 127
      %v205 = vpop.permute.xlu0 %204
      %206 = vrot.lane.b32.xlu0 %v203, 127
      %v207 = vpop.permute.xlu0 %206
      %vm208 = vcmask 1039360
      %v209 = vsel %vm208, %v205, %v207
      %vm210 = vcmask 31744
      %v212 = vsel %vm210, %v193, 0
      %v215 = vsel %vm210, %v194, 0
      %vm217 = vcmask 1041408
      %v219 = vsel %vm217, %v209, 0
      %v222 = vsel %vm217, %v207, 0
      %224 = vmatprep.subr.bf16.mxu0 0
      %225 = vmatpush1.bf16.msra.mxu0 0
      %226 = vmatprep.subr.bf16.mxu0 0
      %227 = vmatpush1.bf16.msra.mxu0 0
      %228 = vmatprep.subr.bf16.mxu0 0
      %229 = vmatpush1.bf16.msra.mxu0 0
      %230 = vmatprep.subr.bf16.mxu0 0
      %231 = vmatpush1.bf16.msra.mxu0 0
      %232 = vmatprep.subr.bf16.mxu0 0
      %233 = vmatpush1.bf16.msra.mxu0 0
      %234 = vmatprep.subr.bf16.mxu0 0
      %235 = vmatpush1.bf16.msra.mxu0 0
      %236 = vmatprep.subr.bf16.mxu0 0
      %237 = vmatpush1.bf16.msra.mxu0 0
      %238 = vmatprep.subr.bf16.mxu0 %v222
      %239 = vmatpush1.bf16.msra.mxu0 %v219
      %240 = vmatprep.subr.bf16.mxu0 0
      %241 = vmatpush2.bf16.msra.mxu0 0
      %242 = vmatprep.subr.bf16.mxu0 0
      %243 = vmatpush2.bf16.msra.mxu0 0
      %244 = vmatprep.subr.bf16.mxu0 0
      %245 = vmatpush2.bf16.msra.mxu0 0
      %246 = vmatprep.subr.bf16.mxu0 0
      %247 = vmatpush2.bf16.msra.mxu0 0
      %248 = vmatprep.subr.bf16.mxu0 0
      %249 = vmatpush2.bf16.msra.mxu0 0
      %250 = vmatprep.subr.bf16.mxu0 0
      %251 = vmatpush2.bf16.msra.mxu0 0
      %252 = vmatprep.subr.bf16.mxu0 0
      %253 = vmatpush2.bf16.msra.mxu0 0
      %254 = vmatprep.subr.bf16.mxu0 0
      %255 = vmatpush2.bf16.msra.mxu0 0
      %256 = vmatprep.mubr.bf16.mxu0 0
      %257 = vmatmul.mubr.bf16.gmra.mxu0 %v212
      %v258 = vpop.f32.mrf.mxu0
      %v259 = vadd.f32 0.0, %v258
      %v260 = vpop.f32.mrf.mxu0
      %v261 = vadd.f32 0.0, %v260
      %v262 = vpop.f32.mrf.mxu0
      %v263 = vadd.f32 0.0, %v262
      %v264 = vpop.f32.mrf.mxu0
      %v265 = vadd.f32 0.0, %v264
      %266 = vmatprep.mubr.bf16.mxu0 0
      %267 = vmatmul.mubr.bf16.gmra.mxu0 %v215
      %v268 = vpop.f32.mrf.mxu0
      %v269 = vadd.f32 0.0, %v268
      %v270 = vpop.f32.mrf.mxu0
      %v271 = vadd.f32 0.0, %v270
      %v272 = vpop.f32.mrf.mxu0
      %v273 = vpop.f32.mrf.mxu0
      %274 = vdwg.mxu0
      %v278 = vunpack.c.l.b16 %v179
      %v279 = vunpack.c.l.b16 %v180
      %v280 = vunpack.c.l.b16 %v181
      %v281 = vpack.c.b16 %v279, %v278
      %v282 = vpack.c.b16 %v280, %v280
      %v284 = vsel %vm210, %v281, 0
      %v287 = vsel %vm210, %v282, 0
      %v290 = vsel %vm217, %v202, 0
      %v293 = vsel %vm217, %v203, 0
      %295 = vmatprep.subr.bf16.mxu0 0
      %296 = vmatpush1.bf16.msra.mxu0 0
      %297 = vmatprep.subr.bf16.mxu0 0
      %298 = vmatpush1.bf16.msra.mxu0 0
      %299 = vmatprep.subr.bf16.mxu0 0
      %300 = vmatpush1.bf16.msra.mxu0 0
      %301 = vmatprep.subr.bf16.mxu0 0
      %302 = vmatpush1.bf16.msra.mxu0 0
      %303 = vmatprep.subr.bf16.mxu0 0
      %304 = vmatpush1.bf16.msra.mxu0 0
      %305 = vmatprep.subr.bf16.mxu0 0
      %306 = vmatpush1.bf16.msra.mxu0 0
      %307 = vmatprep.subr.bf16.mxu0 0
      %308 = vmatpush1.bf16.msra.mxu0 0
      %309 = vmatprep.subr.bf16.mxu0 %v293
      %310 = vmatpush1.bf16.msra.mxu0 %v290
      %311 = vmatprep.subr.bf16.mxu0 0
      %312 = vmatpush2.bf16.msra.mxu0 0
      %313 = vmatprep.subr.bf16.mxu0 0
      %314 = vmatpush2.bf16.msra.mxu0 0
      %315 = vmatprep.subr.bf16.mxu0 0
      %316 = vmatpush2.bf16.msra.mxu0 0
      %317 = vmatprep.subr.bf16.mxu0 0
      %318 = vmatpush2.bf16.msra.mxu0 0
      %319 = vmatprep.subr.bf16.mxu0 0
      %320 = vmatpush2.bf16.msra.mxu0 0
      %321 = vmatprep.subr.bf16.mxu0 0
      %322 = vmatpush2.bf16.msra.mxu0 0
      %323 = vmatprep.subr.bf16.mxu0 0
      %324 = vmatpush2.bf16.msra.mxu0 0
      %325 = vmatprep.subr.bf16.mxu0 0
      %326 = vmatpush2.bf16.msra.mxu0 0
      %327 = vmatprep.mubr.bf16.mxu0 0
      %328 = vmatmul.mubr.bf16.gmra.mxu0 %v284
      %v329 = vpop.f32.mrf.mxu0
      %v330 = vadd.f32 %v259, %v329
      %v331 = vpop.f32.mrf.mxu0
      %v332 = vadd.f32 %v261, %v331
      %v333 = vpop.f32.mrf.mxu0
      %v334 = vadd.f32 %v263, %v333
      %v335 = vpop.f32.mrf.mxu0
      %v336 = vadd.f32 %v265, %v335
      %337 = vmatprep.mubr.bf16.mxu0 0
      %338 = vmatmul.mubr.bf16.gmra.mxu0 %v287
      %v339 = vpop.f32.mrf.mxu0
      %v340 = vadd.f32 %v269, %v339
      %v341 = vpop.f32.mrf.mxu0
      %v342 = vadd.f32 %v271, %v341
      %v343 = vpop.f32.mrf.mxu0
      %v344 = vpop.f32.mrf.mxu0
      %345 = vdwg.mxu0
      %s346 = scalar_lea.vmem %s0, 24
      %v347 = vld [vmem:[%s346] sm:$0xf]
      %v348 = vld [vmem:[%s346 + $0x4] sm:$0xf]
      %v349 = vld [vmem:[%s346 + $0x8] sm:$0x1]
      %v350 = vld [vmem:[%s169] sm:$0xf]
      %v354 = vunpack.c.l.b16 %v347
      %v355 = vunpack.c.l.b16 %v348
      %v356 = vunpack.c.l.b16 %v349
      %v357 = vpack.c.b16 %v355, %v354
      %v358 = vpack.c.b16 %v356, %v356
      %v361 = vunpack.c.l.s4 1983009808
      %v362 = vunpack.c.0.s8 %v361
      %v363 = vlaneseq
      %v364 = vshrl.u32 %v363, 7
      %v365 = vsub.s32 %v362, %v364
      %v366 = vrot.slane %v350, %v365
      %v367 = vcombine.high %v366, %v366
      %368 = vrot.lane.b32.xlu0 %v366, 126
      %v369 = vpop.permute.xlu0 %368
      %370 = vrot.lane.b32.xlu0 %v367, 126
      %v371 = vpop.permute.xlu0 %370
      %vm372 = vcmask 1031168
      %v373 = vsel %vm372, %v369, %v371
      %v375 = vsel %vm210, %v357, 0
      %v378 = vsel %vm210, %v358, 0
      %v381 = vsel %vm217, %v373, 0
      %v384 = vsel %vm217, %v371, 0
      %386 = vmatprep.subr.bf16.mxu0 0
      %387 = vmatpush1.bf16.msra.mxu0 0
      %388 = vmatprep.subr.bf16.mxu0 0
      %389 = vmatpush1.bf16.msra.mxu0 0
      %390 = vmatprep.subr.bf16.mxu0 0
      %391 = vmatpush1.bf16.msra.mxu0 0
      %392 = vmatprep.subr.bf16.mxu0 0
      %393 = vmatpush1.bf16.msra.mxu0 0
      %394 = vmatprep.subr.bf16.mxu0 0
      %395 = vmatpush1.bf16.msra.mxu0 0
      %396 = vmatprep.subr.bf16.mxu0 0
      %397 = vmatpush1.bf16.msra.mxu0 0
      %398 = vmatprep.subr.bf16.mxu0 0
      %399 = vmatpush1.bf16.msra.mxu0 0
      %400 = vmatprep.subr.bf16.mxu0 %v384
      %401 = vmatpush1.bf16.msra.mxu0 %v381
      %402 = vmatprep.subr.bf16.mxu0 0
      %403 = vmatpush2.bf16.msra.mxu0 0
      %404 = vmatprep.subr.bf16.mxu0 0
      %405 = vmatpush2.bf16.msra.mxu0 0
      %406 = vmatprep.subr.bf16.mxu0 0
      %407 = vmatpush2.bf16.msra.mxu0 0
      %408 = vmatprep.subr.bf16.mxu0 0
      %409 = vmatpush2.bf16.msra.mxu0 0
      %410 = vmatprep.subr.bf16.mxu0 0
      %411 = vmatpush2.bf16.msra.mxu0 0
      %412 = vmatprep.subr.bf16.mxu0 0
      %413 = vmatpush2.bf16.msra.mxu0 0
      %414 = vmatprep.subr.bf16.mxu0 0
      %415 = vmatpush2.bf16.msra.mxu0 0
      %416 = vmatprep.subr.bf16.mxu0 0
      %417 = vmatpush2.bf16.msra.mxu0 0
      %418 = vmatprep.mubr.bf16.mxu0 0
      %419 = vmatmul.mubr.bf16.gmra.mxu0 %v375
      %v420 = vpop.f32.mrf.mxu0
      %v421 = vadd.f32 0.0, %v420
      %v422 = vpop.f32.mrf.mxu0
      %v423 = vadd.f32 0.0, %v422
      %v424 = vpop.f32.mrf.mxu0
      %v425 = vadd.f32 0.0, %v424
      %v426 = vpop.f32.mrf.mxu0
      %v427 = vadd.f32 0.0, %v426
      %428 = vmatprep.mubr.bf16.mxu0 0
      %429 = vmatmul.mubr.bf16.gmra.mxu0 %v378
      %v430 = vpop.f32.mrf.mxu0
      %v431 = vadd.f32 0.0, %v430
      %v432 = vpop.f32.mrf.mxu0
      %v433 = vadd.f32 0.0, %v432
      %v434 = vpop.f32.mrf.mxu0
      %v435 = vpop.f32.mrf.mxu0
      %436 = vdwg.mxu0
      %v437 = vadd.f32 %v330, %v421
      %v438 = vadd.f32 %v332, %v423
      %v439 = vadd.f32 %v334, %v425
      %v440 = vadd.f32 %v336, %v427
      %v441 = vadd.f32 %v340, %v431
      %v442 = vadd.f32 %v342, %v433
      %s443 = scalar_lea.vmem %s0, 36
      %v444 = vld [vmem:[%s443] sm:$0xf]
      %v445 = vld [vmem:[%s443 + $0x4] sm:$0xf]
      %v446 = vld [vmem:[%s443 + $0x8] sm:$0x1]
      %v447 = vld [vmem:[%s169] sm:$0xf]
      %v451 = vunpack.c.l.b16 %v444
      %v452 = vunpack.c.l.b16 %v445
      %v453 = vunpack.c.l.b16 %v446
      %v454 = vpack.c.b16 %v452, %v451
      %v455 = vpack.c.b16 %v453, %v453
      %v458 = vunpack.c.l.s4 1983009808
      %v459 = vunpack.c.0.s8 %v458
      %v460 = vlaneseq
      %v461 = vshrl.u32 %v460, 7
      %v462 = vsub.s32 %v459, %v461
      %v463 = vrot.slane %v447, %v462
      %v464 = vcombine.high %v463, %v463
      %465 = vrot.lane.b32.xlu0 %v463, 110
      %v466 = vpop.permute.xlu0 %465
      %467 = vrot.lane.b32.xlu0 %v464, 110
      %v468 = vpop.permute.xlu0 %467
      %vm469 = vcmask 900096
      %v470 = vsel %vm469, %v466, %v468
      %v472 = vsel %vm210, %v454, 0
      %v475 = vsel %vm210, %v455, 0
      %v478 = vsel %vm217, %v470, 0
      %v481 = vsel %vm217, %v468, 0
      %483 = vmatprep.subr.bf16.mxu0 0
      %484 = vmatpush1.bf16.msra.mxu0 0
      %485 = vmatprep.subr.bf16.mxu0 0
      %486 = vmatpush1.bf16.msra.mxu0 0
      %487 = vmatprep.subr.bf16.mxu0 0
      %488 = vmatpush1.bf16.msra.mxu0 0
      %489 = vmatprep.subr.bf16.mxu0 0
      %490 = vmatpush1.bf16.msra.mxu0 0
      %491 = vmatprep.subr.bf16.mxu0 0
      %492 = vmatpush1.bf16.msra.mxu0 0
      %493 = vmatprep.subr.bf16.mxu0 0
      %494 = vmatpush1.bf16.msra.mxu0 0
      %495 = vmatprep.subr.bf16.mxu0 0
      %496 = vmatpush1.bf16.msra.mxu0 0
      %497 = vmatprep.subr.bf16.mxu0 %v481
      %498 = vmatpush1.bf16.msra.mxu0 %v478
      %499 = vmatprep.subr.bf16.mxu0 0
      %500 = vmatpush2.bf16.msra.mxu0 0
      %501 = vmatprep.subr.bf16.mxu0 0
      %502 = vmatpush2.bf16.msra.mxu0 0
      %503 = vmatprep.subr.bf16.mxu0 0
      %504 = vmatpush2.bf16.msra.mxu0 0
      %505 = vmatprep.subr.bf16.mxu0 0
      %506 = vmatpush2.bf16.msra.mxu0 0
      %507 = vmatprep.subr.bf16.mxu0 0
      %508 = vmatpush2.bf16.msra.mxu0 0
      %509 = vmatprep.subr.bf16.mxu0 0
      %510 = vmatpush2.bf16.msra.mxu0 0
      %511 = vmatprep.subr.bf16.mxu0 0
      %512 = vmatpush2.bf16.msra.mxu0 0
      %513 = vmatprep.subr.bf16.mxu0 0
      %514 = vmatpush2.bf16.msra.mxu0 0
      %515 = vmatprep.mubr.bf16.mxu0 0
      %516 = vmatmul.mubr.bf16.gmra.mxu0 %v472
      %v517 = vpop.f32.mrf.mxu0
      %v518 = vadd.f32 0.0, %v517
      %v519 = vpop.f32.mrf.mxu0
      %v520 = vadd.f32 0.0, %v519
      %v521 = vpop.f32.mrf.mxu0
      %v522 = vadd.f32 0.0, %v521
      %v523 = vpop.f32.mrf.mxu0
      %v524 = vadd.f32 0.0, %v523
      %525 = vmatprep.mubr.bf16.mxu0 0
      %526 = vmatmul.mubr.bf16.gmra.mxu0 %v475
      %v527 = vpop.f32.mrf.mxu0
      %v528 = vadd.f32 0.0, %v527
      %v529 = vpop.f32.mrf.mxu0
      %v530 = vadd.f32 0.0, %v529
      %v531 = vpop.f32.mrf.mxu0
      %v532 = vpop.f32.mrf.mxu0
      %533 = vdwg.mxu0
      %v534 = vadd.f32 %v437, %v518
      %v535 = vadd.f32 %v438, %v520
      %v536 = vadd.f32 %v439, %v522
      %v537 = vadd.f32 %v440, %v524
      %v538 = vadd.f32 %v441, %v528
      %v539 = vadd.f32 %v442, %v530
      %s540 = scalar_lea.vmem %s0, 48
      %v541 = vld [vmem:[%s540] sm:$0xf]
      %v542 = vld [vmem:[%s540 + $0x4] sm:$0xf]
      %v543 = vld [vmem:[%s540 + $0x8] sm:$0x1]
      %v544 = vld [vmem:[%s169] sm:$0xf]
      %v548 = vunpack.c.l.b16 %v541
      %v549 = vunpack.c.l.b16 %v542
      %v550 = vunpack.c.l.b16 %v543
      %v551 = vpack.c.b16 %v549, %v548
      %v552 = vpack.c.b16 %v550, %v550
      %v555 = vunpack.c.l.s4 1983009808
      %v556 = vunpack.c.0.s8 %v555
      %v557 = vlaneseq
      %v558 = vshrl.u32 %v557, 7
      %v559 = vsub.s32 %v556, %v558
      %v560 = vrot.slane %v544, %v559
      %v561 = vcombine.high %v560, %v560
      %562 = vrot.lane.b32.xlu0 %v560, 109
      %v563 = vpop.permute.xlu0 %562
      %564 = vrot.lane.b32.xlu0 %v561, 109
      %v565 = vpop.permute.xlu0 %564
      %vm566 = vcmask 891904
      %v567 = vsel %vm566, %v563, %v565
      %v569 = vsel %vm210, %v551, 0
      %v572 = vsel %vm210, %v552, 0
      %v575 = vsel %vm217, %v567, 0
      %v578 = vsel %vm217, %v565, 0
      %580 = vmatprep.subr.bf16.mxu0 0
      %581 = vmatpush1.bf16.msra.mxu0 0
      %582 = vmatprep.subr.bf16.mxu0 0
      %583 = vmatpush1.bf16.msra.mxu0 0
      %584 = vmatprep.subr.bf16.mxu0 0
      %585 = vmatpush1.bf16.msra.mxu0 0
      %586 = vmatprep.subr.bf16.mxu0 0
      %587 = vmatpush1.bf16.msra.mxu0 0
      %588 = vmatprep.subr.bf16.mxu0 0
      %589 = vmatpush1.bf16.msra.mxu0 0
      %590 = vmatprep.subr.bf16.mxu0 0
      %591 = vmatpush1.bf16.msra.mxu0 0
      %592 = vmatprep.subr.bf16.mxu0 0
      %593 = vmatpush1.bf16.msra.mxu0 0
      %594 = vmatprep.subr.bf16.mxu0 %v578
      %595 = vmatpush1.bf16.msra.mxu0 %v575
      %596 = vmatprep.subr.bf16.mxu0 0
      %597 = vmatpush2.bf16.msra.mxu0 0
      %598 = vmatprep.subr.bf16.mxu0 0
      %599 = vmatpush2.bf16.msra.mxu0 0
      %600 = vmatprep.subr.bf16.mxu0 0
      %601 = vmatpush2.bf16.msra.mxu0 0
      %602 = vmatprep.subr.bf16.mxu0 0
      %603 = vmatpush2.bf16.msra.mxu0 0
      %604 = vmatprep.subr.bf16.mxu0 0
      %605 = vmatpush2.bf16.msra.mxu0 0
      %606 = vmatprep.subr.bf16.mxu0 0
      %607 = vmatpush2.bf16.msra.mxu0 0
      %608 = vmatprep.subr.bf16.mxu0 0
      %609 = vmatpush2.bf16.msra.mxu0 0
      %610 = vmatprep.subr.bf16.mxu0 0
      %611 = vmatpush2.bf16.msra.mxu0 0
      %612 = vmatprep.mubr.bf16.mxu0 0
      %613 = vmatmul.mubr.bf16.gmra.mxu0 %v569
      %v614 = vpop.f32.mrf.mxu0
      %v615 = vadd.f32 0.0, %v614
      %v616 = vpop.f32.mrf.mxu0
      %v617 = vadd.f32 0.0, %v616
      %v618 = vpop.f32.mrf.mxu0
      %v619 = vadd.f32 0.0, %v618
      %v620 = vpop.f32.mrf.mxu0
      %v621 = vadd.f32 0.0, %v620
      %622 = vmatprep.mubr.bf16.mxu0 0
      %623 = vmatmul.mubr.bf16.gmra.mxu0 %v572
      %v624 = vpop.f32.mrf.mxu0
      %v625 = vadd.f32 0.0, %v624
      %v626 = vpop.f32.mrf.mxu0
      %v627 = vadd.f32 0.0, %v626
      %v628 = vpop.f32.mrf.mxu0
      %v629 = vpop.f32.mrf.mxu0
      %630 = vdwg.mxu0
      %v631 = vadd.f32 %v534, %v615
      %v632 = vadd.f32 %v535, %v617
      %v633 = vadd.f32 %v536, %v619
      %v634 = vadd.f32 %v537, %v621
      %v635 = vadd.f32 %v538, %v625
      %v636 = vadd.f32 %v539, %v627
      %s637 = scalar_lea.vmem %s0, 60
      %v638 = vld [vmem:[%s637] sm:$0xf]
      %v639 = vld [vmem:[%s637 + $0x4] sm:$0xf]
      %v640 = vld [vmem:[%s637 + $0x8] sm:$0x1]
      %v641 = vld [vmem:[%s169] sm:$0xf]
      %v645 = vunpack.c.l.b16 %v638
      %v646 = vunpack.c.l.b16 %v639
      %v647 = vunpack.c.l.b16 %v640
      %v648 = vpack.c.b16 %v646, %v645
      %v649 = vpack.c.b16 %v647, %v647
      %v652 = vunpack.c.l.s4 1983009808
      %v653 = vunpack.c.0.s8 %v652
      %v654 = vlaneseq
      %v655 = vshrl.u32 %v654, 7
      %v656 = vsub.s32 %v653, %v655
      %v657 = vrot.slane %v641, %v656
      %v658 = vcombine.high %v657, %v657
      %659 = vrot.lane.b32.xlu0 %v657, 108
      %v660 = vpop.permute.xlu0 %659
      %661 = vrot.lane.b32.xlu0 %v658, 108
      %v662 = vpop.permute.xlu0 %661
      %vm663 = vcmask 883712
      %v664 = vsel %vm663, %v660, %v662
      %v666 = vsel %vm210, %v648, 0
      %v669 = vsel %vm210, %v649, 0
      %v672 = vsel %vm217, %v664, 0
      %v675 = vsel %vm217, %v662, 0
      %677 = vmatprep.subr.bf16.mxu0 0
      %678 = vmatpush1.bf16.msra.mxu0 0
      %679 = vmatprep.subr.bf16.mxu0 0
      %680 = vmatpush1.bf16.msra.mxu0 0
      %681 = vmatprep.subr.bf16.mxu0 0
      %682 = vmatpush1.bf16.msra.mxu0 0
      %683 = vmatprep.subr.bf16.mxu0 0
      %684 = vmatpush1.bf16.msra.mxu0 0
      %685 = vmatprep.subr.bf16.mxu0 0
      %686 = vmatpush1.bf16.msra.mxu0 0
      %687 = vmatprep.subr.bf16.mxu0 0
      %688 = vmatpush1.bf16.msra.mxu0 0
      %689 = vmatprep.subr.bf16.mxu0 0
      %690 = vmatpush1.bf16.msra.mxu0 0
      %691 = vmatprep.subr.bf16.mxu0 %v675
      %692 = vmatpush1.bf16.msra.mxu0 %v672
      %693 = vmatprep.subr.bf16.mxu0 0
      %694 = vmatpush2.bf16.msra.mxu0 0
      %695 = vmatprep.subr.bf16.mxu0 0
      %696 = vmatpush2.bf16.msra.mxu0 0
      %697 = vmatprep.subr.bf16.mxu0 0
      %698 = vmatpush2.bf16.msra.mxu0 0
      %699 = vmatprep.subr.bf16.mxu0 0
      %700 = vmatpush2.bf16.msra.mxu0 0
      %701 = vmatprep.subr.bf16.mxu0 0
      %702 = vmatpush2.bf16.msra.mxu0 0
      %703 = vmatprep.subr.bf16.mxu0 0
      %704 = vmatpush2.bf16.msra.mxu0 0
      %705 = vmatprep.subr.bf16.mxu0 0
      %706 = vmatpush2.bf16.msra.mxu0 0
      %707 = vmatprep.subr.bf16.mxu0 0
      %708 = vmatpush2.bf16.msra.mxu0 0
      %709 = vmatprep.mubr.bf16.mxu0 0
      %710 = vmatmul.mubr.bf16.gmra.mxu0 %v666
      %v711 = vpop.f32.mrf.mxu0
      %v712 = vadd.f32 0.0, %v711
      %v713 = vpop.f32.mrf.mxu0
      %v714 = vadd.f32 0.0, %v713
      %v715 = vpop.f32.mrf.mxu0
      %v716 = vadd.f32 0.0, %v715
      %v717 = vpop.f32.mrf.mxu0
      %v718 = vadd.f32 0.0, %v717
      %719 = vmatprep.mubr.bf16.mxu0 0
      %720 = vmatmul.mubr.bf16.gmra.mxu0 %v669
      %v721 = vpop.f32.mrf.mxu0
      %v722 = vadd.f32 0.0, %v721
      %v723 = vpop.f32.mrf.mxu0
      %v724 = vadd.f32 0.0, %v723
      %v725 = vpop.f32.mrf.mxu0
      %v726 = vpop.f32.mrf.mxu0
      %727 = vdwg.mxu0
      %v728 = vadd.f32 %v631, %v712
      %v729 = vadd.f32 %v632, %v714
      %v730 = vadd.f32 %v633, %v716
      %v731 = vadd.f32 %v634, %v718
      %v732 = vadd.f32 %v635, %v722
      %v733 = vadd.f32 %v636, %v724
      %s734 = scalar_lea.vmem %s0, 72
      %v735 = vld [vmem:[%s734] sm:$0xf]
      %v736 = vld [vmem:[%s734 + $0x4] sm:$0xf]
      %v737 = vld [vmem:[%s734 + $0x8] sm:$0x1]
      %v738 = vld [vmem:[%s169] sm:$0xf]
      %v742 = vunpack.c.l.b16 %v735
      %v743 = vunpack.c.l.b16 %v736
      %v744 = vunpack.c.l.b16 %v737
      %v745 = vpack.c.b16 %v743, %v742
      %v746 = vpack.c.b16 %v744, %v744
      %v749 = vunpack.c.l.s4 1983009808
      %v750 = vunpack.c.0.s8 %v749
      %v751 = vlaneseq
      %v752 = vshrl.u32 %v751, 7
      %v753 = vsub.s32 %v750, %v752
      %v754 = vrot.slane %v738, %v753
      %v755 = vcombine.high %v754, %v754
      %756 = vrot.lane.b32.xlu0 %v754, 92
      %v757 = vpop.permute.xlu0 %756
      %758 = vrot.lane.b32.xlu0 %v755, 92
      %v759 = vpop.permute.xlu0 %758
      %vm760 = vcmask 752640
      %v761 = vsel %vm760, %v757, %v759
      %v763 = vsel %vm210, %v745, 0
      %v766 = vsel %vm210, %v746, 0
      %v769 = vsel %vm217, %v761, 0
      %v772 = vsel %vm217, %v759, 0
      %774 = vmatprep.subr.bf16.mxu0 0
      %775 = vmatpush1.bf16.msra.mxu0 0
      %776 = vmatprep.subr.bf16.mxu0 0
      %777 = vmatpush1.bf16.msra.mxu0 0
      %778 = vmatprep.subr.bf16.mxu0 0
      %779 = vmatpush1.bf16.msra.mxu0 0
      %780 = vmatprep.subr.bf16.mxu0 0
      %781 = vmatpush1.bf16.msra.mxu0 0
      %782 = vmatprep.subr.bf16.mxu0 0
      %783 = vmatpush1.bf16.msra.mxu0 0
      %784 = vmatprep.subr.bf16.mxu0 0
      %785 = vmatpush1.bf16.msra.mxu0 0
      %786 = vmatprep.subr.bf16.mxu0 0
      %787 = vmatpush1.bf16.msra.mxu0 0
      %788 = vmatprep.subr.bf16.mxu0 %v772
      %789 = vmatpush1.bf16.msra.mxu0 %v769
      %790 = vmatprep.subr.bf16.mxu0 0
      %791 = vmatpush2.bf16.msra.mxu0 0
      %792 = vmatprep.subr.bf16.mxu0 0
      %793 = vmatpush2.bf16.msra.mxu0 0
      %794 = vmatprep.subr.bf16.mxu0 0
      %795 = vmatpush2.bf16.msra.mxu0 0
      %796 = vmatprep.subr.bf16.mxu0 0
      %797 = vmatpush2.bf16.msra.mxu0 0
      %798 = vmatprep.subr.bf16.mxu0 0
      %799 = vmatpush2.bf16.msra.mxu0 0
      %800 = vmatprep.subr.bf16.mxu0 0
      %801 = vmatpush2.bf16.msra.mxu0 0
      %802 = vmatprep.subr.bf16.mxu0 0
      %803 = vmatpush2.bf16.msra.mxu0 0
      %804 = vmatprep.subr.bf16.mxu0 0
      %805 = vmatpush2.bf16.msra.mxu0 0
      %806 = vmatprep.mubr.bf16.mxu0 0
      %807 = vmatmul.mubr.bf16.gmra.mxu0 %v763
      %v808 = vpop.f32.mrf.mxu0
      %v809 = vadd.f32 0.0, %v808
      %v810 = vpop.f32.mrf.mxu0
      %v811 = vadd.f32 0.0, %v810
      %v812 = vpop.f32.mrf.mxu0
      %v813 = vadd.f32 0.0, %v812
      %v814 = vpop.f32.mrf.mxu0
      %v815 = vadd.f32 0.0, %v814
      %816 = vmatprep.mubr.bf16.mxu0 0
      %817 = vmatmul.mubr.bf16.gmra.mxu0 %v766
      %v818 = vpop.f32.mrf.mxu0
      %v819 = vadd.f32 0.0, %v818
      %v820 = vpop.f32.mrf.mxu0
      %v821 = vadd.f32 0.0, %v820
      %v822 = vpop.f32.mrf.mxu0
      %v823 = vpop.f32.mrf.mxu0
      %824 = vdwg.mxu0
      %v825 = vadd.f32 %v728, %v809
      %v826 = vadd.f32 %v729, %v811
      %v827 = vadd.f32 %v730, %v813
      %v828 = vadd.f32 %v731, %v815
      %v829 = vadd.f32 %v732, %v819
      %v830 = vadd.f32 %v733, %v821
      %s831 = scalar_lea.vmem %s0, 84
      %v832 = vld [vmem:[%s831] sm:$0xf]
      %v833 = vld [vmem:[%s831 + $0x4] sm:$0xf]
      %v834 = vld [vmem:[%s831 + $0x8] sm:$0x1]
      %v835 = vld [vmem:[%s169] sm:$0xf]
      %v839 = vunpack.c.l.b16 %v832
      %v840 = vunpack.c.l.b16 %v833
      %v841 = vunpack.c.l.b16 %v834
      %v842 = vpack.c.b16 %v840, %v839
      %v843 = vpack.c.b16 %v841, %v841
      %v846 = vunpack.c.l.s4 1983009808
      %v847 = vunpack.c.0.s8 %v846
      %v848 = vlaneseq
      %v849 = vshrl.u32 %v848, 7
      %v850 = vsub.s32 %v847, %v849
      %v851 = vrot.slane %v835, %v850
      %v852 = vcombine.high %v851, %v851
      %853 = vrot.lane.b32.xlu0 %v851, 91
      %v854 = vpop.permute.xlu0 %853
      %855 = vrot.lane.b32.xlu0 %v852, 91
      %v856 = vpop.permute.xlu0 %855
      %vm857 = vcmask 744448
      %v858 = vsel %vm857, %v854, %v856
      %v860 = vsel %vm210, %v842, 0
      %v863 = vsel %vm210, %v843, 0
      %v866 = vsel %vm217, %v858, 0
      %v869 = vsel %vm217, %v856, 0
      %871 = vmatprep.subr.bf16.mxu0 0
      %872 = vmatpush1.bf16.msra.mxu0 0
      %873 = vmatprep.subr.bf16.mxu0 0
      %874 = vmatpush1.bf16.msra.mxu0 0
      %875 = vmatprep.subr.bf16.mxu0 0
      %876 = vmatpush1.bf16.msra.mxu0 0
      %877 = vmatprep.subr.bf16.mxu0 0
      %878 = vmatpush1.bf16.msra.mxu0 0
      %879 = vmatprep.subr.bf16.mxu0 0
      %880 = vmatpush1.bf16.msra.mxu0 0
      %881 = vmatprep.subr.bf16.mxu0 0
      %882 = vmatpush1.bf16.msra.mxu0 0
      %883 = vmatprep.subr.bf16.mxu0 0
      %884 = vmatpush1.bf16.msra.mxu0 0
      %885 = vmatprep.subr.bf16.mxu0 %v869
      %886 = vmatpush1.bf16.msra.mxu0 %v866
      %887 = vmatprep.subr.bf16.mxu0 0
      %888 = vmatpush2.bf16.msra.mxu0 0
      %889 = vmatprep.subr.bf16.mxu0 0
      %890 = vmatpush2.bf16.msra.mxu0 0
      %891 = vmatprep.subr.bf16.mxu0 0
      %892 = vmatpush2.bf16.msra.mxu0 0
      %893 = vmatprep.subr.bf16.mxu0 0
      %894 = vmatpush2.bf16.msra.mxu0 0
      %895 = vmatprep.subr.bf16.mxu0 0
      %896 = vmatpush2.bf16.msra.mxu0 0
      %897 = vmatprep.subr.bf16.mxu0 0
      %898 = vmatpush2.bf16.msra.mxu0 0
      %899 = vmatprep.subr.bf16.mxu0 0
      %900 = vmatpush2.bf16.msra.mxu0 0
      %901 = vmatprep.subr.bf16.mxu0 0
      %902 = vmatpush2.bf16.msra.mxu0 0
      %903 = vmatprep.mubr.bf16.mxu0 0
      %904 = vmatmul.mubr.bf16.gmra.mxu0 %v860
      %v905 = vpop.f32.mrf.mxu0
      %v906 = vadd.f32 0.0, %v905
      %v907 = vpop.f32.mrf.mxu0
      %v908 = vadd.f32 0.0, %v907
      %v909 = vpop.f32.mrf.mxu0
      %v910 = vadd.f32 0.0, %v909
      %v911 = vpop.f32.mrf.mxu0
      %v912 = vadd.f32 0.0, %v911
      %913 = vmatprep.mubr.bf16.mxu0 0
      %914 = vmatmul.mubr.bf16.gmra.mxu0 %v863
      %v915 = vpop.f32.mrf.mxu0
      %v916 = vadd.f32 0.0, %v915
      %v917 = vpop.f32.mrf.mxu0
      %v918 = vadd.f32 0.0, %v917
      %v919 = vpop.f32.mrf.mxu0
      %v920 = vpop.f32.mrf.mxu0
      %921 = vdwg.mxu0
      %v922 = vadd.f32 %v825, %v906
      %v923 = vadd.f32 %v826, %v908
      %v924 = vadd.f32 %v827, %v910
      %v925 = vadd.f32 %v828, %v912
      %v926 = vadd.f32 %v829, %v916
      %v927 = vadd.f32 %v830, %v918
      %s928 = scalar_lea.vmem %s0, 96
      %v929 = vld [vmem:[%s928] sm:$0xf]
      %v930 = vld [vmem:[%s928 + $0x4] sm:$0xf]
      %v931 = vld [vmem:[%s928 + $0x8] sm:$0x1]
      %v932 = vld [vmem:[%s169] sm:$0xf]
      %v936 = vunpack.c.l.b16 %v929
      %v937 = vunpack.c.l.b16 %v930
      %v938 = vunpack.c.l.b16 %v931
      %v939 = vpack.c.b16 %v937, %v936
      %v940 = vpack.c.b16 %v938, %v938
      %v943 = vunpack.c.l.s4 1983009808
      %v944 = vunpack.c.0.s8 %v943
      %v945 = vlaneseq
      %v946 = vshrl.u32 %v945, 7
      %v947 = vsub.s32 %v944, %v946
      %v948 = vrot.slane %v932, %v947
      %v949 = vcombine.high %v948, %v948
      %950 = vrot.lane.b32.xlu0 %v948, 90
      %v951 = vpop.permute.xlu0 %950
      %952 = vrot.lane.b32.xlu0 %v949, 90
      %v953 = vpop.permute.xlu0 %952
      %vm954 = vcmask 736256
      %v955 = vsel %vm954, %v951, %v953
      %v957 = vsel %vm210, %v939, 0
      %v960 = vsel %vm210, %v940, 0
      %v963 = vsel %vm217, %v955, 0
      %v966 = vsel %vm217, %v953, 0
      %968 = vmatprep.subr.bf16.mxu0 0
      %969 = vmatpush1.bf16.msra.mxu0 0
      %970 = vmatprep.subr.bf16.mxu0 0
      %971 = vmatpush1.bf16.msra.mxu0 0
      %972 = vmatprep.subr.bf16.mxu0 0
      %973 = vmatpush1.bf16.msra.mxu0 0
      %974 = vmatprep.subr.bf16.mxu0 0
      %975 = vmatpush1.bf16.msra.mxu0 0
      %976 = vmatprep.subr.bf16.mxu0 0
      %977 = vmatpush1.bf16.msra.mxu0 0
      %978 = vmatprep.subr.bf16.mxu0 0
      %979 = vmatpush1.bf16.msra.mxu0 0
      %980 = vmatprep.subr.bf16.mxu0 0
      %981 = vmatpush1.bf16.msra.mxu0 0
      %982 = vmatprep.subr.bf16.mxu0 %v966
      %983 = vmatpush1.bf16.msra.mxu0 %v963
      %984 = vmatprep.subr.bf16.mxu0 0
      %985 = vmatpush2.bf16.msra.mxu0 0
      %986 = vmatprep.subr.bf16.mxu0 0
      %987 = vmatpush2.bf16.msra.mxu0 0
      %988 = vmatprep.subr.bf16.mxu0 0
      %989 = vmatpush2.bf16.msra.mxu0 0
      %990 = vmatprep.subr.bf16.mxu0 0
      %991 = vmatpush2.bf16.msra.mxu0 0
      %992 = vmatprep.subr.bf16.mxu0 0
      %993 = vmatpush2.bf16.msra.mxu0 0
      %994 = vmatprep.subr.bf16.mxu0 0
      %995 = vmatpush2.bf16.msra.mxu0 0
      %996 = vmatprep.subr.bf16.mxu0 0
      %997 = vmatpush2.bf16.msra.mxu0 0
      %998 = vmatprep.subr.bf16.mxu0 0
      %999 = vmatpush2.bf16.msra.mxu0 0
      %1000 = vmatprep.mubr.bf16.mxu0 0
      %1001 = vmatmul.mubr.bf16.gmra.mxu0 %v957
      %v1002 = vpop.f32.mrf.mxu0
      %v1003 = vadd.f32 0.0, %v1002
      %v1004 = vpop.f32.mrf.mxu0
      %v1005 = vadd.f32 0.0, %v1004
      %v1006 = vpop.f32.mrf.mxu0
      %v1007 = vadd.f32 0.0, %v1006
      %v1008 = vpop.f32.mrf.mxu0
      %v1009 = vadd.f32 0.0, %v1008
      %1010 = vmatprep.mubr.bf16.mxu0 0
      %1011 = vmatmul.mubr.bf16.gmra.mxu0 %v960
      %v1012 = vpop.f32.mrf.mxu0
      %v1013 = vadd.f32 0.0, %v1012
      %v1014 = vpop.f32.mrf.mxu0
      %v1015 = vadd.f32 0.0, %v1014
      %v1016 = vpop.f32.mrf.mxu0
      %v1017 = vpop.f32.mrf.mxu0
      %1018 = vdwg.mxu0
      %v1019 = vadd.f32 %v922, %v1003
      %v1020 = vadd.f32 %v923, %v1005
      %v1021 = vadd.f32 %v924, %v1007
      %v1022 = vadd.f32 %v925, %v1009
      %v1023 = vadd.f32 %v926, %v1013
      %v1024 = vadd.f32 %v927, %v1015
      %v1025 = vlaneseq
      %v1026 = vand.u32 %v1025, 127
      %v1027 = vadd.s32 %v1026, 128
      %vm1028 = vcmp.lt.s32.totalorder %v1026, 0
      %v1029 = vsub.s32 0, %v1026
      %v1030 = vsel %vm1028, %v1029, %v1026
      %v1031 = vmul.u32.u64.compose %v1030, 3817748708
      %v1032 = vextract.low.u32 %v1031
      %v1033 = vextract.high.u32 %v1031
      %v1034 = vshrl.u32 %v1033, 4
      %v1035 = vmul.u32 %v1034, 18
      %v1036 = vsub.s32 %v1030, %v1035
      %v1037 = vsub.s32 0, %v1036
      %v1038 = vsel %vm1028, %v1037, %v1036
      %vm1039 = vcmp.lt.s32.totalorder %v1027, 0
      %v1040 = vsub.s32 0, %v1027
      %v1041 = vsel %vm1039, %v1040, %v1027
      %v1042 = vmul.u32.u64.compose %v1041, 3817748708
      %v1043 = vextract.low.u32 %v1042
      %v1044 = vextract.high.u32 %v1042
      %v1045 = vshrl.u32 %v1044, 4
      %v1046 = vmul.u32 %v1045, 18
      %v1047 = vsub.s32 %v1041, %v1046
      %v1048 = vsub.s32 0, %v1047
      %v1049 = vsel %vm1039, %v1048, %v1047
      %vm1050 = vcmp.ne.s32.totalorder %v1038, 0
      %vm1051 = vcmp.ne.s32.totalorder %v1049, 0
      %vm1052 = vcmp.lt.s32.totalorder %v1038, 0
      %vm1053 = vcmp.lt.s32.totalorder %v1049, 0
      %vm1054 = vmand %vm1052, %vm1050
      %vm1055 = vmand %vm1053, %vm1051
      %v1056 = vadd.s32 %v1038, 18
      %v1057 = vadd.s32 %v1049, 18
      %v1058 = vsel %vm1054, %v1056, %v1038
      %v1059 = vsel %vm1055, %v1057, %v1049
      %vm1060 = vcmp.lt.s32.totalorder %v1058, 16
      %vm1061 = vcmp.lt.s32.totalorder %v1059, 16
      %v1062 = vsel %vm1060, %v1019, 0.0
      %v1063 = vsel %vm1061, %v1020, 0.0
      %v1064 = vsel %vm1060, %v1021, 0.0
      %v1065 = vsel %vm1061, %v1022, 0.0
      %v1066 = vsel %vm1060, %v1023, 0.0
      %v1067 = vsel %vm1061, %v1024, 0.0
      %vm1068 = vcmask 130048
      %v1069 = vsel %vm1068, %v1063, 0.0
      %v1070 = vadd.f32 %v1062, %v1069
      %1071 = vadd.xlane.f32.xlu0 %v1070
      %v1072 = vpop.xlane.xlu0 %1071
      %v1073 = vsel %vm1068, %v1065, 0.0
      %v1074 = vadd.f32 %v1064, %v1073
      %1075 = vadd.xlane.f32.xlu0 %v1074
      %v1076 = vpop.xlane.xlu0 %1075
      %v1077 = vsel %vm217, %v1066, 0.0
      %vm1078 = vcmask 123904
      %v1079 = vsel %vm1078, %v1067, 0.0
      %v1080 = vadd.f32 %v1077, %v1079
      %1081 = vadd.xlane.f32.xlu0 %v1080
      %v1082 = vpop.xlane.xlu0 %1081
      %v1083 = vmul.f32 %v1062, %v1062
      %v1084 = vmul.f32 %v1063, %v1063
      %v1085 = vmul.f32 %v1064, %v1064
      %v1086 = vmul.f32 %v1065, %v1065
      %v1087 = vmul.f32 %v1066, %v1066
      %v1088 = vmul.f32 %v1067, %v1067
      %v1089 = vsel %vm1068, %v1084, 0.0
      %v1090 = vadd.f32 %v1083, %v1089
      %1091 = vadd.xlane.f32.xlu0 %v1090
      %v1092 = vpop.xlane.xlu0 %1091
      %v1093 = vsel %vm1068, %v1086, 0.0
      %v1094 = vadd.f32 %v1085, %v1093
      %1095 = vadd.xlane.f32.xlu0 %v1094
      %v1096 = vpop.xlane.xlu0 %1095
      %v1097 = vsel %vm217, %v1087, 0.0
      %v1098 = vsel %vm1078, %v1088, 0.0
      %v1099 = vadd.f32 %v1097, %v1098
      %1100 = vadd.xlane.f32.xlu0 %v1099
      %v1101 = vpop.xlane.xlu0 %1100
      %v1105 = vlaneseq
      %v1106 = vshrl.u32 %v1105, 7
      %v1107 = vsub.s32 %v1026, %v1106
      %v1108 = vrot.slane %v1072, %v1107
      %v1109 = vadd.s32 %v1026, 4294967288
      %v1110 = vlaneseq
      %v1111 = vshrl.u32 %v1110, 7
      %v1112 = vsub.s32 %v1109, %v1111
      %v1113 = vrot.slane %v1076, %v1112
      %vm1114 = vcmask 130112
      %v1115 = vsel %vm1114, %v1113, %v1108
      %v1116 = vadd.s32 %v1026, 4294967280
      %v1117 = vlaneseq
      %v1118 = vshrl.u32 %v1117, 7
      %v1119 = vsub.s32 %v1116, %v1118
      %v1120 = vrot.slane %v1082, %v1119
      %vm1121 = vcmask 195712
      %v1122 = vsel %vm1121, %v1120, %v1115
      %v1127 = vlaneseq
      %v1128 = vshrl.u32 %v1127, 7
      %v1129 = vsub.s32 %v1026, %v1128
      %v1130 = vrot.slane %v1092, %v1129
      %v1131 = vlaneseq
      %v1132 = vshrl.u32 %v1131, 7
      %v1133 = vsub.s32 %v1109, %v1132
      %v1134 = vrot.slane %v1096, %v1133
      %v1135 = vsel %vm1114, %v1134, %v1130
      %v1136 = vlaneseq
      %v1137 = vshrl.u32 %v1136, 7
      %v1138 = vsub.s32 %v1116, %v1137
      %v1139 = vrot.slane %v1101, %v1138
      %v1140 = vsel %vm1121, %v1139, %v1135
      %vm1142 = vcmask 1040384
      %v1143 = vsel %vm1142, %v1122, %v1140
      %vm1144 = vcmask 140288
      %1145 = vst.msk [vmem:[%s177] sm:$0x3] %vm1144, %v1143
      %p1146 = scmp.lt.s32.totalorder %s17, 1
      %s1147 = scalar_select %p1146, %s17, 1
      %p1148 = scmp.lt.s32.totalorder %s18, 1
      %s1149 = scalar_select %p1148, %s18, 1
      %s1150 = smul.addr %s1147, 2
      %s1151 = sadd.s32 %s1149, %s1150
      %s1152 = smul.addr %s1151, 2
      %s1153 = scalar_lea.vmem %s2, %s1152
      // Predicated region
      $region29: #{fem_forward.2} parent=27 // pred_check
        %p1154 = pneg %p94
      $region30: #{fem_forward.2} parent=27 // pred_check_branch
        %1156 = sbr.rel (%p1154) target = $region32
      $region31: #{fem_forward.2} parent=27 // pred_region
        _
      $region32: #{fem_forward.2} parent=27 // pred_fallthru
        _
    $region28: #{fem_forward.2} parent=5 // pred_fallthru
      _
    %p1157 = scmp.le.s32.totalorder 2, %s8
    // Predicated region
    $region33: #{fem_forward.2} parent=5 // pred_check
      %p1158 = pneg %p1157
    $region34: #{fem_forward.2} parent=5 // pred_check_branch
      %1160 = sbr.rel (%p1158) target = $region36
    $region35: #{fem_forward.2} parent=5 // pred_region
      %s1161 = ssub.s32 %s8, 2
      // Predicated region
      $region37: #{fem_forward.2} parent=35 // pred_check
        %p1162 = pneg %p100
      $region38: #{fem_forward.2} parent=35 // pred_check_branch
        %1164 = sbr.rel (%p1162) target = $region40
      $region39: #{fem_forward.2} parent=35 // pred_region
        %p1165 = scmp.lt.s32.totalorder %s19, 1
        %s1166 = scalar_select %p1165, %s19, 1
        %p1167 = scmp.lt.s32.totalorder %s20, 1
        %s1168 = scalar_select %p1167, %s20, 1
        %s1169 = smul.addr %s1166, 2
        %s1170 = sadd.s32 %s1168, %s1169
        %s1171 = smul.addr %s1170, 2
        %s1172 = scalar_lea.vmem %s2, %s1171
      $region40: #{fem_forward.2} parent=35 // pred_fallthru
        _
    $region36: #{fem_forward.2} parent=5 // pred_fallthru
      _
  $region6: #{fem_forward.2} parent=0 // loop_footer
    %s12 = sadd.s32 1, %s8
  $region7: #{fem_forward.2} parent=0 // loop_footer_branch
    %7 = sbr.rel target = $region3
  $region8: #{fem_forward.2} parent=0 // loop_exit
    _

// kernel: fem_forward.3
$region0: #{fem_forward.3}
  #allocation0 [shape = 'u32[]', space=smem, size = 0x4, offset = 0x4, fixed_abs, tag = 'smem constant byte address 0x4 - core index']
  #allocation1 [shape = 'u32[144,128]{1,0:T(1,128)}', space=vmem, size = 0x12000, scoped, tag = 'internal scratch']
  %s0 = inlined_call_operand.vmem [shape: f32[18,1], index: 0, kind: input, shape index: {}]
  %s1 = inlined_call_operand.vmem [shape: bf16[9,18,4], index: 1, kind: input, shape index: {}]
  %s2 = inlined_call_operand.vmem [shape: bf16[2,2,4,182], index: 2, kind: input, shape index: {}]
  %s3 = inlined_call_operand.vmem [shape: bf16[2,2,2,182], index: 3, kind: input, shape index: {}]
  %s4 = inlined_call_operand.vmem [shape: f32[2,2,4,144], index: 4, kind: output, shape index: {}]
  %s5 = sld [smem:[#allocation0]]
  $region49: #{fem_forward.3} parent=0
    _
  %s7 = ssub.s32 1, %s5
  %s8 = scalar_select 0, %s7, %s5
  loop: start=0, step=1, limit=6
  $region2: #{fem_forward.3} parent=0 // loop_pre_header
    _
  $region3: #{fem_forward.3} parent=0 // loop_header
    %s10 = sphi 0, %s14
    %p11 = scmp.ge.s32.totalorder %s10, 6
    %s17 = sphi 0, %s29
    %s18 = sphi 0, %s25
    %s19 = sphi 0, %s17
    %s20 = sphi 0, %s18
    %s21 = sphi 0, %s19
    %s22 = sphi 0, %s20
    %s30 = sphi 0, %s30
    %s32 = sphi 0, %s30
    %s33 = sphi 0, %s32
    %s47 = sphi 0, %s33
    %s51 = sphi 0, %s51
    %s53 = sphi 0, %s51
    %s54 = sphi 0, %s53
    %s68 = sphi 0, %s54
    %s76 = sphi 0, %s78
    %s79 = sphi 0, %s76
    %s80 = sphi 0, %s79
    %s96 = sphi 0, %s80
    %s104 = sphi 0, %s106
    %s107 = sphi 0, %s104
    %s108 = sphi 0, %s107
    %s124 = sphi 0, %s108
    %s132 = sphi 0, %s134
    %s135 = sphi 0, %s132
    %s136 = sphi 0, %s135
    %s152 = sphi 0, %s136
  $region4: #{fem_forward.3} parent=0 // loop_header_branch
    %13 = sbr.rel (%p11) target = $region8
  $region5: #{fem_forward.3} parent=0 // loop_body
    %s15 = ssub.s32 %s10, 1
    %s16 = ssub.s32 %s10, 2
    %s23 = sadd.s32 1, %s18
    %p24 = scmp.ge.s32.totalorder %s23, 2
    %s25 = scalar_select %p24, 0, %s23
    %s26 = sadd.s32 1, %s17
    %s27 = scalar_select %p24, %s26, %s17
    %p28 = scmp.ge.s32.totalorder %s27, 2
    %s29 = scalar_select %p28, 0, %s27
    %s31 = sadd.s32 %s30, 1
    %p34 = scmp.eq.s32.totalorder %s10, 3
    %p35 = scmp.ne.s32.totalorder %s30, %s32
    %p36 = scmp.eq.s32.totalorder %s10, 0
    %p37 = por %p35, %p36
    %p38 = scmp.ne.s32.totalorder %s30, %s32
    %p39 = scmp.eq.s32.totalorder %s15, 3
    %p40 = por %p38, %p39
    %p41 = scmp.ne.s32.totalorder %s32, %s33
    %p42 = scmp.eq.s32.totalorder %s15, 0
    %p43 = por %p41, %p42
    %p44 = scmp.ne.s32.totalorder %s32, %s33
    %p45 = scmp.eq.s32.totalorder %s16, 3
    %p46 = por %p44, %p45
    %p48 = scmp.ne.s32.totalorder %s33, %s47
    %p49 = scmp.eq.s32.totalorder %s16, 0
    %p50 = por %p48, %p49
    %s52 = sadd.s32 %s51, 1
    %p55 = scmp.eq.s32.totalorder %s10, 3
    %p56 = scmp.ne.s32.totalorder %s51, %s53
    %p57 = scmp.eq.s32.totalorder %s10, 0
    %p58 = por %p56, %p57
    %p59 = scmp.ne.s32.totalorder %s51, %s53
    %p60 = scmp.eq.s32.totalorder %s15, 3
    %p61 = por %p59, %p60
    %p62 = scmp.ne.s32.totalorder %s53, %s54
    %p63 = scmp.eq.s32.totalorder %s15, 0
    %p64 = por %p62, %p63
    %p65 = scmp.ne.s32.totalorder %s53, %s54
    %p66 = scmp.eq.s32.totalorder %s16, 3
    %p67 = por %p65, %p66
    %p69 = scmp.ne.s32.totalorder %s54, %s68
    %p70 = scmp.eq.s32.totalorder %s16, 0
    %p71 = por %p69, %p70
    %s72 = ssub.s32 %s17, %s29
    %s73 = ssub.s32 %s18, %s25
    %s74 = sor.u32 %s72, %s73
    %p75 = scmp.eq.s32.totalorder %s74, 0
    %s77 = sadd.s32 %s76, 1
    %s78 = scalar_select %p75, %s76, %s77
    %p81 = pneg %p75
    %p82 = scmp.eq.s32.totalorder %s10, 3
    %p83 = por %p81, %p82
    %p84 = scmp.ne.s32.totalorder %s76, %s79
    %p85 = scmp.eq.s32.totalorder %s10, 0
    %p86 = por %p84, %p85
    %p87 = scmp.ne.s32.totalorder %s76, %s79
    %p88 = scmp.eq.s32.totalorder %s15, 3
    %p89 = por %p87, %p88
    %p90 = scmp.ne.s32.totalorder %s79, %s80
    %p91 = scmp.eq.s32.totalorder %s15, 0
    %p92 = por %p90, %p91
    %p93 = scmp.ne.s32.totalorder %s79, %s80
    %p94 = scmp.eq.s32.totalorder %s16, 3
    %p95 = por %p93, %p94
    %p97 = scmp.ne.s32.totalorder %s80, %s96
    %p98 = scmp.eq.s32.totalorder %s16, 0
    %p99 = por %p97, %p98
    %s100 = ssub.s32 %s17, %s29
    %s101 = ssub.s32 %s18, %s25
    %s102 = sor.u32 %s100, %s101
    %p103 = scmp.eq.s32.totalorder %s102, 0
    %s105 = sadd.s32 %s104, 1
    %s106 = scalar_select %p103, %s104, %s105
    %p109 = pneg %p103
    %p110 = scmp.eq.s32.totalorder %s10, 3
    %p111 = por %p109, %p110
    %p112 = scmp.ne.s32.totalorder %s104, %s107
    %p113 = scmp.eq.s32.totalorder %s10, 0
    %p114 = por %p112, %p113
    %p115 = scmp.ne.s32.totalorder %s104, %s107
    %p116 = scmp.eq.s32.totalorder %s15, 3
    %p117 = por %p115, %p116
    %p118 = scmp.ne.s32.totalorder %s107, %s108
    %p119 = scmp.eq.s32.totalorder %s15, 0
    %p120 = por %p118, %p119
    %p121 = scmp.ne.s32.totalorder %s107, %s108
    %p122 = scmp.eq.s32.totalorder %s16, 3
    %p123 = por %p121, %p122
    %p125 = scmp.ne.s32.totalorder %s108, %s124
    %p126 = scmp.eq.s32.totalorder %s16, 0
    %p127 = por %p125, %p126
    %s128 = ssub.s32 %s17, %s29
    %s129 = ssub.s32 %s18, %s25
    %s130 = sor.u32 %s128, %s129
    %p131 = scmp.eq.s32.totalorder %s130, 0
    %s133 = sadd.s32 %s132, 1
    %s134 = scalar_select %p131, %s132, %s133
    %p137 = pneg %p131
    %p138 = scmp.eq.s32.totalorder %s10, 3
    %p139 = por %p137, %p138
    %p140 = scmp.ne.s32.totalorder %s132, %s135
    %p141 = scmp.eq.s32.totalorder %s10, 0
    %p142 = por %p140, %p141
    %p143 = scmp.ne.s32.totalorder %s132, %s135
    %p144 = scmp.eq.s32.totalorder %s15, 3
    %p145 = por %p143, %p144
    %p146 = scmp.ne.s32.totalorder %s135, %s136
    %p147 = scmp.eq.s32.totalorder %s15, 0
    %p148 = por %p146, %p147
    %p149 = scmp.ne.s32.totalorder %s135, %s136
    %p150 = scmp.eq.s32.totalorder %s16, 3
    %p151 = por %p149, %p150
    %p153 = scmp.ne.s32.totalorder %s136, %s152
    %p154 = scmp.eq.s32.totalorder %s16, 0
    %p155 = por %p153, %p154
    %p156 = scmp.le.s32.totalorder 1, %s10
    %p157 = scmp.lt.s32.totalorder %s10, 5
    %p158 = pnand %p156, %p157
    %p159 = pneg %p158
    // Predicated region
    $region9: #{fem_forward.3} parent=5 // pred_check
      _
    $region10: #{fem_forward.3} parent=5 // pred_check_branch
      %161 = sbr.rel (%p158) target = $region12
    $region11: #{fem_forward.3} parent=5 // pred_region
      %s162 = ssub.s32 %s10, 1
      // Predicated region
      $region13: #{fem_forward.3} parent=11 // pred_check
        %p163 = pneg %p43
      $region14: #{fem_forward.3} parent=11 // pred_check_branch
        %165 = sbr.rel (%p163) target = $region16
      $region15: #{fem_forward.3} parent=11 // pred_region
        _
      $region16: #{fem_forward.3} parent=11 // pred_fallthru
        _
      // Predicated region
      $region17: #{fem_forward.3} parent=11 // pred_check
        %p166 = pneg %p64
      $region18: #{fem_forward.3} parent=11 // pred_check_branch
        %168 = sbr.rel (%p166) target = $region20
      $region19: #{fem_forward.3} parent=11 // pred_region
        _
      $region20: #{fem_forward.3} parent=11 // pred_fallthru
        _
    $region12: #{fem_forward.3} parent=5 // pred_fallthru
      _
    %p169 = scmp.lt.s32.totalorder %s10, 4
    // Predicated region
    $region21: #{fem_forward.3} parent=5 // pred_check
      %p170 = pneg %p169
    $region22: #{fem_forward.3} parent=5 // pred_check_branch
      %172 = sbr.rel (%p170) target = $region24
    $region23: #{fem_forward.3} parent=5 // pred_region
      // Predicated region
      $region25: #{fem_forward.3} parent=23 // pred_check
        %p173 = pneg %p86
      $region26: #{fem_forward.3} parent=23 // pred_check_branch
        %175 = sbr.rel (%p173) target = $region28
      $region27: #{fem_forward.3} parent=23 // pred_region
        %p176 = scmp.lt.s32.totalorder %s17, 1
        %s177 = scalar_select %p176, %s17, 1
        %p178 = scmp.lt.s32.totalorder %s18, 1
        %s179 = scalar_select %p178, %s18, 1
        %s180 = smul.addr %s179, 2
        %s181 = smul.addr %s177, 4
        %s182 = sadd.s32 %s180, %s181
        %s183 = smul.addr %s182, 2
        %s184 = scalar_lea.vmem %s2, %s183
      $region28: #{fem_forward.3} parent=23 // pred_fallthru
        _
      // Predicated region
      $region29: #{fem_forward.3} parent=23 // pred_check
        %p185 = pneg %p114
      $region30: #{fem_forward.3} parent=23 // pred_check_branch
        %187 = sbr.rel (%p185) target = $region32
      $region31: #{fem_forward.3} parent=23 // pred_region
        %p188 = scmp.lt.s32.totalorder %s17, 1
        %s189 = scalar_select %p188, %s17, 1
        %p190 = scmp.lt.s32.totalorder %s18, 1
        %s191 = scalar_select %p190, %s18, 1
        %s192 = smul.addr %s191, 2
        %s193 = smul.addr %s189, 4
        %s194 = sadd.s32 %s192, %s193
        %s195 = scalar_lea.vmem %s3, %s194
      $region32: #{fem_forward.3} parent=23 // pred_fallthru
        _
    $region24: #{fem_forward.3} parent=5 // pred_fallthru
      _
    %p196 = scmp.le.s32.totalorder 1, %s10
    %p197 = scmp.lt.s32.totalorder %s10, 5
    %p198 = pnand %p196, %p197
    %p199 = pneg %p198
    // Predicated region
    $region33: #{fem_forward.3} parent=5 // pred_check
      _
    $region34: #{fem_forward.3} parent=5 // pred_check_branch
      %201 = sbr.rel (%p198) target = $region36
    $region35: #{fem_forward.3} parent=5 // pred_region
      %s202 = ssub.s32 %s10, 1
      %p203 = pneg %p43
      %p204 = pneg %p40
      %p205 = pneg %p64
      %p206 = pneg %p61
      %p207 = scmp.lt.s32.totalorder %s19, 1
      %s208 = scalar_select %p207, %s19, 1
      %p209 = scmp.lt.s32.totalorder %s20, 1
      %s210 = scalar_select %p209, %s20, 1
      %s211 = smul.addr %s210, 2
      %s212 = smul.addr %s208, 4
      %s213 = sadd.s32 %s211, %s212
      %s214 = smul.addr %s213, 2
      %s215 = scalar_lea.vmem %s2, %s214
      %p216 = pneg %p92
      %p217 = pneg %p89
      %p218 = scmp.lt.s32.totalorder %s19, 1
      %s219 = scalar_select %p218, %s19, 1
      %p220 = scmp.lt.s32.totalorder %s20, 1
      %s221 = scalar_select %p220, %s20, 1
      %s222 = smul.addr %s221, 2
      %s223 = smul.addr %s219, 4
      %s224 = sadd.s32 %s222, %s223
      %s225 = scalar_lea.vmem %s3, %s224
      %p226 = pneg %p120
      %p227 = pneg %p117
      %p228 = pneg %p148
      %p229 = pneg %p145
      %p230 = scmp.lt.s32.totalorder %s19, 1
      %s231 = scalar_select %p230, %s19, 1
      %p232 = scmp.lt.s32.totalorder %s20, 1
      %s233 = scalar_select %p232, %s20, 1
      %s234 = smul.addr %s233, 2
      %s235 = smul.addr %s231, 4
      %s236 = sadd.s32 %s234, %s235
      %s237 = smul.addr %s236, 4
      %s238 = scalar_lea.vmem %s4, %s237
      %p239 = scmp.lt.s32.totalorder %s19, 1
      %s240 = scalar_select %p239, %s19, 1
      %p241 = scmp.lt.s32.totalorder %s20, 1
      %s242 = scalar_select %p241, %s20, 1
      %s243 = smul.addr %s242, 2
      %s244 = smul.addr %s240, 4
      %s245 = sadd.s32 %s243, %s244
      %s246 = smul.addr %s245, 2
      %s247 = scalar_lea.vmem %s2, %s246
      %p248 = scmp.lt.s32.totalorder %s19, 1
      %s249 = scalar_select %p248, %s19, 1
      %p250 = scmp.lt.s32.totalorder %s20, 1
      %s251 = scalar_select %p250, %s20, 1
      %s252 = smul.addr %s251, 2
      %s253 = smul.addr %s249, 4
      %s254 = sadd.s32 %s252, %s253
      %s255 = scalar_lea.vmem %s3, %s254
      %p256 = scmp.lt.s32.totalorder %s19, 1
      %s257 = scalar_select %p256, %s19, 1
      %p258 = scmp.lt.s32.totalorder %s20, 1
      %s259 = scalar_select %p258, %s20, 1
      %s260 = smul.addr %s259, 2
      %s261 = smul.addr %s257, 4
      %s262 = sadd.s32 %s260, %s261
      %s263 = smul.addr %s262, 4
      %s264 = scalar_lea.vmem %s4, %s263
      %v266 = vld [vmem:[%s1] sm:$0xf]
      %v267 = vld [vmem:[%s1 + $0x4] sm:$0xf]
      %v268 = vld [vmem:[%s1 + $0x8] sm:$0x1]
      %v269 = vld [vmem:[%s247] sm:$0xf]
      %s270 = scalar_lea.vmem %s1, 12
      %v271 = vld [vmem:[%s270] sm:$0xf]
      %v272 = vld [vmem:[%s270 + $0x4] sm:$0xf]
      %v273 = vld [vmem:[%s270 + $0x8] sm:$0x1]
      %v277 = vunpack.c.l.b16 %v271
      %v278 = vunpack.c.l.b16 %v272
      %v279 = vunpack.c.l.b16 %v273
      %v280 = vpack.c.b16 %v278, %v277
      %v281 = vpack.c.b16 %v279, %v279
      %v284 = vunpack.c.l.s4 1983009808
      %v285 = vunpack.c.0.s8 %v284
      %v286 = vlaneseq
      %v287 = vshrl.u32 %v286, 7
      %v288 = vsub.s32 %v285, %v287
      %v289 = vrot.slane %v269, %v288
      %v290 = vcombine.high %v289, %v289
      %291 = vrot.lane.b32.xlu0 %v289, 127
      %v292 = vpop.permute.xlu0 %291
      %293 = vrot.lane.b32.xlu0 %v290, 127
      %v294 = vpop.permute.xlu0 %293
      %vm295 = vcmask 1039360
      %v296 = vsel %vm295, %v292, %v294
      %vm297 = vcmask 31744
      %v299 = vsel %vm297, %v280, 0
      %v302 = vsel %vm297, %v281, 0
      %vm304 = vcmask 1041408
      %v306 = vsel %vm304, %v296, 0
      %v309 = vsel %vm304, %v294, 0
      %311 = vmatprep.subr.bf16.mxu0 0
      %312 = vmatpush1.bf16.msra.mxu0 0
      %313 = vmatprep.subr.bf16.mxu0 0
      %314 = vmatpush1.bf16.msra.mxu0 0
      %315 = vmatprep.subr.bf16.mxu0 0
      %316 = vmatpush1.bf16.msra.mxu0 0
      %317 = vmatprep.subr.bf16.mxu0 0
      %318 = vmatpush1.bf16.msra.mxu0 0
      %319 = vmatprep.subr.bf16.mxu0 0
      %320 = vmatpush1.bf16.msra.mxu0 0
      %321 = vmatprep.subr.bf16.mxu0 0
      %322 = vmatpush1.bf16.msra.mxu0 0
      %323 = vmatprep.subr.bf16.mxu0 0
      %324 = vmatpush1.bf16.msra.mxu0 0
      %325 = vmatprep.subr.bf16.mxu0 %v309
      %326 = vmatpush1.bf16.msra.mxu0 %v306
      %327 = vmatprep.subr.bf16.mxu0 0
      %328 = vmatpush2.bf16.msra.mxu0 0
      %329 = vmatprep.subr.bf16.mxu0 0
      %330 = vmatpush2.bf16.msra.mxu0 0
      %331 = vmatprep.subr.bf16.mxu0 0
      %332 = vmatpush2.bf16.msra.mxu0 0
      %333 = vmatprep.subr.bf16.mxu0 0
      %334 = vmatpush2.bf16.msra.mxu0 0
      %335 = vmatprep.subr.bf16.mxu0 0
      %336 = vmatpush2.bf16.msra.mxu0 0
      %337 = vmatprep.subr.bf16.mxu0 0
      %338 = vmatpush2.bf16.msra.mxu0 0
      %339 = vmatprep.subr.bf16.mxu0 0
      %340 = vmatpush2.bf16.msra.mxu0 0
      %341 = vmatprep.subr.bf16.mxu0 0
      %342 = vmatpush2.bf16.msra.mxu0 0
      %343 = vmatprep.mubr.bf16.mxu0 0
      %344 = vmatmul.mubr.bf16.gmra.mxu0 %v299
      %v345 = vpop.f32.mrf.mxu0
      %v346 = vadd.f32 0.0, %v345
      %v347 = vpop.f32.mrf.mxu0
      %v348 = vadd.f32 0.0, %v347
      %v349 = vpop.f32.mrf.mxu0
      %v350 = vadd.f32 0.0, %v349
      %v351 = vpop.f32.mrf.mxu0
      %v352 = vadd.f32 0.0, %v351
      %353 = vmatprep.mubr.bf16.mxu0 0
      %354 = vmatmul.mubr.bf16.gmra.mxu0 %v302
      %v355 = vpop.f32.mrf.mxu0
      %v356 = vadd.f32 0.0, %v355
      %v357 = vpop.f32.mrf.mxu0
      %v358 = vadd.f32 0.0, %v357
      %v359 = vpop.f32.mrf.mxu0
      %v360 = vpop.f32.mrf.mxu0
      %361 = vdwg.mxu0
      %v365 = vunpack.c.l.b16 %v266
      %v366 = vunpack.c.l.b16 %v267
      %v367 = vunpack.c.l.b16 %v268
      %v368 = vpack.c.b16 %v366, %v365
      %v369 = vpack.c.b16 %v367, %v367
      %v371 = vsel %vm297, %v368, 0
      %v374 = vsel %vm297, %v369, 0
      %v377 = vsel %vm304, %v289, 0
      %v380 = vsel %vm304, %v290, 0
      %382 = vmatprep.subr.bf16.mxu0 0
      %383 = vmatpush1.bf16.msra.mxu0 0
      %384 = vmatprep.subr.bf16.mxu0 0
      %385 = vmatpush1.bf16.msra.mxu0 0
      %386 = vmatprep.subr.bf16.mxu0 0
      %387 = vmatpush1.bf16.msra.mxu0 0
      %388 = vmatprep.subr.bf16.mxu0 0
      %389 = vmatpush1.bf16.msra.mxu0 0
      %390 = vmatprep.subr.bf16.mxu0 0
      %391 = vmatpush1.bf16.msra.mxu0 0
      %392 = vmatprep.subr.bf16.mxu0 0
      %393 = vmatpush1.bf16.msra.mxu0 0
      %394 = vmatprep.subr.bf16.mxu0 0
      %395 = vmatpush1.bf16.msra.mxu0 0
      %396 = vmatprep.subr.bf16.mxu0 %v380
      %397 = vmatpush1.bf16.msra.mxu0 %v377
      %398 = vmatprep.subr.bf16.mxu0 0
      %399 = vmatpush2.bf16.msra.mxu0 0
      %400 = vmatprep.subr.bf16.mxu0 0
      %401 = vmatpush2.bf16.msra.mxu0 0
      %402 = vmatprep.subr.bf16.mxu0 0
      %403 = vmatpush2.bf16.msra.mxu0 0
      %404 = vmatprep.subr.bf16.mxu0 0
      %405 = vmatpush2.bf16.msra.mxu0 0
      %406 = vmatprep.subr.bf16.mxu0 0
      %407 = vmatpush2.bf16.msra.mxu0 0
      %408 = vmatprep.subr.bf16.mxu0 0
      %409 = vmatpush2.bf16.msra.mxu0 0
      %410 = vmatprep.subr.bf16.mxu0 0
      %411 = vmatpush2.bf16.msra.mxu0 0
      %412 = vmatprep.subr.bf16.mxu0 0
      %413 = vmatpush2.bf16.msra.mxu0 0
      %414 = vmatprep.mubr.bf16.mxu0 0
      %415 = vmatmul.mubr.bf16.gmra.mxu0 %v371
      %v416 = vpop.f32.mrf.mxu0
      %v417 = vadd.f32 %v346, %v416
      %v418 = vpop.f32.mrf.mxu0
      %v419 = vadd.f32 %v348, %v418
      %v420 = vpop.f32.mrf.mxu0
      %v421 = vadd.f32 %v350, %v420
      %v422 = vpop.f32.mrf.mxu0
      %v423 = vadd.f32 %v352, %v422
      %424 = vmatprep.mubr.bf16.mxu0 0
      %425 = vmatmul.mubr.bf16.gmra.mxu0 %v374
      %v426 = vpop.f32.mrf.mxu0
      %v427 = vadd.f32 %v356, %v426
      %v428 = vpop.f32.mrf.mxu0
      %v429 = vadd.f32 %v358, %v428
      %v430 = vpop.f32.mrf.mxu0
      %v431 = vpop.f32.mrf.mxu0
      %432 = vdwg.mxu0
      %s433 = scalar_lea.vmem %s1, 24
      %v434 = vld [vmem:[%s433] sm:$0xf]
      %v435 = vld [vmem:[%s433 + $0x4] sm:$0xf]
      %v436 = vld [vmem:[%s433 + $0x8] sm:$0x1]
      %v437 = vld [vmem:[%s247] sm:$0xf]
      %v441 = vunpack.c.l.b16 %v434
      %v442 = vunpack.c.l.b16 %v435
      %v443 = vunpack.c.l.b16 %v436
      %v444 = vpack.c.b16 %v442, %v441
      %v445 = vpack.c.b16 %v443, %v443
      %v448 = vunpack.c.l.s4 1983009808
      %v449 = vunpack.c.0.s8 %v448
      %v450 = vlaneseq
      %v451 = vshrl.u32 %v450, 7
      %v452 = vsub.s32 %v449, %v451
      %v453 = vrot.slane %v437, %v452
      %v454 = vcombine.high %v453, %v453
      %455 = vrot.lane.b32.xlu0 %v453, 126
      %v456 = vpop.permute.xlu0 %455
      %457 = vrot.lane.b32.xlu0 %v454, 126
      %v458 = vpop.permute.xlu0 %457
      %vm459 = vcmask 1031168
      %v460 = vsel %vm459, %v456, %v458
      %v462 = vsel %vm297, %v444, 0
      %v465 = vsel %vm297, %v445, 0
      %v468 = vsel %vm304, %v460, 0
      %v471 = vsel %vm304, %v458, 0
      %473 = vmatprep.subr.bf16.mxu0 0
      %474 = vmatpush1.bf16.msra.mxu0 0
      %475 = vmatprep.subr.bf16.mxu0 0
      %476 = vmatpush1.bf16.msra.mxu0 0
      %477 = vmatprep.subr.bf16.mxu0 0
      %478 = vmatpush1.bf16.msra.mxu0 0
      %479 = vmatprep.subr.bf16.mxu0 0
      %480 = vmatpush1.bf16.msra.mxu0 0
      %481 = vmatprep.subr.bf16.mxu0 0
      %482 = vmatpush1.bf16.msra.mxu0 0
      %483 = vmatprep.subr.bf16.mxu0 0
      %484 = vmatpush1.bf16.msra.mxu0 0
      %485 = vmatprep.subr.bf16.mxu0 0
      %486 = vmatpush1.bf16.msra.mxu0 0
      %487 = vmatprep.subr.bf16.mxu0 %v471
      %488 = vmatpush1.bf16.msra.mxu0 %v468
      %489 = vmatprep.subr.bf16.mxu0 0
      %490 = vmatpush2.bf16.msra.mxu0 0
      %491 = vmatprep.subr.bf16.mxu0 0
      %492 = vmatpush2.bf16.msra.mxu0 0
      %493 = vmatprep.subr.bf16.mxu0 0
      %494 = vmatpush2.bf16.msra.mxu0 0
      %495 = vmatprep.subr.bf16.mxu0 0
      %496 = vmatpush2.bf16.msra.mxu0 0
      %497 = vmatprep.subr.bf16.mxu0 0
      %498 = vmatpush2.bf16.msra.mxu0 0
      %499 = vmatprep.subr.bf16.mxu0 0
      %500 = vmatpush2.bf16.msra.mxu0 0
      %501 = vmatprep.subr.bf16.mxu0 0
      %502 = vmatpush2.bf16.msra.mxu0 0
      %503 = vmatprep.subr.bf16.mxu0 0
      %504 = vmatpush2.bf16.msra.mxu0 0
      %505 = vmatprep.mubr.bf16.mxu0 0
      %506 = vmatmul.mubr.bf16.gmra.mxu0 %v462
      %v507 = vpop.f32.mrf.mxu0
      %v508 = vadd.f32 0.0, %v507
      %v509 = vpop.f32.mrf.mxu0
      %v510 = vadd.f32 0.0, %v509
      %v511 = vpop.f32.mrf.mxu0
      %v512 = vadd.f32 0.0, %v511
      %v513 = vpop.f32.mrf.mxu0
      %v514 = vadd.f32 0.0, %v513
      %515 = vmatprep.mubr.bf16.mxu0 0
      %516 = vmatmul.mubr.bf16.gmra.mxu0 %v465
      %v517 = vpop.f32.mrf.mxu0
      %v518 = vadd.f32 0.0, %v517
      %v519 = vpop.f32.mrf.mxu0
      %v520 = vadd.f32 0.0, %v519
      %v521 = vpop.f32.mrf.mxu0
      %v522 = vpop.f32.mrf.mxu0
      %523 = vdwg.mxu0
      %v524 = vadd.f32 %v417, %v508
      %v525 = vadd.f32 %v419, %v510
      %v526 = vadd.f32 %v421, %v512
      %v527 = vadd.f32 %v423, %v514
      %v528 = vadd.f32 %v427, %v518
      %v529 = vadd.f32 %v429, %v520
      %s530 = scalar_lea.vmem %s1, 36
      %v531 = vld [vmem:[%s530] sm:$0xf]
      %v532 = vld [vmem:[%s530 + $0x4] sm:$0xf]
      %v533 = vld [vmem:[%s530 + $0x8] sm:$0x1]
      %v534 = vld [vmem:[%s247] sm:$0xf]
      %v538 = vunpack.c.l.b16 %v531
      %v539 = vunpack.c.l.b16 %v532
      %v540 = vunpack.c.l.b16 %v533
      %v541 = vpack.c.b16 %v539, %v538
      %v542 = vpack.c.b16 %v540, %v540
      %v545 = vunpack.c.l.s4 1983009808
      %v546 = vunpack.c.0.s8 %v545
      %v547 = vlaneseq
      %v548 = vshrl.u32 %v547, 7
      %v549 = vsub.s32 %v546, %v548
      %v550 = vrot.slane %v534, %v549
      %v551 = vcombine.high %v550, %v550
      %552 = vrot.lane.b32.xlu0 %v550, 110
      %v553 = vpop.permute.xlu0 %552
      %554 = vrot.lane.b32.xlu0 %v551, 110
      %v555 = vpop.permute.xlu0 %554
      %vm556 = vcmask 900096
      %v557 = vsel %vm556, %v553, %v555
      %v559 = vsel %vm297, %v541, 0
      %v562 = vsel %vm297, %v542, 0
      %v565 = vsel %vm304, %v557, 0
      %v568 = vsel %vm304, %v555, 0
      %570 = vmatprep.subr.bf16.mxu0 0
      %571 = vmatpush1.bf16.msra.mxu0 0
      %572 = vmatprep.subr.bf16.mxu0 0
      %573 = vmatpush1.bf16.msra.mxu0 0
      %574 = vmatprep.subr.bf16.mxu0 0
      %575 = vmatpush1.bf16.msra.mxu0 0
      %576 = vmatprep.subr.bf16.mxu0 0
      %577 = vmatpush1.bf16.msra.mxu0 0
      %578 = vmatprep.subr.bf16.mxu0 0
      %579 = vmatpush1.bf16.msra.mxu0 0
      %580 = vmatprep.subr.bf16.mxu0 0
      %581 = vmatpush1.bf16.msra.mxu0 0
      %582 = vmatprep.subr.bf16.mxu0 0
      %583 = vmatpush1.bf16.msra.mxu0 0
      %584 = vmatprep.subr.bf16.mxu0 %v568
      %585 = vmatpush1.bf16.msra.mxu0 %v565
      %586 = vmatprep.subr.bf16.mxu0 0
      %587 = vmatpush2.bf16.msra.mxu0 0
      %588 = vmatprep.subr.bf16.mxu0 0
      %589 = vmatpush2.bf16.msra.mxu0 0
      %590 = vmatprep.subr.bf16.mxu0 0
      %591 = vmatpush2.bf16.msra.mxu0 0
      %592 = vmatprep.subr.bf16.mxu0 0
      %593 = vmatpush2.bf16.msra.mxu0 0
      %594 = vmatprep.subr.bf16.mxu0 0
      %595 = vmatpush2.bf16.msra.mxu0 0
      %596 = vmatprep.subr.bf16.mxu0 0
      %597 = vmatpush2.bf16.msra.mxu0 0
      %598 = vmatprep.subr.bf16.mxu0 0
      %599 = vmatpush2.bf16.msra.mxu0 0
      %600 = vmatprep.subr.bf16.mxu0 0
      %601 = vmatpush2.bf16.msra.mxu0 0
      %602 = vmatprep.mubr.bf16.mxu0 0
      %603 = vmatmul.mubr.bf16.gmra.mxu0 %v559
      %v604 = vpop.f32.mrf.mxu0
      %v605 = vadd.f32 0.0, %v604
      %v606 = vpop.f32.mrf.mxu0
      %v607 = vadd.f32 0.0, %v606
      %v608 = vpop.f32.mrf.mxu0
      %v609 = vadd.f32 0.0, %v608
      %v610 = vpop.f32.mrf.mxu0
      %v611 = vadd.f32 0.0, %v610
      %612 = vmatprep.mubr.bf16.mxu0 0
      %613 = vmatmul.mubr.bf16.gmra.mxu0 %v562
      %v614 = vpop.f32.mrf.mxu0
      %v615 = vadd.f32 0.0, %v614
      %v616 = vpop.f32.mrf.mxu0
      %v617 = vadd.f32 0.0, %v616
      %v618 = vpop.f32.mrf.mxu0
      %v619 = vpop.f32.mrf.mxu0
      %620 = vdwg.mxu0
      %v621 = vadd.f32 %v524, %v605
      %v622 = vadd.f32 %v525, %v607
      %v623 = vadd.f32 %v526, %v609
      %v624 = vadd.f32 %v527, %v611
      %v625 = vadd.f32 %v528, %v615
      %v626 = vadd.f32 %v529, %v617
      %s627 = scalar_lea.vmem %s1, 48
      %v628 = vld [vmem:[%s627] sm:$0xf]
      %v629 = vld [vmem:[%s627 + $0x4] sm:$0xf]
      %v630 = vld [vmem:[%s627 + $0x8] sm:$0x1]
      %v631 = vld [vmem:[%s247] sm:$0xf]
      %v635 = vunpack.c.l.b16 %v628
      %v636 = vunpack.c.l.b16 %v629
      %v637 = vunpack.c.l.b16 %v630
      %v638 = vpack.c.b16 %v636, %v635
      %v639 = vpack.c.b16 %v637, %v637
      %v642 = vunpack.c.l.s4 1983009808
      %v643 = vunpack.c.0.s8 %v642
      %v644 = vlaneseq
      %v645 = vshrl.u32 %v644, 7
      %v646 = vsub.s32 %v643, %v645
      %v647 = vrot.slane %v631, %v646
      %v648 = vcombine.high %v647, %v647
      %649 = vrot.lane.b32.xlu0 %v647, 109
      %v650 = vpop.permute.xlu0 %649
      %651 = vrot.lane.b32.xlu0 %v648, 109
      %v652 = vpop.permute.xlu0 %651
      %vm653 = vcmask 891904
      %v654 = vsel %vm653, %v650, %v652
      %v656 = vsel %vm297, %v638, 0
      %v659 = vsel %vm297, %v639, 0
      %v662 = vsel %vm304, %v654, 0
      %v665 = vsel %vm304, %v652, 0
      %667 = vmatprep.subr.bf16.mxu0 0
      %668 = vmatpush1.bf16.msra.mxu0 0
      %669 = vmatprep.subr.bf16.mxu0 0
      %670 = vmatpush1.bf16.msra.mxu0 0
      %671 = vmatprep.subr.bf16.mxu0 0
      %672 = vmatpush1.bf16.msra.mxu0 0
      %673 = vmatprep.subr.bf16.mxu0 0
      %674 = vmatpush1.bf16.msra.mxu0 0
      %675 = vmatprep.subr.bf16.mxu0 0
      %676 = vmatpush1.bf16.msra.mxu0 0
      %677 = vmatprep.subr.bf16.mxu0 0
      %678 = vmatpush1.bf16.msra.mxu0 0
      %679 = vmatprep.subr.bf16.mxu0 0
      %680 = vmatpush1.bf16.msra.mxu0 0
      %681 = vmatprep.subr.bf16.mxu0 %v665
      %682 = vmatpush1.bf16.msra.mxu0 %v662
      %683 = vmatprep.subr.bf16.mxu0 0
      %684 = vmatpush2.bf16.msra.mxu0 0
      %685 = vmatprep.subr.bf16.mxu0 0
      %686 = vmatpush2.bf16.msra.mxu0 0
      %687 = vmatprep.subr.bf16.mxu0 0
      %688 = vmatpush2.bf16.msra.mxu0 0
      %689 = vmatprep.subr.bf16.mxu0 0
      %690 = vmatpush2.bf16.msra.mxu0 0
      %691 = vmatprep.subr.bf16.mxu0 0
      %692 = vmatpush2.bf16.msra.mxu0 0
      %693 = vmatprep.subr.bf16.mxu0 0
      %694 = vmatpush2.bf16.msra.mxu0 0
      %695 = vmatprep.subr.bf16.mxu0 0
      %696 = vmatpush2.bf16.msra.mxu0 0
      %697 = vmatprep.subr.bf16.mxu0 0
      %698 = vmatpush2.bf16.msra.mxu0 0
      %699 = vmatprep.mubr.bf16.mxu0 0
      %700 = vmatmul.mubr.bf16.gmra.mxu0 %v656
      %v701 = vpop.f32.mrf.mxu0
      %v702 = vadd.f32 0.0, %v701
      %v703 = vpop.f32.mrf.mxu0
      %v704 = vadd.f32 0.0, %v703
      %v705 = vpop.f32.mrf.mxu0
      %v706 = vadd.f32 0.0, %v705
      %v707 = vpop.f32.mrf.mxu0
      %v708 = vadd.f32 0.0, %v707
      %709 = vmatprep.mubr.bf16.mxu0 0
      %710 = vmatmul.mubr.bf16.gmra.mxu0 %v659
      %v711 = vpop.f32.mrf.mxu0
      %v712 = vadd.f32 0.0, %v711
      %v713 = vpop.f32.mrf.mxu0
      %v714 = vadd.f32 0.0, %v713
      %v715 = vpop.f32.mrf.mxu0
      %v716 = vpop.f32.mrf.mxu0
      %717 = vdwg.mxu0
      %v718 = vadd.f32 %v621, %v702
      %v719 = vadd.f32 %v622, %v704
      %v720 = vadd.f32 %v623, %v706
      %v721 = vadd.f32 %v624, %v708
      %v722 = vadd.f32 %v625, %v712
      %v723 = vadd.f32 %v626, %v714
      %s724 = scalar_lea.vmem %s1, 60
      %v725 = vld [vmem:[%s724] sm:$0xf]
      %v726 = vld [vmem:[%s724 + $0x4] sm:$0xf]
      %v727 = vld [vmem:[%s724 + $0x8] sm:$0x1]
      %v728 = vld [vmem:[%s247] sm:$0xf]
      %v732 = vunpack.c.l.b16 %v725
      %v733 = vunpack.c.l.b16 %v726
      %v734 = vunpack.c.l.b16 %v727
      %v735 = vpack.c.b16 %v733, %v732
      %v736 = vpack.c.b16 %v734, %v734
      %v739 = vunpack.c.l.s4 1983009808
      %v740 = vunpack.c.0.s8 %v739
      %v741 = vlaneseq
      %v742 = vshrl.u32 %v741, 7
      %v743 = vsub.s32 %v740, %v742
      %v744 = vrot.slane %v728, %v743
      %v745 = vcombine.high %v744, %v744
      %746 = vrot.lane.b32.xlu0 %v744, 108
      %v747 = vpop.permute.xlu0 %746
      %748 = vrot.lane.b32.xlu0 %v745, 108
      %v749 = vpop.permute.xlu0 %748
      %vm750 = vcmask 883712
      %v751 = vsel %vm750, %v747, %v749
      %v753 = vsel %vm297, %v735, 0
      %v756 = vsel %vm297, %v736, 0
      %v759 = vsel %vm304, %v751, 0
      %v762 = vsel %vm304, %v749, 0
      %764 = vmatprep.subr.bf16.mxu0 0
      %765 = vmatpush1.bf16.msra.mxu0 0
      %766 = vmatprep.subr.bf16.mxu0 0
      %767 = vmatpush1.bf16.msra.mxu0 0
      %768 = vmatprep.subr.bf16.mxu0 0
      %769 = vmatpush1.bf16.msra.mxu0 0
      %770 = vmatprep.subr.bf16.mxu0 0
      %771 = vmatpush1.bf16.msra.mxu0 0
      %772 = vmatprep.subr.bf16.mxu0 0
      %773 = vmatpush1.bf16.msra.mxu0 0
      %774 = vmatprep.subr.bf16.mxu0 0
      %775 = vmatpush1.bf16.msra.mxu0 0
      %776 = vmatprep.subr.bf16.mxu0 0
      %777 = vmatpush1.bf16.msra.mxu0 0
      %778 = vmatprep.subr.bf16.mxu0 %v762
      %779 = vmatpush1.bf16.msra.mxu0 %v759
      %780 = vmatprep.subr.bf16.mxu0 0
      %781 = vmatpush2.bf16.msra.mxu0 0
      %782 = vmatprep.subr.bf16.mxu0 0
      %783 = vmatpush2.bf16.msra.mxu0 0
      %784 = vmatprep.subr.bf16.mxu0 0
      %785 = vmatpush2.bf16.msra.mxu0 0
      %786 = vmatprep.subr.bf16.mxu0 0
      %787 = vmatpush2.bf16.msra.mxu0 0
      %788 = vmatprep.subr.bf16.mxu0 0
      %789 = vmatpush2.bf16.msra.mxu0 0
      %790 = vmatprep.subr.bf16.mxu0 0
      %791 = vmatpush2.bf16.msra.mxu0 0
      %792 = vmatprep.subr.bf16.mxu0 0
      %793 = vmatpush2.bf16.msra.mxu0 0
      %794 = vmatprep.subr.bf16.mxu0 0
      %795 = vmatpush2.bf16.msra.mxu0 0
      %796 = vmatprep.mubr.bf16.mxu0 0
      %797 = vmatmul.mubr.bf16.gmra.mxu0 %v753
      %v798 = vpop.f32.mrf.mxu0
      %v799 = vadd.f32 0.0, %v798
      %v800 = vpop.f32.mrf.mxu0
      %v801 = vadd.f32 0.0, %v800
      %v802 = vpop.f32.mrf.mxu0
      %v803 = vadd.f32 0.0, %v802
      %v804 = vpop.f32.mrf.mxu0
      %v805 = vadd.f32 0.0, %v804
      %806 = vmatprep.mubr.bf16.mxu0 0
      %807 = vmatmul.mubr.bf16.gmra.mxu0 %v756
      %v808 = vpop.f32.mrf.mxu0
      %v809 = vadd.f32 0.0, %v808
      %v810 = vpop.f32.mrf.mxu0
      %v811 = vadd.f32 0.0, %v810
      %v812 = vpop.f32.mrf.mxu0
      %v813 = vpop.f32.mrf.mxu0
      %814 = vdwg.mxu0
      %v815 = vadd.f32 %v718, %v799
      %v816 = vadd.f32 %v719, %v801
      %v817 = vadd.f32 %v720, %v803
      %v818 = vadd.f32 %v721, %v805
      %v819 = vadd.f32 %v722, %v809
      %v820 = vadd.f32 %v723, %v811
      %s821 = scalar_lea.vmem %s1, 72
      %v822 = vld [vmem:[%s821] sm:$0xf]
      %v823 = vld [vmem:[%s821 + $0x4] sm:$0xf]
      %v824 = vld [vmem:[%s821 + $0x8] sm:$0x1]
      %v825 = vld [vmem:[%s247] sm:$0xf]
      %v829 = vunpack.c.l.b16 %v822
      %v830 = vunpack.c.l.b16 %v823
      %v831 = vunpack.c.l.b16 %v824
      %v832 = vpack.c.b16 %v830, %v829
      %v833 = vpack.c.b16 %v831, %v831
      %v836 = vunpack.c.l.s4 1983009808
      %v837 = vunpack.c.0.s8 %v836
      %v838 = vlaneseq
      %v839 = vshrl.u32 %v838, 7
      %v840 = vsub.s32 %v837, %v839
      %v841 = vrot.slane %v825, %v840
      %v842 = vcombine.high %v841, %v841
      %843 = vrot.lane.b32.xlu0 %v841, 92
      %v844 = vpop.permute.xlu0 %843
      %845 = vrot.lane.b32.xlu0 %v842, 92
      %v846 = vpop.permute.xlu0 %845
      %vm847 = vcmask 752640
      %v848 = vsel %vm847, %v844, %v846
      %v850 = vsel %vm297, %v832, 0
      %v853 = vsel %vm297, %v833, 0
      %v856 = vsel %vm304, %v848, 0
      %v859 = vsel %vm304, %v846, 0
      %861 = vmatprep.subr.bf16.mxu0 0
      %862 = vmatpush1.bf16.msra.mxu0 0
      %863 = vmatprep.subr.bf16.mxu0 0
      %864 = vmatpush1.bf16.msra.mxu0 0
      %865 = vmatprep.subr.bf16.mxu0 0
      %866 = vmatpush1.bf16.msra.mxu0 0
      %867 = vmatprep.subr.bf16.mxu0 0
      %868 = vmatpush1.bf16.msra.mxu0 0
      %869 = vmatprep.subr.bf16.mxu0 0
      %870 = vmatpush1.bf16.msra.mxu0 0
      %871 = vmatprep.subr.bf16.mxu0 0
      %872 = vmatpush1.bf16.msra.mxu0 0
      %873 = vmatprep.subr.bf16.mxu0 0
      %874 = vmatpush1.bf16.msra.mxu0 0
      %875 = vmatprep.subr.bf16.mxu0 %v859
      %876 = vmatpush1.bf16.msra.mxu0 %v856
      %877 = vmatprep.subr.bf16.mxu0 0
      %878 = vmatpush2.bf16.msra.mxu0 0
      %879 = vmatprep.subr.bf16.mxu0 0
      %880 = vmatpush2.bf16.msra.mxu0 0
      %881 = vmatprep.subr.bf16.mxu0 0
      %882 = vmatpush2.bf16.msra.mxu0 0
      %883 = vmatprep.subr.bf16.mxu0 0
      %884 = vmatpush2.bf16.msra.mxu0 0
      %885 = vmatprep.subr.bf16.mxu0 0
      %886 = vmatpush2.bf16.msra.mxu0 0
      %887 = vmatprep.subr.bf16.mxu0 0
      %888 = vmatpush2.bf16.msra.mxu0 0
      %889 = vmatprep.subr.bf16.mxu0 0
      %890 = vmatpush2.bf16.msra.mxu0 0
      %891 = vmatprep.subr.bf16.mxu0 0
      %892 = vmatpush2.bf16.msra.mxu0 0
      %893 = vmatprep.mubr.bf16.mxu0 0
      %894 = vmatmul.mubr.bf16.gmra.mxu0 %v850
      %v895 = vpop.f32.mrf.mxu0
      %v896 = vadd.f32 0.0, %v895
      %v897 = vpop.f32.mrf.mxu0
      %v898 = vadd.f32 0.0, %v897
      %v899 = vpop.f32.mrf.mxu0
      %v900 = vadd.f32 0.0, %v899
      %v901 = vpop.f32.mrf.mxu0
      %v902 = vadd.f32 0.0, %v901
      %903 = vmatprep.mubr.bf16.mxu0 0
      %904 = vmatmul.mubr.bf16.gmra.mxu0 %v853
      %v905 = vpop.f32.mrf.mxu0
      %v906 = vadd.f32 0.0, %v905
      %v907 = vpop.f32.mrf.mxu0
      %v908 = vadd.f32 0.0, %v907
      %v909 = vpop.f32.mrf.mxu0
      %v910 = vpop.f32.mrf.mxu0
      %911 = vdwg.mxu0
      %v912 = vadd.f32 %v815, %v896
      %v913 = vadd.f32 %v816, %v898
      %v914 = vadd.f32 %v817, %v900
      %v915 = vadd.f32 %v818, %v902
      %v916 = vadd.f32 %v819, %v906
      %v917 = vadd.f32 %v820, %v908
      %s918 = scalar_lea.vmem %s1, 84
      %v919 = vld [vmem:[%s918] sm:$0xf]
      %v920 = vld [vmem:[%s918 + $0x4] sm:$0xf]
      %v921 = vld [vmem:[%s918 + $0x8] sm:$0x1]
      %v922 = vld [vmem:[%s247] sm:$0xf]
      %v926 = vunpack.c.l.b16 %v919
      %v927 = vunpack.c.l.b16 %v920
      %v928 = vunpack.c.l.b16 %v921
      %v929 = vpack.c.b16 %v927, %v926
      %v930 = vpack.c.b16 %v928, %v928
      %v933 = vunpack.c.l.s4 1983009808
      %v934 = vunpack.c.0.s8 %v933
      %v935 = vlaneseq
      %v936 = vshrl.u32 %v935, 7
      %v937 = vsub.s32 %v934, %v936
      %v938 = vrot.slane %v922, %v937
      %v939 = vcombine.high %v938, %v938
      %940 = vrot.lane.b32.xlu0 %v938, 91
      %v941 = vpop.permute.xlu0 %940
      %942 = vrot.lane.b32.xlu0 %v939, 91
      %v943 = vpop.permute.xlu0 %942
      %vm944 = vcmask 744448
      %v945 = vsel %vm944, %v941, %v943
      %v947 = vsel %vm297, %v929, 0
      %v950 = vsel %vm297, %v930, 0
      %v953 = vsel %vm304, %v945, 0
      %v956 = vsel %vm304, %v943, 0
      %958 = vmatprep.subr.bf16.mxu0 0
      %959 = vmatpush1.bf16.msra.mxu0 0
      %960 = vmatprep.subr.bf16.mxu0 0
      %961 = vmatpush1.bf16.msra.mxu0 0
      %962 = vmatprep.subr.bf16.mxu0 0
      %963 = vmatpush1.bf16.msra.mxu0 0
      %964 = vmatprep.subr.bf16.mxu0 0
      %965 = vmatpush1.bf16.msra.mxu0 0
      %966 = vmatprep.subr.bf16.mxu0 0
      %967 = vmatpush1.bf16.msra.mxu0 0
      %968 = vmatprep.subr.bf16.mxu0 0
      %969 = vmatpush1.bf16.msra.mxu0 0
      %970 = vmatprep.subr.bf16.mxu0 0
      %971 = vmatpush1.bf16.msra.mxu0 0
      %972 = vmatprep.subr.bf16.mxu0 %v956
      %973 = vmatpush1.bf16.msra.mxu0 %v953
      %974 = vmatprep.subr.bf16.mxu0 0
      %975 = vmatpush2.bf16.msra.mxu0 0
      %976 = vmatprep.subr.bf16.mxu0 0
      %977 = vmatpush2.bf16.msra.mxu0 0
      %978 = vmatprep.subr.bf16.mxu0 0
      %979 = vmatpush2.bf16.msra.mxu0 0
      %980 = vmatprep.subr.bf16.mxu0 0
      %981 = vmatpush2.bf16.msra.mxu0 0
      %982 = vmatprep.subr.bf16.mxu0 0
      %983 = vmatpush2.bf16.msra.mxu0 0
      %984 = vmatprep.subr.bf16.mxu0 0
      %985 = vmatpush2.bf16.msra.mxu0 0
      %986 = vmatprep.subr.bf16.mxu0 0
      %987 = vmatpush2.bf16.msra.mxu0 0
      %988 = vmatprep.subr.bf16.mxu0 0
      %989 = vmatpush2.bf16.msra.mxu0 0
      %990 = vmatprep.mubr.bf16.mxu0 0
      %991 = vmatmul.mubr.bf16.gmra.mxu0 %v947
      %v992 = vpop.f32.mrf.mxu0
      %v993 = vadd.f32 0.0, %v992
      %v994 = vpop.f32.mrf.mxu0
      %v995 = vadd.f32 0.0, %v994
      %v996 = vpop.f32.mrf.mxu0
      %v997 = vadd.f32 0.0, %v996
      %v998 = vpop.f32.mrf.mxu0
      %v999 = vadd.f32 0.0, %v998
      %1000 = vmatprep.mubr.bf16.mxu0 0
      %1001 = vmatmul.mubr.bf16.gmra.mxu0 %v950
      %v1002 = vpop.f32.mrf.mxu0
      %v1003 = vadd.f32 0.0, %v1002
      %v1004 = vpop.f32.mrf.mxu0
      %v1005 = vadd.f32 0.0, %v1004
      %v1006 = vpop.f32.mrf.mxu0
      %v1007 = vpop.f32.mrf.mxu0
      %1008 = vdwg.mxu0
      %v1009 = vadd.f32 %v912, %v993
      %v1010 = vadd.f32 %v913, %v995
      %v1011 = vadd.f32 %v914, %v997
      %v1012 = vadd.f32 %v915, %v999
      %v1013 = vadd.f32 %v916, %v1003
      %v1014 = vadd.f32 %v917, %v1005
      %s1015 = scalar_lea.vmem %s1, 96
      %v1016 = vld [vmem:[%s1015] sm:$0xf]
      %v1017 = vld [vmem:[%s1015 + $0x4] sm:$0xf]
      %v1018 = vld [vmem:[%s1015 + $0x8] sm:$0x1]
      %v1019 = vld [vmem:[%s247] sm:$0xf]
      %v1023 = vunpack.c.l.b16 %v1016
      %v1024 = vunpack.c.l.b16 %v1017
      %v1025 = vunpack.c.l.b16 %v1018
      %v1026 = vpack.c.b16 %v1024, %v1023
      %v1027 = vpack.c.b16 %v1025, %v1025
      %v1030 = vunpack.c.l.s4 1983009808
      %v1031 = vunpack.c.0.s8 %v1030
      %v1032 = vlaneseq
      %v1033 = vshrl.u32 %v1032, 7
      %v1034 = vsub.s32 %v1031, %v1033
      %v1035 = vrot.slane %v1019, %v1034
      %v1036 = vcombine.high %v1035, %v1035
      %1037 = vrot.lane.b32.xlu0 %v1035, 90
      %v1038 = vpop.permute.xlu0 %1037
      %1039 = vrot.lane.b32.xlu0 %v1036, 90
      %v1040 = vpop.permute.xlu0 %1039
      %vm1041 = vcmask 736256
      %v1042 = vsel %vm1041, %v1038, %v1040
      %v1044 = vsel %vm297, %v1026, 0
      %v1047 = vsel %vm297, %v1027, 0
      %v1050 = vsel %vm304, %v1042, 0
      %v1053 = vsel %vm304, %v1040, 0
      %1055 = vmatprep.subr.bf16.mxu0 0
      %1056 = vmatpush1.bf16.msra.mxu0 0
      %1057 = vmatprep.subr.bf16.mxu0 0
      %1058 = vmatpush1.bf16.msra.mxu0 0
      %1059 = vmatprep.subr.bf16.mxu0 0
      %1060 = vmatpush1.bf16.msra.mxu0 0
      %1061 = vmatprep.subr.bf16.mxu0 0
      %1062 = vmatpush1.bf16.msra.mxu0 0
      %1063 = vmatprep.subr.bf16.mxu0 0
      %1064 = vmatpush1.bf16.msra.mxu0 0
      %1065 = vmatprep.subr.bf16.mxu0 0
      %1066 = vmatpush1.bf16.msra.mxu0 0
      %1067 = vmatprep.subr.bf16.mxu0 0
      %1068 = vmatpush1.bf16.msra.mxu0 0
      %1069 = vmatprep.subr.bf16.mxu0 %v1053
      %1070 = vmatpush1.bf16.msra.mxu0 %v1050
      %1071 = vmatprep.subr.bf16.mxu0 0
      %1072 = vmatpush2.bf16.msra.mxu0 0
      %1073 = vmatprep.subr.bf16.mxu0 0
      %1074 = vmatpush2.bf16.msra.mxu0 0
      %1075 = vmatprep.subr.bf16.mxu0 0
      %1076 = vmatpush2.bf16.msra.mxu0 0
      %1077 = vmatprep.subr.bf16.mxu0 0
      %1078 = vmatpush2.bf16.msra.mxu0 0
      %1079 = vmatprep.subr.bf16.mxu0 0
      %1080 = vmatpush2.bf16.msra.mxu0 0
      %1081 = vmatprep.subr.bf16.mxu0 0
      %1082 = vmatpush2.bf16.msra.mxu0 0
      %1083 = vmatprep.subr.bf16.mxu0 0
      %1084 = vmatpush2.bf16.msra.mxu0 0
      %1085 = vmatprep.subr.bf16.mxu0 0
      %1086 = vmatpush2.bf16.msra.mxu0 0
      %1087 = vmatprep.mubr.bf16.mxu0 0
      %1088 = vmatmul.mubr.bf16.gmra.mxu0 %v1044
      %v1089 = vpop.f32.mrf.mxu0
      %v1090 = vadd.f32 0.0, %v1089
      %v1091 = vpop.f32.mrf.mxu0
      %v1092 = vadd.f32 0.0, %v1091
      %v1093 = vpop.f32.mrf.mxu0
      %v1094 = vadd.f32 0.0, %v1093
      %v1095 = vpop.f32.mrf.mxu0
      %v1096 = vadd.f32 0.0, %v1095
      %1097 = vmatprep.mubr.bf16.mxu0 0
      %1098 = vmatmul.mubr.bf16.gmra.mxu0 %v1047
      %v1099 = vpop.f32.mrf.mxu0
      %v1100 = vadd.f32 0.0, %v1099
      %v1101 = vpop.f32.mrf.mxu0
      %v1102 = vadd.f32 0.0, %v1101
      %v1103 = vpop.f32.mrf.mxu0
      %v1104 = vpop.f32.mrf.mxu0
      %1105 = vdwg.mxu0
      %v1106 = vadd.f32 %v1009, %v1090
      %v1107 = vadd.f32 %v1010, %v1092
      %v1108 = vadd.f32 %v1011, %v1094
      %v1109 = vadd.f32 %v1012, %v1096
      %v1110 = vadd.f32 %v1013, %v1100
      %v1111 = vadd.f32 %v1014, %v1102
      %v1112 = vld [vmem:[%s0] sm:$0xff]
      %v1113 = vld [vmem:[%s0 + $0x8] sm:$0xff]
      %v1114 = vld [vmem:[%s0 + $0x10] sm:$0x3]
      %1116 = vset.pattern.permute.xlu0 0
      %1117 = vperm.xlu0 %1116, %v1112
      %v1118 = vpop.permute.xlu0 %1117
      %1121 = vset.pattern.permute.xlu0 0
      %1122 = vperm.xlu0 %1121, %v1113
      %v1123 = vpop.permute.xlu0 %1122
      %1126 = vset.pattern.permute.xlu0 0
      %1127 = vperm.xlu0 %1126, %v1114
      %v1128 = vpop.permute.xlu0 %1127
      %v1130 = vadd.f32 %v1106, %v1118
      %v1131 = vadd.f32 %v1107, %v1118
      %v1132 = vadd.f32 %v1108, %v1123
      %v1133 = vadd.f32 %v1109, %v1123
      %v1134 = vadd.f32 %v1110, %v1128
      %v1135 = vadd.f32 %v1111, %v1128
      %v1136 = vsel %vm304, %v1134, -inf
      %v1137 = vmax.f32 %v1130, %v1136
      %v1138 = vmax.f32 %v1137, %v1132
      %v1139 = vrot.slane %v1138, 4
      %v1140 = vmax.f32 %v1138, %v1139
      %v1141 = vrot.slane %v1140, 2
      %v1142 = vmax.f32 %v1140, %v1141
      %v1143 = vrot.slane %v1142, 1
      %v1144 = vmax.f32 %v1142, %v1143
      %vm1145 = vcmask 130048
      %v1146 = vsel %vm1145, %v1131, -inf
      %v1147 = vsel %vm1145, %v1133, -inf
      %vm1148 = vcmask 123904
      %v1149 = vsel %vm1148, %v1135, -inf
      %v1150 = vmax.f32 %v1146, %v1149
      %v1151 = vmax.f32 %v1150, %v1147
      %v1152 = vrot.slane %v1151, 4
      %v1153 = vmax.f32 %v1151, %v1152
      %v1154 = vrot.slane %v1153, 2
      %v1155 = vmax.f32 %v1153, %v1154
      %v1156 = vrot.slane %v1155, 1
      %v1157 = vmax.f32 %v1155, %v1156
      %v1158 = vsub.f32 %v1130, %v1144
      %v1159 = vsub.f32 %v1131, %v1157
      %v1160 = vsub.f32 %v1132, %v1144
      %v1161 = vsub.f32 %v1133, %v1157
      %v1162 = vsub.f32 %v1134, %v1144
      %v1163 = vsub.f32 %v1135, %v1157
      %v1164 = vmul.f32 %v1158, 1.442695
      %v1165 = vpow.pop %v1164
      %v1166 = vmul.f32 %v1159, 1.442695
      %v1167 = vpow.pop %v1166
      %v1168 = vmul.f32 %v1160, 1.442695
      %v1169 = vpow.pop %v1168
      %v1170 = vmul.f32 %v1161, 1.442695
      %v1171 = vpow.pop %v1170
      %v1172 = vmul.f32 %v1162, 1.442695
      %v1173 = vpow.pop %v1172
      %v1174 = vmul.f32 %v1163, 1.442695
      %v1175 = vpow.pop %v1174
      %v1176 = vadd.f32 %v1165, %v1169
      %v1177 = vsel %vm304, %v1173, 0.0
      %v1178 = vadd.f32 %v1176, %v1177
      %v1179 = vrot.slane %v1178, 4
      %v1180 = vadd.f32 %v1178, %v1179
      %v1181 = vrot.slane %v1180, 2
      %v1182 = vadd.f32 %v1180, %v1181
      %v1183 = vrot.slane %v1182, 1
      %v1184 = vadd.f32 %v1182, %v1183
      %v1185 = vsel %vm1145, %v1167, 0.0
      %v1186 = vsel %vm1145, %v1171, 0.0
      %v1187 = vadd.f32 %v1185, %v1186
      %v1188 = vsel %vm1148, %v1175, 0.0
      %v1189 = vadd.f32 %v1187, %v1188
      %v1190 = vrot.slane %v1189, 4
      %v1191 = vadd.f32 %v1189, %v1190
      %v1192 = vrot.slane %v1191, 2
      %v1193 = vadd.f32 %v1191, %v1192
      %v1194 = vrot.slane %v1193, 1
      %v1195 = vadd.f32 %v1193, %v1194
      %v1196 = vrcp.pop %v1184
      %v1197 = vrcp.pop %v1195
      %v1198 = vmul.f32 %v1165, %v1196
      %v1199 = vmul.f32 %v1167, %v1197
      %v1200 = vmul.f32 %v1169, %v1196
      %v1201 = vmul.f32 %v1171, %v1197
      %v1202 = vmul.f32 %v1173, %v1196
      %v1203 = vmul.f32 %v1175, %v1197
      %v1204 = vld [vmem:[%s255] sm:$0x3]
      %v1205 = vunpack.c.l.bf16 %v1204
      %v1208 = vcombine.low %v1198, %v1199
      %v1210 = vunpack.c.l.s4 1983009808
      %v1211 = vunpack.c.0.s8 %v1210
      %v1212 = vlaneseq
      %v1213 = vshrl.u32 %v1212, 7
      %v1214 = vsub.s32 %v1211, %v1213
      %v1215 = vrot.slane %v1208, %v1214
      %v1217 = vmul.f32 %v1205, %v1215
      %v1218 = vld [vmem:[%s247] sm:$0x5]
      %v1219 = vunpack.c.l.bf16 %v1218
      %v1221 = vlaneseq
      %v1222 = vshrl.u32 %v1221, 7
      %v1223 = vsub.s32 0, %v1222
      %v1224 = vrot.slane %v1217, %v1223
      %v1225 = vlaneseq
      %v1226 = vshrl.u32 %v1225, 7
      %v1227 = vsub.s32 2, %v1226
      %v1228 = vrot.slane %v1217, %v1227
      %v1231 = vlaneseq
      %v1232 = vshrl.u32 %v1231, 7
      %v1233 = vsub.s32 0, %v1232
      %v1234 = vrot.slane %v1224, %v1233
      %v1235 = vlaneseq
      %v1236 = vshrl.u32 %v1235, 7
      %v1237 = vsub.s32 0, %v1236
      %v1238 = vrot.slane %v1228, %v1237
      %v1241 = vcombine.low %v1234, %v1238
      %v1243 = vmul.f32 %v1219, %v1241
      %v1244 = vadd.f32 %v1243, 0.0
      %v1245 = vrot.slane %v1215, 7
      %v1246 = vrot.slane %v1245, 2
      %1247 = vrot.lane.b32.xlu0 %v1246, 1
      %v1248 = vpop.permute.xlu0 %1247
      %v1249 = vrot.slane %v1248, 6
      %vm1250 = vcmask 7168
      %v1251 = vsel %vm1250, %v1249, %v1248
      %v1253 = vmul.f32 %v1205, %v1251
      %v1255 = vlaneseq
      %v1256 = vshrl.u32 %v1255, 7
      %v1257 = vsub.s32 0, %v1256
      %v1258 = vrot.slane %v1253, %v1257
      %v1259 = vlaneseq
      %v1260 = vshrl.u32 %v1259, 7
      %v1261 = vsub.s32 2, %v1260
      %v1262 = vrot.slane %v1253, %v1261
      %v1265 = vlaneseq
      %v1266 = vshrl.u32 %v1265, 7
      %v1267 = vsub.s32 0, %v1266
      %v1268 = vrot.slane %v1258, %v1267
      %v1269 = vlaneseq
      %v1270 = vshrl.u32 %v1269, 7
      %v1271 = vsub.s32 0, %v1270
      %v1272 = vrot.slane %v1262, %v1271
      %v1275 = vcombine.low %v1268, %v1272
      %v1277 = vmul.f32 %v1219, %v1275
      %1279 = vrot.lane.b32.xlu0 %v1277, 127
      %v1280 = vpop.permute.xlu0 %1279
      %v1281 = vrot.slane %v1280, 4
      %vm1282 = vcmask 1039360
      %v1283 = vsel %vm1282, %v1280, %v1281
      %v1285 = vadd.f32 %v1244, %v1283
      %v1286 = vcombine.high %v1215, %v1215
      %1287 = vrot.lane.b32.xlu0 %v1286, 2
      %v1288 = vpop.permute.xlu0 %1287
      %v1289 = vrot.slane %v1288, 6
      %vm1290 = vcmask 15360
      %v1291 = vsel %vm1290, %v1289, %v1288
      %v1293 = vmul.f32 %v1205, %v1291
      %v1295 = vlaneseq
      %v1296 = vshrl.u32 %v1295, 7
      %v1297 = vsub.s32 0, %v1296
      %v1298 = vrot.slane %v1293, %v1297
      %v1299 = vlaneseq
      %v1300 = vshrl.u32 %v1299, 7
      %v1301 = vsub.s32 2, %v1300
      %v1302 = vrot.slane %v1293, %v1301
      %v1305 = vlaneseq
      %v1306 = vshrl.u32 %v1305, 7
      %v1307 = vsub.s32 0, %v1306
      %v1308 = vrot.slane %v1298, %v1307
      %v1309 = vlaneseq
      %v1310 = vshrl.u32 %v1309, 7
      %v1311 = vsub.s32 0, %v1310
      %v1312 = vrot.slane %v1302, %v1311
      %v1315 = vcombine.low %v1308, %v1312
      %v1317 = vmul.f32 %v1219, %v1315
      %1319 = vrot.lane.b32.xlu0 %v1317, 126
      %v1320 = vpop.permute.xlu0 %1319
      %v1321 = vrot.slane %v1320, 4
      %vm1322 = vcmask 1031168
      %v1323 = vsel %vm1322, %v1320, %v1321
      %v1325 = vadd.f32 %v1285, %v1323
      %v1326 = vrot.slane %v1286, 7
      %v1327 = vrot.slane %v1326, 2
      %1328 = vrot.lane.b32.xlu0 %v1327, 18
      %v1329 = vpop.permute.xlu0 %1328
      %v1330 = vrot.slane %v1329, 6
      %vm1331 = vcmask 146432
      %v1332 = vsel %vm1331, %v1330, %v1329
      %v1334 = vmul.f32 %v1205, %v1332
      %v1336 = vlaneseq
      %v1337 = vshrl.u32 %v1336, 7
      %v1338 = vsub.s32 0, %v1337
      %v1339 = vrot.slane %v1334, %v1338
      %v1340 = vlaneseq
      %v1341 = vshrl.u32 %v1340, 7
      %v1342 = vsub.s32 2, %v1341
      %v1343 = vrot.slane %v1334, %v1342
      %v1346 = vlaneseq
      %v1347 = vshrl.u32 %v1346, 7
      %v1348 = vsub.s32 0, %v1347
      %v1349 = vrot.slane %v1339, %v1348
      %v1350 = vlaneseq
      %v1351 = vshrl.u32 %v1350, 7
      %v1352 = vsub.s32 0, %v1351
      %v1353 = vrot.slane %v1343, %v1352
      %v1356 = vcombine.low %v1349, %v1353
      %v1358 = vmul.f32 %v1219, %v1356
      %1360 = vrot.lane.b32.xlu0 %v1358, 110
      %v1361 = vpop.permute.xlu0 %1360
      %v1362 = vrot.slane %v1361, 4
      %vm1363 = vcmask 900096
      %v1364 = vsel %vm1363, %v1361, %v1362
      %v1366 = vadd.f32 %v1325, %v1364
      %v1367 = vcombine.high %v1198, %v1199
      %v1369 = vunpack.c.l.s4 1983009808
      %v1370 = vunpack.c.0.s8 %v1369
      %v1371 = vlaneseq
      %v1372 = vshrl.u32 %v1371, 7
      %v1373 = vsub.s32 %v1370, %v1372
      %v1374 = vrot.slane %v1367, %v1373
      %1375 = vrot.lane.b32.xlu0 %v1374, 19
      %v1376 = vpop.permute.xlu0 %1375
      %v1377 = vrot.slane %v1376, 6
      %vm1378 = vcmask 154624
      %v1379 = vsel %vm1378, %v1377, %v1376
      %v1381 = vmul.f32 %v1205, %v1379
      %v1383 = vlaneseq
      %v1384 = vshrl.u32 %v1383, 7
      %v1385 = vsub.s32 0, %v1384
      %v1386 = vrot.slane %v1381, %v1385
      %v1387 = vlaneseq
      %v1388 = vshrl.u32 %v1387, 7
      %v1389 = vsub.s32 2, %v1388
      %v1390 = vrot.slane %v1381, %v1389
      %v1393 = vlaneseq
      %v1394 = vshrl.u32 %v1393, 7
      %v1395 = vsub.s32 0, %v1394
      %v1396 = vrot.slane %v1386, %v1395
      %v1397 = vlaneseq
      %v1398 = vshrl.u32 %v1397, 7
      %v1399 = vsub.s32 0, %v1398
      %v1400 = vrot.slane %v1390, %v1399
      %v1403 = vcombine.low %v1396, %v1400
      %v1405 = vmul.f32 %v1219, %v1403
      %1407 = vrot.lane.b32.xlu0 %v1405, 109
      %v1408 = vpop.permute.xlu0 %1407
      %v1409 = vrot.slane %v1408, 4
      %vm1410 = vcmask 891904
      %v1411 = vsel %vm1410, %v1408, %v1409
      %v1413 = vadd.f32 %v1366, %v1411
      %v1414 = vrot.slane %v1374, 7
      %v1415 = vrot.slane %v1414, 2
      %1416 = vrot.lane.b32.xlu0 %v1415, 20
      %v1417 = vpop.permute.xlu0 %1416
      %v1418 = vrot.slane %v1417, 6
      %vm1419 = vcmask 162816
      %v1420 = vsel %vm1419, %v1418, %v1417
      %v1422 = vmul.f32 %v1205, %v1420
      %v1424 = vlaneseq
      %v1425 = vshrl.u32 %v1424, 7
      %v1426 = vsub.s32 0, %v1425
      %v1427 = vrot.slane %v1422, %v1426
      %v1428 = vlaneseq
      %v1429 = vshrl.u32 %v1428, 7
      %v1430 = vsub.s32 2, %v1429
      %v1431 = vrot.slane %v1422, %v1430
      %v1434 = vlaneseq
      %v1435 = vshrl.u32 %v1434, 7
      %v1436 = vsub.s32 0, %v1435
      %v1437 = vrot.slane %v1427, %v1436
      %v1438 = vlaneseq
      %v1439 = vshrl.u32 %v1438, 7
      %v1440 = vsub.s32 0, %v1439
      %v1441 = vrot.slane %v1431, %v1440
      %v1444 = vcombine.low %v1437, %v1441
      %v1446 = vmul.f32 %v1219, %v1444
      %1448 = vrot.lane.b32.xlu0 %v1446, 108
      %v1449 = vpop.permute.xlu0 %1448
      %v1450 = vrot.slane %v1449, 4
      %vm1451 = vcmask 883712
      %v1452 = vsel %vm1451, %v1449, %v1450
      %v1454 = vadd.f32 %v1413, %v1452
      %v1455 = vcombine.high %v1374, %v1374
      %1456 = vrot.lane.b32.xlu0 %v1455, 36
      %v1457 = vpop.permute.xlu0 %1456
      %v1458 = vrot.slane %v1457, 6
      %vm1459 = vcmask 293888
      %v1460 = vsel %vm1459, %v1458, %v1457
      %v1462 = vmul.f32 %v1205, %v1460
      %v1464 = vlaneseq
      %v1465 = vshrl.u32 %v1464, 7
      %v1466 = vsub.s32 0, %v1465
      %v1467 = vrot.slane %v1462, %v1466
      %v1468 = vlaneseq
      %v1469 = vshrl.u32 %v1468, 7
      %v1470 = vsub.s32 2, %v1469
      %v1471 = vrot.slane %v1462, %v1470
      %v1474 = vlaneseq
      %v1475 = vshrl.u32 %v1474, 7
      %v1476 = vsub.s32 0, %v1475
      %v1477 = vrot.slane %v1467, %v1476
      %v1478 = vlaneseq
      %v1479 = vshrl.u32 %v1478, 7
      %v1480 = vsub.s32 0, %v1479
      %v1481 = vrot.slane %v1471, %v1480
      %v1484 = vcombine.low %v1477, %v1481
      %v1486 = vmul.f32 %v1219, %v1484
      %1488 = vrot.lane.b32.xlu0 %v1486, 92
      %v1489 = vpop.permute.xlu0 %1488
      %v1490 = vrot.slane %v1489, 4
      %vm1491 = vcmask 752640
      %v1492 = vsel %vm1491, %v1489, %v1490
      %v1494 = vadd.f32 %v1454, %v1492
      %v1495 = vrot.slane %v1455, 7
      %v1496 = vrot.slane %v1495, 2
      %1497 = vrot.lane.b32.xlu0 %v1496, 37
      %v1498 = vpop.permute.xlu0 %1497
      %v1499 = vrot.slane %v1498, 6
      %vm1500 = vcmask 302080
      %v1501 = vsel %vm1500, %v1499, %v1498
      %v1503 = vmul.f32 %v1205, %v1501
      %v1505 = vlaneseq
      %v1506 = vshrl.u32 %v1505, 7
      %v1507 = vsub.s32 0, %v1506
      %v1508 = vrot.slane %v1503, %v1507
      %v1509 = vlaneseq
      %v1510 = vshrl.u32 %v1509, 7
      %v1511 = vsub.s32 2, %v1510
      %v1512 = vrot.slane %v1503, %v1511
      %v1515 = vlaneseq
      %v1516 = vshrl.u32 %v1515, 7
      %v1517 = vsub.s32 0, %v1516
      %v1518 = vrot.slane %v1508, %v1517
      %v1519 = vlaneseq
      %v1520 = vshrl.u32 %v1519, 7
      %v1521 = vsub.s32 0, %v1520
      %v1522 = vrot.slane %v1512, %v1521
      %v1525 = vcombine.low %v1518, %v1522
      %v1527 = vmul.f32 %v1219, %v1525
      %1529 = vrot.lane.b32.xlu0 %v1527, 91
      %v1530 = vpop.permute.xlu0 %1529
      %v1531 = vrot.slane %v1530, 4
      %vm1532 = vcmask 744448
      %v1533 = vsel %vm1532, %v1530, %v1531
      %v1535 = vadd.f32 %v1494, %v1533
      %v1538 = vcombine.low %v1200, %v1201
      %v1540 = vunpack.c.l.s4 1983009808
      %v1541 = vunpack.c.0.s8 %v1540
      %v1542 = vlaneseq
      %v1543 = vshrl.u32 %v1542, 7
      %v1544 = vsub.s32 %v1541, %v1543
      %v1545 = vrot.slane %v1538, %v1544
      %1546 = vrot.lane.b32.xlu0 %v1545, 38
      %v1547 = vpop.permute.xlu0 %1546
      %v1548 = vrot.slane %v1547, 6
      %vm1549 = vcmask 310272
      %v1550 = vsel %vm1549, %v1548, %v1547
      %v1552 = vmul.f32 %v1205, %v1550
      %v1554 = vlaneseq
      %v1555 = vshrl.u32 %v1554, 7
      %v1556 = vsub.s32 0, %v1555
      %v1557 = vrot.slane %v1552, %v1556
      %v1558 = vlaneseq
      %v1559 = vshrl.u32 %v1558, 7
      %v1560 = vsub.s32 2, %v1559
      %v1561 = vrot.slane %v1552, %v1560
      %v1564 = vlaneseq
      %v1565 = vshrl.u32 %v1564, 7
      %v1566 = vsub.s32 0, %v1565
      %v1567 = vrot.slane %v1557, %v1566
      %v1568 = vlaneseq
      %v1569 = vshrl.u32 %v1568, 7
      %v1570 = vsub.s32 0, %v1569
      %v1571 = vrot.slane %v1561, %v1570
      %v1574 = vcombine.low %v1567, %v1571
      %v1576 = vmul.f32 %v1219, %v1574
      %1578 = vrot.lane.b32.xlu0 %v1576, 90
      %v1579 = vpop.permute.xlu0 %1578
      %v1580 = vrot.slane %v1579, 4
      %vm1581 = vcmask 736256
      %v1582 = vsel %vm1581, %v1579, %v1580
      %v1584 = vadd.f32 %v1535, %v1582
      %vm1585 = vcmask 128004
      %vm1586 = vmor %vm1585, %vm304
      %1587 = vst.msk [vmem:[%s264] sm:$0x33] %vm1586, %v1584
      %v1588 = vld [vmem:[%s255] sm:$0x3]
      %v1589 = vunpack.c.l.bf16 %v1588
      %v1591 = vmul.f32 %v1589, %v1545
      %v1592 = vld [vmem:[%s247] sm:$0xa]
      %v1593 = vunpack.c.l.bf16 %v1592
      %v1595 = vlaneseq
      %v1596 = vshrl.u32 %v1595, 7
      %v1597 = vsub.s32 1, %v1596
      %v1598 = vrot.slane %v1591, %v1597
      %v1599 = vlaneseq
      %v1600 = vshrl.u32 %v1599, 7
      %v1601 = vsub.s32 3, %v1600
      %v1602 = vrot.slane %v1591, %v1601
      %v1605 = vlaneseq
      %v1606 = vshrl.u32 %v1605, 7
      %v1607 = vsub.s32 1, %v1606
      %v1608 = vrot.slane %v1598, %v1607
      %v1609 = vlaneseq
      %v1610 = vshrl.u32 %v1609, 7
      %v1611 = vsub.s32 1, %v1610
      %v1612 = vrot.slane %v1602, %v1611
      %v1615 = vcombine.low %v1608, %v1612
      %v1616 = vrot.slane %v1615, 6
      %v1618 = vmul.f32 %v1593, %v1616
      %v1619 = vadd.f32 %v1618, 0.0
      %v1620 = vcombine.high %v1545, %v1545
      %v1621 = vrot.slane %v1620, 7
      %1622 = vrot.lane.b32.xlu0 %v1621, 1
      %v1623 = vpop.permute.xlu0 %1622
      %v1624 = vrot.slane %v1623, 6
      %v1625 = vsel %vm1250, %v1624, %v1623
      %v1627 = vmul.f32 %v1589, %v1625
      %v1629 = vlaneseq
      %v1630 = vshrl.u32 %v1629, 7
      %v1631 = vsub.s32 1, %v1630
      %v1632 = vrot.slane %v1627, %v1631
      %v1633 = vlaneseq
      %v1634 = vshrl.u32 %v1633, 7
      %v1635 = vsub.s32 3, %v1634
      %v1636 = vrot.slane %v1627, %v1635
      %v1639 = vlaneseq
      %v1640 = vshrl.u32 %v1639, 7
      %v1641 = vsub.s32 1, %v1640
      %v1642 = vrot.slane %v1632, %v1641
      %v1643 = vlaneseq
      %v1644 = vshrl.u32 %v1643, 7
      %v1645 = vsub.s32 1, %v1644
      %v1646 = vrot.slane %v1636, %v1645
      %v1649 = vcombine.low %v1642, %v1646
      %v1650 = vrot.slane %v1649, 6
      %v1652 = vmul.f32 %v1593, %v1650
      %1654 = vrot.lane.b32.xlu0 %v1652, 127
      %v1655 = vpop.permute.xlu0 %1654
      %v1656 = vrot.slane %v1655, 4
      %v1657 = vsel %vm1282, %v1655, %v1656
      %v1659 = vadd.f32 %v1619, %v1657
      %1660 = vrot.lane.b32.xlu0 %v1620, 2
      %v1661 = vpop.permute.xlu0 %1660
      %v1662 = vrot.slane %v1661, 6
      %v1663 = vsel %vm1290, %v1662, %v1661
      %v1665 = vmul.f32 %v1589, %v1663
      %v1667 = vlaneseq
      %v1668 = vshrl.u32 %v1667, 7
      %v1669 = vsub.s32 1, %v1668
      %v1670 = vrot.slane %v1665, %v1669
      %v1671 = vlaneseq
      %v1672 = vshrl.u32 %v1671, 7
      %v1673 = vsub.s32 3, %v1672
      %v1674 = vrot.slane %v1665, %v1673
      %v1677 = vlaneseq
      %v1678 = vshrl.u32 %v1677, 7
      %v1679 = vsub.s32 1, %v1678
      %v1680 = vrot.slane %v1670, %v1679
      %v1681 = vlaneseq
      %v1682 = vshrl.u32 %v1681, 7
      %v1683 = vsub.s32 1, %v1682
      %v1684 = vrot.slane %v1674, %v1683
      %v1687 = vcombine.low %v1680, %v1684
      %v1688 = vrot.slane %v1687, 6
      %v1690 = vmul.f32 %v1593, %v1688
      %1692 = vrot.lane.b32.xlu0 %v1690, 126
      %v1693 = vpop.permute.xlu0 %1692
      %v1694 = vrot.slane %v1693, 4
      %v1695 = vsel %vm1322, %v1693, %v1694
      %v1697 = vadd.f32 %v1659, %v1695
      %v1698 = vcombine.high %v1200, %v1201
      %v1700 = vunpack.c.l.s4 1983009808
      %v1701 = vunpack.c.0.s8 %v1700
      %v1702 = vlaneseq
      %v1703 = vshrl.u32 %v1702, 7
      %v1704 = vsub.s32 %v1701, %v1703
      %v1705 = vrot.slane %v1698, %v1704
      %v1706 = vrot.slane %v1705, 7
      %1707 = vrot.lane.b32.xlu0 %v1706, 18
      %v1708 = vpop.permute.xlu0 %1707
      %v1709 = vrot.slane %v1708, 6
      %v1710 = vsel %vm1331, %v1709, %v1708
      %v1712 = vmul.f32 %v1589, %v1710
      %v1714 = vlaneseq
      %v1715 = vshrl.u32 %v1714, 7
      %v1716 = vsub.s32 1, %v1715
      %v1717 = vrot.slane %v1712, %v1716
      %v1718 = vlaneseq
      %v1719 = vshrl.u32 %v1718, 7
      %v1720 = vsub.s32 3, %v1719
      %v1721 = vrot.slane %v1712, %v1720
      %v1724 = vlaneseq
      %v1725 = vshrl.u32 %v1724, 7
      %v1726 = vsub.s32 1, %v1725
      %v1727 = vrot.slane %v1717, %v1726
      %v1728 = vlaneseq
      %v1729 = vshrl.u32 %v1728, 7
      %v1730 = vsub.s32 1, %v1729
      %v1731 = vrot.slane %v1721, %v1730
      %v1734 = vcombine.low %v1727, %v1731
      %v1735 = vrot.slane %v1734, 6
      %v1737 = vmul.f32 %v1593, %v1735
      %1739 = vrot.lane.b32.xlu0 %v1737, 110
      %v1740 = vpop.permute.xlu0 %1739
      %v1741 = vrot.slane %v1740, 4
      %v1742 = vsel %vm1363, %v1740, %v1741
      %v1744 = vadd.f32 %v1697, %v1742
      %1745 = vrot.lane.b32.xlu0 %v1705, 19
      %v1746 = vpop.permute.xlu0 %1745
      %v1747 = vrot.slane %v1746, 6
      %v1748 = vsel %vm1378, %v1747, %v1746
      %v1750 = vmul.f32 %v1589, %v1748
      %v1752 = vlaneseq
      %v1753 = vshrl.u32 %v1752, 7
      %v1754 = vsub.s32 1, %v1753
      %v1755 = vrot.slane %v1750, %v1754
      %v1756 = vlaneseq
      %v1757 = vshrl.u32 %v1756, 7
      %v1758 = vsub.s32 3, %v1757
      %v1759 = vrot.slane %v1750, %v1758
      %v1762 = vlaneseq
      %v1763 = vshrl.u32 %v1762, 7
      %v1764 = vsub.s32 1, %v1763
      %v1765 = vrot.slane %v1755, %v1764
      %v1766 = vlaneseq
      %v1767 = vshrl.u32 %v1766, 7
      %v1768 = vsub.s32 1, %v1767
      %v1769 = vrot.slane %v1759, %v1768
      %v1772 = vcombine.low %v1765, %v1769
      %v1773 = vrot.slane %v1772, 6
      %v1775 = vmul.f32 %v1593, %v1773
      %1777 = vrot.lane.b32.xlu0 %v1775, 109
      %v1778 = vpop.permute.xlu0 %1777
      %v1779 = vrot.slane %v1778, 4
      %v1780 = vsel %vm1410, %v1778, %v1779
      %v1782 = vadd.f32 %v1744, %v1780
      %v1783 = vcombine.high %v1705, %v1705
      %v1784 = vrot.slane %v1783, 7
      %1785 = vrot.lane.b32.xlu0 %v1784, 20
      %v1786 = vpop.permute.xlu0 %1785
      %v1787 = vrot.slane %v1786, 6
      %v1788 = vsel %vm1419, %v1787, %v1786
      %v1790 = vmul.f32 %v1589, %v1788
      %v1792 = vlaneseq
      %v1793 = vshrl.u32 %v1792, 7
      %v1794 = vsub.s32 1, %v1793
      %v1795 = vrot.slane %v1790, %v1794
      %v1796 = vlaneseq
      %v1797 = vshrl.u32 %v1796, 7
      %v1798 = vsub.s32 3, %v1797
      %v1799 = vrot.slane %v1790, %v1798
      %v1802 = vlaneseq
      %v1803 = vshrl.u32 %v1802, 7
      %v1804 = vsub.s32 1, %v1803
      %v1805 = vrot.slane %v1795, %v1804
      %v1806 = vlaneseq
      %v1807 = vshrl.u32 %v1806, 7
      %v1808 = vsub.s32 1, %v1807
      %v1809 = vrot.slane %v1799, %v1808
      %v1812 = vcombine.low %v1805, %v1809
      %v1813 = vrot.slane %v1812, 6
      %v1815 = vmul.f32 %v1593, %v1813
      %1817 = vrot.lane.b32.xlu0 %v1815, 108
      %v1818 = vpop.permute.xlu0 %1817
      %v1819 = vrot.slane %v1818, 4
      %v1820 = vsel %vm1451, %v1818, %v1819
      %v1822 = vadd.f32 %v1782, %v1820
      %1823 = vrot.lane.b32.xlu0 %v1783, 36
      %v1824 = vpop.permute.xlu0 %1823
      %v1825 = vrot.slane %v1824, 6
      %v1826 = vsel %vm1459, %v1825, %v1824
      %v1828 = vmul.f32 %v1589, %v1826
      %v1830 = vlaneseq
      %v1831 = vshrl.u32 %v1830, 7
      %v1832 = vsub.s32 1, %v1831
      %v1833 = vrot.slane %v1828, %v1832
      %v1834 = vlaneseq
      %v1835 = vshrl.u32 %v1834, 7
      %v1836 = vsub.s32 3, %v1835
      %v1837 = vrot.slane %v1828, %v1836
      %v1840 = vlaneseq
      %v1841 = vshrl.u32 %v1840, 7
      %v1842 = vsub.s32 1, %v1841
      %v1843 = vrot.slane %v1833, %v1842
      %v1844 = vlaneseq
      %v1845 = vshrl.u32 %v1844, 7
      %v1846 = vsub.s32 1, %v1845
      %v1847 = vrot.slane %v1837, %v1846
      %v1850 = vcombine.low %v1843, %v1847
      %v1851 = vrot.slane %v1850, 6
      %v1853 = vmul.f32 %v1593, %v1851
      %1855 = vrot.lane.b32.xlu0 %v1853, 92
      %v1856 = vpop.permute.xlu0 %1855
      %v1857 = vrot.slane %v1856, 4
      %v1858 = vsel %vm1491, %v1856, %v1857
      %v1860 = vadd.f32 %v1822, %v1858
      %v1863 = vcombine.low %v1202, %v1203
      %v1865 = vunpack.c.l.s4 1983009808
      %v1866 = vunpack.c.0.s8 %v1865
      %v1867 = vlaneseq
      %v1868 = vshrl.u32 %v1867, 7
      %v1869 = vsub.s32 %v1866, %v1868
      %v1870 = vrot.slane %v1863, %v1869
      %v1871 = vrot.slane %v1870, 7
      %1872 = vrot.lane.b32.xlu0 %v1871, 37
      %v1873 = vpop.permute.xlu0 %1872
      %v1874 = vrot.slane %v1873, 6
      %v1875 = vsel %vm1500, %v1874, %v1873
      %v1877 = vmul.f32 %v1589, %v1875
      %v1879 = vlaneseq
      %v1880 = vshrl.u32 %v1879, 7
      %v1881 = vsub.s32 1, %v1880
      %v1882 = vrot.slane %v1877, %v1881
      %v1883 = vlaneseq
      %v1884 = vshrl.u32 %v1883, 7
      %v1885 = vsub.s32 3, %v1884
      %v1886 = vrot.slane %v1877, %v1885
      %v1889 = vlaneseq
      %v1890 = vshrl.u32 %v1889, 7
      %v1891 = vsub.s32 1, %v1890
      %v1892 = vrot.slane %v1882, %v1891
      %v1893 = vlaneseq
      %v1894 = vshrl.u32 %v1893, 7
      %v1895 = vsub.s32 1, %v1894
      %v1896 = vrot.slane %v1886, %v1895
      %v1899 = vcombine.low %v1892, %v1896
      %v1900 = vrot.slane %v1899, 6
      %v1902 = vmul.f32 %v1593, %v1900
      %1904 = vrot.lane.b32.xlu0 %v1902, 91
      %v1905 = vpop.permute.xlu0 %1904
      %v1906 = vrot.slane %v1905, 4
      %v1907 = vsel %vm1532, %v1905, %v1906
      %v1909 = vadd.f32 %v1860, %v1907
      %1910 = vrot.lane.b32.xlu0 %v1870, 38
      %v1911 = vpop.permute.xlu0 %1910
      %v1912 = vrot.slane %v1911, 6
      %v1913 = vsel %vm1549, %v1912, %v1911
      %v1915 = vmul.f32 %v1589, %v1913
      %v1917 = vlaneseq
      %v1918 = vshrl.u32 %v1917, 7
      %v1919 = vsub.s32 1, %v1918
      %v1920 = vrot.slane %v1915, %v1919
      %v1921 = vlaneseq
      %v1922 = vshrl.u32 %v1921, 7
      %v1923 = vsub.s32 3, %v1922
      %v1924 = vrot.slane %v1915, %v1923
      %v1927 = vlaneseq
      %v1928 = vshrl.u32 %v1927, 7
      %v1929 = vsub.s32 1, %v1928
      %v1930 = vrot.slane %v1920, %v1929
      %v1931 = vlaneseq
      %v1932 = vshrl.u32 %v1931, 7
      %v1933 = vsub.s32 1, %v1932
      %v1934 = vrot.slane %v1924, %v1933
      %v1937 = vcombine.low %v1930, %v1934
      %v1938 = vrot.slane %v1937, 6
      %v1940 = vmul.f32 %v1593, %v1938
      %1942 = vrot.lane.b32.xlu0 %v1940, 90
      %v1943 = vpop.permute.xlu0 %1942
      %v1944 = vrot.slane %v1943, 4
      %v1945 = vsel %vm1581, %v1943, %v1944
      %v1947 = vadd.f32 %v1909, %v1945
      %vm1948 = vcmask 1043458
      %vm1949 = vcmask 130054
      %vm1950 = vmor %vm1949, %vm1948
      %1951 = vst.msk [vmem:[%s264] sm:$0xcc] %vm1950, %v1947
      %p1952 = scmp.lt.s32.totalorder %s19, 1
      %s1953 = scalar_select %p1952, %s19, 1
      %p1954 = scmp.lt.s32.totalorder %s20, 1
      %s1955 = scalar_select %p1954, %s20, 1
      %s1956 = smul.addr %s1955, 2
      %s1957 = smul.addr %s1953, 4
      %s1958 = sadd.s32 %s1956, %s1957
      %s1959 = smul.addr %s1958, 4
      %s1960 = scalar_lea.vmem %s4, %s1959
      // Predicated region
      $region37: #{fem_forward.3} parent=35 // pred_check
        %p1961 = pneg %p145
      $region38: #{fem_forward.3} parent=35 // pred_check_branch
        %1963 = sbr.rel (%p1961) target = $region40
      $region39: #{fem_forward.3} parent=35 // pred_region
        _
      $region40: #{fem_forward.3} parent=35 // pred_fallthru
        _
    $region36: #{fem_forward.3} parent=5 // pred_fallthru
      _
    %p1964 = scmp.le.s32.totalorder 2, %s10
    // Predicated region
    $region41: #{fem_forward.3} parent=5 // pred_check
      %p1965 = pneg %p1964
    $region42: #{fem_forward.3} parent=5 // pred_check_branch
      %1967 = sbr.rel (%p1965) target = $region44
    $region43: #{fem_forward.3} parent=5 // pred_region
      %s1968 = ssub.s32 %s10, 2
      // Predicated region
      $region45: #{fem_forward.3} parent=43 // pred_check
        %p1969 = pneg %p151
      $region46: #{fem_forward.3} parent=43 // pred_check_branch
        %1971 = sbr.rel (%p1969) target = $region48
      $region47: #{fem_forward.3} parent=43 // pred_region
        %p1972 = scmp.lt.s32.totalorder %s21, 1
        %s1973 = scalar_select %p1972, %s21, 1
        %p1974 = scmp.lt.s32.totalorder %s22, 1
        %s1975 = scalar_select %p1974, %s22, 1
        %s1976 = smul.addr %s1975, 2
        %s1977 = smul.addr %s1973, 4
        %s1978 = sadd.s32 %s1976, %s1977
        %s1979 = smul.addr %s1978, 4
        %s1980 = scalar_lea.vmem %s4, %s1979
      $region48: #{fem_forward.3} parent=43 // pred_fallthru
        _
    $region44: #{fem_forward.3} parent=5 // pred_fallthru
      _
  $region6: #{fem_forward.3} parent=0 // loop_footer
    %s14 = sadd.s32 1, %s10
  $region7: #{fem_forward.3} parent=0 // loop_footer_branch
    %9 = sbr.rel target = $region3
  $region8: #{fem_forward.3} parent=0 // loop_exit
    _

</llo_original>
